<compile_context>
chip_gen: v6e
topology: v6e:2x2x1
jax: 0.10.0
libtpu: 0.0.40
codegen_flags: <defaults>
</compile_context>

<pallas_src>
import functools

import jax
import jax.numpy as jnp
import numpy as np
from jax.experimental import pallas as pl
from jax.experimental.pallas import tpu as pltpu

_CPARAMS = pltpu.CompilerParams(
    dimension_semantics=("parallel",),            # batch axis: pipelined + dual-TC on v7x
    vmem_limit_bytes=32 * 1024 * 1024,
)


# ------------------------------------------------------------------------------ kernels


def _mv2_s1_kernel(x_ref, w1_ref, b1_ref, wd_ref, b2_ref, w2_ref, b3_ref, mk_ref,
                   o_ref, *, img_w, has_skip):
    """Fused MobileV2_Residual (stride 1) for one image, channel-major layout.

    x_ref : (1, Ci, M)    w1_ref: (Cm, Ci)  b1_ref: (Cm, 1)   (BN1 scale folded in w1)
    wd_ref: (Cm, 9)       b2_ref: (Cm, 1)                     (BN2 scale folded in wd)
    w2_ref: (Co, Cm)      b3_ref: (Co, 1)                     (BN3 scale folded in w2)
    mk_ref: (2, M)  row0: 1.0 where w>=1, row1: 1.0 where w<=W-2
    o_ref : (1, Co, M)
    """
    x = x_ref[0]                                                     # (Ci, M)
    m = x.shape[1]
    # pw1 + bias + ReLU6
    h = jnp.dot(w1_ref[...], x, preferred_element_type=jnp.float32) + b1_ref[...]
    h = jnp.clip(h, 0.0, 6.0)                                        # (Cm, M)
    cm = h.shape[0]
    # depthwise 3x3, pad 1: 9 shifted + masked lane slices of the in-VMEM hidden
    zpad = jnp.zeros((cm, img_w + 1), jnp.float32)
    hext = jnp.concatenate([zpad, h, zpad], axis=1)                  # (Cm, M + 2W + 2)
    wd = wd_ref[...]                                                 # (Cm, 9)
    mask_l = mk_ref[0:1, :]
    mask_r = mk_ref[1:2, :]
    acc = jnp.zeros((cm, m), jnp.float32)
    for kh in range(3):
        for kw in range(3):
            k = kh * 3 + kw
            off = (img_w + 1) + (kh - 1) * img_w + (kw - 1)
            t = hext[:, off:off + m]
            if kw == 0:
                t = t * mask_l
            elif kw == 2:
                t = t * mask_r
            acc = acc + t * wd[:, k:k + 1]
    d = jnp.clip(acc + b2_ref[...], 0.0, 6.0)                        # (Cm, M)
    # pw-linear + bias (+ residual)
    y = jnp.dot(w2_ref[...], d, preferred_element_type=jnp.float32) + b3_ref[...]
    if has_skip:
        y = y + x
    o_ref[0] = y


def _mv2_s2_kernel(x_ref, w1_ref, b1_ref, wd_ref, b2_ref, w2_ref, b3_ref, mk_ref,
                   o_ref, *, out_w, mo):
    """Fused MobileV2_Residual (stride 2) for one image.

    The input is packed into its 4 spatial parity phases along the flattened axis
    (block ph = 2a+b holds x[2i+a, 2j+b]); the stride-2 depthwise output is computed
    directly from contiguous, masked slices of those phases.

    x_ref : (1, Ci, 4*Mo)   weights/biases as in the stride-1 kernel
    mk_ref: (2, Mo)  row0: 1.0 where ow>=1, row1: 1.0 where oh>=1
    o_ref : (1, Co, Mo)
    """
    xph = x_ref[0]                                                   # (Ci, 4*Mo)
    h = jnp.dot(w1_ref[...], xph, preferred_element_type=jnp.float32) + b1_ref[...]
    h = jnp.clip(h, 0.0, 6.0)                                        # (Cm, 4*Mo)
    cm = h.shape[0]
    wd = wd_ref[...]
    mask_col = mk_ref[0:1, :]
    mask_row = mk_ref[1:2, :]
    acc = jnp.zeros((cm, mo), jnp.float32)
    for kh in range(3):
        a = 0 if kh == 1 else 1          # input-row parity hit by this tap
        dh = -1 if kh == 0 else 0
        for kw in range(3):
            b = 0 if kw == 1 else 1
            dw = -1 if kw == 0 else 0
            start = (2 * a + b) * mo + dh * out_w + dw
            t = h[:, start:start + mo]
            if kh == 0:
                t = t * mask_row
            if kw == 0:
                t = t * mask_col
            acc = acc + t * wd[:, kh * 3 + kw:kh * 3 + kw + 1]
    d = jnp.clip(acc + b2_ref[...], 0.0, 6.0)
    y = jnp.dot(w2_ref[...], d, preferred_element_type=jnp.float32) + b3_ref[...]
    o_ref[0] = y


def _deconv_kernel(x_ref, w_ref, b_ref, skip_ref, mk_ref, o_ref, *, low_w):
    """ConvTranspose2d(3, s=2, p=1, op=1) + BN + skip + ReLU via 4-phase decomposition.

    x_ref   : (1, Ci, m)  low-res input        w_ref: (4*Co, 4*Ci) (BN scale folded)
    b_ref   : (4*Co, 1)                        skip_ref: (1, 4*Co, m) phase-packed skip
    mk_ref  : (1, m)  1.0 where j <= w-2       o_ref: (1, 4*Co, m) phase-packed output
    Output row block q=2r+s holds out[2i+r, 2j+s]; no zero-inserted pixels are touched.
    """
    x = x_ref[0]                                                     # (Ci, m)
    ci, m = x.shape
    zpad = jnp.zeros((ci, low_w + 1), jnp.float32)
    xe = jnp.concatenate([x, zpad], axis=1)                          # (Ci, m + w + 1)
    mask = mk_ref[...]                                               # (1, m)
    x00 = x                                                          # x[i,   j  ]
    x01 = xe[:, 1:1 + m] * mask                                      # x[i,   j+1]
    x10 = xe[:, low_w:low_w + m]                                     # x[i+1, j  ]
    x11 = xe[:, low_w + 1:low_w + 1 + m] * mask                      # x[i+1, j+1]
    x4 = jnp.concatenate([x00, x01, x10, x11], axis=0)               # (4*Ci, m)
    y = jnp.dot(w_ref[...], x4, preferred_element_type=jnp.float32) + b_ref[...]
    y = y + skip_ref[0]
    o_ref[0] = jnp.maximum(y, 0.0)


# --------------------------------------------------------------------- trace-time masks


def _masks_s1(h, w):
    col = np.arange(h * w, dtype=np.int64) % w
    return jnp.asarray(np.stack([(col >= 1), (col <= w - 2)]).astype(np.float32))


def _masks_s2(ho, wo):
    q = np.arange(ho * wo, dtype=np.int64)
    return jnp.asarray(np.stack([(q % wo >= 1), (q >= wo)]).astype(np.float32))


def _mask_deconv(h, w):
    col = np.arange(h * w, dtype=np.int64) % w
    return jnp.asarray((col <= w - 2).astype(np.float32)[None, :])


# ----------------------------------------------------------------------------- wrappers


def mobilev2_residual(x, p, *, stride):
    """x: (N, Ci, H, W) float32 -> (N, Co, H/stride, W/stride)."""
    n, ci, h, w = x.shape
    w1t, b1 = p["w1t"], p["b1"]
    wd, b2 = p["wd"], p["b2"]
    w2t, b3 = p["w2t"], p["b3"]
    cm, co = w1t.shape[0], w2t.shape[0]

    weight_specs = [
        pl.BlockSpec((cm, ci), lambda i: (0, 0)),
        pl.BlockSpec((cm, 1), lambda i: (0, 0)),
        pl.BlockSpec((cm, 9), lambda i: (0, 0)),
        pl.BlockSpec((cm, 1), lambda i: (0, 0)),
        pl.BlockSpec((co, cm), lambda i: (0, 0)),
        pl.BlockSpec((co, 1), lambda i: (0, 0)),
    ]

    if stride == 1:
        m = h * w
        x2 = x.reshape(n, ci, m)                 # free: NCHW is already (N, C, H*W)
        masks = _masks_s1(h, w)
        kern = functools.partial(_mv2_s1_kernel, img_w=w, has_skip=(ci == co))
        out = pl.pallas_call(
            kern,
            out_shape=jax.ShapeDtypeStruct((n, co, m), jnp.float32),
            grid=(n,),
            in_specs=[pl.BlockSpec((1, ci, m), lambda i: (i, 0, 0))] + weight_specs
                     + [pl.BlockSpec((2, m), lambda i: (0, 0))],
            out_specs=pl.BlockSpec((1, co, m), lambda i: (i, 0, 0)),
            compiler_params=_CPARAMS,
        )(x2, w1t, b1, wd, b2, w2t, b3, masks)
        return out.reshape(n, co, h, w)

    # stride == 2: pack the input into its 4 spatial parity phases (single cheap XLA
    # rearrangement of the *input*) so the kernel computes the strided output directly.
    ho, wo = h // 2, w // 2
    mo = ho * wo
    xph = jnp.concatenate(
        [x[:, :, a::2, b::2].reshape(n, ci, mo) for a in (0, 1) for b in (0, 1)], axis=2)
    masks = _masks_s2(ho, wo)
    kern = functools.partial(_mv2_s2_kernel, out_w=wo, mo=mo)
    out = pl.pallas_call(
        kern,
        out_shape=jax.ShapeDtypeStruct((n, co, mo), jnp.float32),
        grid=(n,),
        in_specs=[pl.BlockSpec((1, ci, 4 * mo), lambda i: (i, 0, 0))] + weight_specs
                 + [pl.BlockSpec((2, mo), lambda i: (0, 0))],
        out_specs=pl.BlockSpec((1, co, mo), lambda i: (i, 0, 0)),
        compiler_params=_CPARAMS,
    )(xph, w1t, b1, wd, b2, w2t, b3, masks)
    return out.reshape(n, co, ho, wo)


def deconv_bn_add_relu(x, p, skip):
    """relu(ConvTranspose2d(x) + BN + skip).  x: (N,Ci,h,w), skip: (N,Co,2h,2w)."""
    n, ci, h, w = x.shape
    w4t, b4 = p["w4t"], p["b4"]
    co = w4t.shape[0] // 4
    m = h * w
    x2 = x.reshape(n, ci, m)
    # phase-pack the skip (one pass over it) so the add+ReLU fuses into the kernel
    skip4 = jnp.concatenate(
        [skip[:, :, r::2, s::2].reshape(n, co, m) for r in (0, 1) for s in (0, 1)], axis=1)
    mask = _mask_deconv(h, w)
    kern = functools.partial(_deconv_kernel, low_w=w)
    out4 = pl.pallas_call(
        kern,
        out_shape=jax.ShapeDtypeStruct((n, 4 * co, m), jnp.float32),
        grid=(n,),
        in_specs=[
            pl.BlockSpec((1, ci, m), lambda i: (i, 0, 0)),
            pl.BlockSpec((4 * co, 4 * ci), lambda i: (0, 0)),
            pl.BlockSpec((4 * co, 1), lambda i: (0, 0)),
            pl.BlockSpec((1, 4 * co, m), lambda i: (i, 0, 0)),
            pl.BlockSpec((1, m), lambda i: (0, 0)),
        ],
        out_specs=pl.BlockSpec((1, 4 * co, m), lambda i: (i, 0, 0)),
        compiler_params=_CPARAMS,
    )(x2, w4t, b4, skip4, mask)
    # phase -> spatial interleave (cheap XLA rearrangement at the end)
    out = out4.reshape(n, 2, 2, co, h, w).transpose(0, 3, 4, 1, 5, 2)
    return out.reshape(n, co, 2 * h, 2 * w)


# --------------------------------------------------------------------------- parameters


def _init_bn(key, c):
    k1, k2, k3, k4 = jax.random.split(key, 4)
    gamma = 1.0 + 0.1 * jax.random.normal(k1, (c,), jnp.float32)
    beta = 0.1 * jax.random.normal(k2, (c,), jnp.float32)
    mean = 0.1 * jax.random.normal(k3, (c,), jnp.float32)
    var = jax.random.uniform(k4, (c,), jnp.float32, 0.5, 1.5)
    return gamma, beta, mean, var


def init_mv2_raw(key, inp, oup):
    hidden = inp * 2                                  # expanse_ratio = 2
    ks = jax.random.split(key, 6)
    return dict(
        w1=0.3 * jax.random.normal(ks[0], (hidden, inp), jnp.float32),
        bn1=_init_bn(ks[1], hidden),
        dw=0.3 * jax.random.normal(ks[2], (hidden, 3, 3), jnp.float32),
        bn2=_init_bn(ks[3], hidden),
        w2=0.3 * jax.random.normal(ks[4], (oup, hidden), jnp.float32),
        bn3=_init_bn(ks[5], oup),
    )


def init_deconv_raw(key, cin, cout):
    k1, k2 = jax.random.split(key)
    return dict(w=0.3 * jax.random.normal(k1, (cin, cout, 3, 3), jnp.float32),
                bn=_init_bn(k2, cout))


def _fold_bn(bn):
    gamma, beta, mean, var = bn
    scale = gamma / jnp.sqrt(var + 1e-5)
    return scale, beta - mean * scale


def fold_mv2(raw):
    s1, b1 = _fold_bn(raw["bn1"])
    s2, b2 = _fold_bn(raw["bn2"])
    s3, b3 = _fold_bn(raw["bn3"])
    cm = raw["dw"].shape[0]
    return dict(
        w1t=raw["w1"] * s1[:, None],
        b1=b1[:, None],
        wd=raw["dw"].reshape(cm, 9) * s2[:, None],
        b2=b2[:, None],
        w2t=raw["w2"] * s3[:, None],
        b3=b3[:, None],
    )


def fold_deconv(raw):
    w_t = raw["w"]                                    # torch ConvTranspose2d: (Ci, Co, 3, 3)
    ci, co = w_t.shape[0], w_t.shape[1]
    scale, bias = _fold_bn(raw["bn"])

    def wc(kh, kw):                                   # flipped forward-conv tap, (Co, Ci)
        return jnp.transpose(w_t[:, :, 2 - kh, 2 - kw])

    z = jnp.zeros((co, ci), jnp.float32)
    #        tap: x[i,j]    x[i,j+1]   x[i+1,j]   x[i+1,j+1]
    rows = [
        [wc(1, 1), z,        z,        z],            # out[2i  , 2j  ]
        [wc(1, 0), wc(1, 2), z,        z],            # out[2i  , 2j+1]
        [wc(0, 1), z,        wc(2, 1), z],            # out[2i+1, 2j  ]
        [wc(0, 0), wc(0, 2), wc(2, 0), wc(2, 2)],     # out[2i+1, 2j+1]
    ]
    w4t = jnp.concatenate([jnp.concatenate(r, axis=1) for r in rows], axis=0)  # (4Co, 4Ci)
    return dict(w4t=w4t * jnp.tile(scale, 4)[:, None],
                b4=jnp.tile(bias, 4)[:, None])


def fold_params(raw):
    out = {}
    for name in ("conv1", "conv2", "conv3", "conv4", "redir1", "redir2"):
        out[name] = fold_mv2(raw[name])
    for name in ("conv5", "conv6"):
        out[name] = fold_deconv(raw[name])
    return out


# ------------------------------------------------------------------------------ forward


def hourglass2d(x, params):
    """x: (N, C, H, W) NCHW float32, same layout as the PyTorch module."""
    c1 = mobilev2_residual(x, params["conv1"], stride=2)
    c2 = mobilev2_residual(c1, params["conv2"], stride=1)
    c3 = mobilev2_residual(c2, params["conv3"], stride=2)
    c4 = mobilev2_residual(c3, params["conv4"], stride=1)
    r2 = mobilev2_residual(c2, params["redir2"], stride=1)
    c5 = deconv_bn_add_relu(c4, params["conv5"], r2)
    r1 = mobilev2_residual(x, params["redir1"], stride=1)
    c6 = deconv_bn_add_relu(c5, params["conv6"], r1)
    return c6


# ------------------------------------------------------- pure-XLA reference (for checking)


def _ref_bn(y, bn):
    scale, bias = _fold_bn(bn)
    return y * scale[None, :, None, None] + bias[None, :, None, None]


def _ref_pw(x, w):
    return jnp.einsum("nchw,dc->ndhw", x, w, precision=jax.lax.Precision.HIGHEST)


def _ref_dw(x, w, stride):
    n, c, h, ww = x.shape
    xp = jnp.pad(x, ((0, 0), (0, 0), (1, 1), (1, 1)))
    acc = jnp.zeros_like(x)
    for kh in range(3):
        for kw in range(3):
            acc = acc + xp[:, :, kh:kh + h, kw:kw + ww] * w[None, :, kh, kw, None, None]
    if stride == 2:
        acc = acc[:, :, ::2, ::2]
    return acc


def _ref_mv2(x, raw, stride):
    h1 = jnp.clip(_ref_bn(_ref_pw(x, raw["w1"]), raw["bn1"]), 0.0, 6.0)
    h2 = jnp.clip(_ref_bn(_ref_dw(h1, raw["dw"], stride), raw["bn2"]), 0.0, 6.0)
    y = _ref_bn(_ref_pw(h2, raw["w2"]), raw["bn3"])
    if stride == 1 and raw["w1"].shape[1] == raw["w2"].shape[0]:
        y = y + x
    return y


def _ref_deconv(x, raw, skip):
    w_t, bn = raw["w"], raw["bn"]
    n, ci, h, w = x.shape
    co = w_t.shape[1]
    ho, wo = 2 * h, 2 * w
    up = jnp.zeros((n, ci, 2 * h - 1, 2 * w - 1), x.dtype).at[:, :, ::2, ::2].set(x)
    xp = jnp.pad(up, ((0, 0), (0, 0), (1, 2), (1, 2)))
    wflip = w_t[:, :, ::-1, ::-1]
    acc = jnp.zeros((n, co, ho, wo), jnp.float32)
    for kh in range(3):
        for kw in range(3):
            acc = acc + jnp.einsum("nchw,cd->ndhw", xp[:, :, kh:kh + ho, kw:kw + wo],
                                   wflip[:, :, kh, kw],
                                   precision=jax.lax.Precision.HIGHEST)
    return jnp.maximum(_ref_bn(acc, bn) + skip, 0.0)


def hourglass2d_reference(x, raw):
    c1 = _ref_mv2(x, raw["conv1"], 2)
    c2 = _ref_mv2(c1, raw["conv2"], 1)
    c3 = _ref_mv2(c2, raw["conv3"], 2)
    c4 = _ref_mv2(c3, raw["conv4"], 1)
    r2 = _ref_mv2(c2, raw["redir2"], 1)
    c5 = _ref_deconv(c4, raw["conv5"], r2)
    r1 = _ref_mv2(x, raw["redir1"], 1)
    c6 = _ref_deconv(c5, raw["conv6"], r1)
    return c6


# --------------------------------------------------------------------------------- main


if __name__ == "__main__":
    C = 4
    key = jax.random.PRNGKey(0)
    kx, kp = jax.random.split(key)
    x = jax.random.normal(kx, (2, C, 16, 16), jnp.float32)

    pk = jax.random.split(kp, 8)
    raw_params = {
        "conv1": init_mv2_raw(pk[0], C, 2 * C),
        "conv2": init_mv2_raw(pk[1], 2 * C, 2 * C),
        "conv3": init_mv2_raw(pk[2], 2 * C, 4 * C),
        "conv4": init_mv2_raw(pk[3], 4 * C, 4 * C),
        "conv5": init_deconv_raw(pk[4], 4 * C, 2 * C),
        "conv6": init_deconv_raw(pk[5], 2 * C, C),
        "redir1": init_mv2_raw(pk[6], C, C),
        "redir2": init_mv2_raw(pk[7], 2 * C, 2 * C),
    }
    params = fold_params(raw_params)

    fwd = jax.jit(hourglass2d)
    out = fwd(x, params)
    jax.block_until_ready(out)

    assert out.shape == (2, C, 16, 16), out.shape
    assert out.dtype == jnp.float32

    # Cross-check the fused Pallas path against a plain-XLA reference of the module.
    ref = jax.jit(hourglass2d_reference)(x, raw_params)
    jax.block_until_ready(ref)
    err = float(jnp.max(jnp.abs(out - ref)))
    assert err < 2e-3, f"Pallas output mismatch vs reference: max abs err = {err}"

    print("KERNEL_OK")
</pallas_src>

<mosaic_0001>
module attributes {stable_mosaic.version = 11 : i64} {
  func.func @_mv2_s1_kernel(%arg0: i32, %arg1: memref<1x4x256xf32, #tpu.memory_space<vmem>>, %arg2: memref<8x4xf32, #tpu.memory_space<vmem>>, %arg3: memref<8x1xf32, #tpu.memory_space<vmem>>, %arg4: memref<8x9xf32, #tpu.memory_space<vmem>>, %arg5: memref<8x1xf32, #tpu.memory_space<vmem>>, %arg6: memref<4x8xf32, #tpu.memory_space<vmem>>, %arg7: memref<4x1xf32, #tpu.memory_space<vmem>>, %arg8: memref<2x256xf32, #tpu.memory_space<vmem>>, %arg9: memref<1x4x256xf32, #tpu.memory_space<vmem>>) attributes {dimension_semantics = [#tpu.dimension_semantics<parallel>], iteration_bounds = array<i64: 2>, scalar_prefetch = 0 : i64, scratch_operands = 0 : i64, tpu.core_type = #tpu.core_type<tc>, window_params = [{transform_indices = @transform_0, window_bounds = array<i64: 1, 4, 256>}, {pipeline_mode = #tpu.pipeline_mode<synchronous>, transform_indices = @transform_1, window_bounds = array<i64: 8, 4>}, {pipeline_mode = #tpu.pipeline_mode<synchronous>, transform_indices = @transform_2, window_bounds = array<i64: 8, 1>}, {pipeline_mode = #tpu.pipeline_mode<synchronous>, transform_indices = @transform_3, window_bounds = array<i64: 8, 9>}, {pipeline_mode = #tpu.pipeline_mode<synchronous>, transform_indices = @transform_4, window_bounds = array<i64: 8, 1>}, {pipeline_mode = #tpu.pipeline_mode<synchronous>, transform_indices = @transform_5, window_bounds = array<i64: 4, 8>}, {pipeline_mode = #tpu.pipeline_mode<synchronous>, transform_indices = @transform_6, window_bounds = array<i64: 4, 1>}, {pipeline_mode = #tpu.pipeline_mode<synchronous>, transform_indices = @transform_7, window_bounds = array<i64: 2, 256>}, {transform_indices = @transform_8, window_bounds = array<i64: 1, 4, 256>}]} {
    %c0 = arith.constant 0 : index
    %c0_0 = arith.constant 0 : index
    %c0_1 = arith.constant 0 : index
    %0 = vector.load %arg1[%c0, %c0_0, %c0_1] : memref<1x4x256xf32, #tpu.memory_space<vmem>>, vector<1x4x256xf32>
    %1 = vector.shape_cast %0 : vector<1x4x256xf32> to vector<4x256xf32>
    %c0_2 = arith.constant 0 : index
    %c0_3 = arith.constant 0 : index
    %2 = vector.load %arg2[%c0_2, %c0_3] : memref<8x4xf32, #tpu.memory_space<vmem>>, vector<8x4xf32>
    %cst = arith.constant dense<0.000000e+00> : vector<8x256xf32>
    %3 = tpu.matmul %2, %1, %cst {dimension_numbers = #tpu.dot_dimension_numbers<[1], [0], [0], [1], [0, 0, 1, 1], [], []>} : vector<8x4xf32>, vector<4x256xf32>, vector<8x256xf32> -> vector<8x256xf32>
    %c0_4 = arith.constant 0 : index
    %c0_5 = arith.constant 0 : index
    %4 = vector.load %arg3[%c0_4, %c0_5] : memref<8x1xf32, #tpu.memory_space<vmem>>, vector<8x1xf32>
    %5 = vector.broadcast %4 : vector<8x1xf32> to vector<8x256xf32>
    %6 = arith.addf %3, %5 : vector<8x256xf32>
    %cst_6 = arith.constant 0.000000e+00 : f32
    %cst_7 = arith.constant 6.000000e+00 : f32
    %7 = vector.broadcast %cst_6 : f32 to vector<8x256xf32>
    %8 = arith.maximumf %7, %6 : vector<8x256xf32>
    %9 = vector.broadcast %cst_7 : f32 to vector<8x256xf32>
    %10 = arith.minimumf %9, %8 : vector<8x256xf32>
    %cst_8 = arith.constant 0.000000e+00 : f32
    %11 = vector.broadcast %cst_8 : f32 to vector<8x17xf32>
    %12 = tpu.concatenate %11, %10, %11 in 1 : vector<8x17xf32>, vector<8x256xf32>, vector<8x17xf32> -> vector<8x290xf32>
    %c0_9 = arith.constant 0 : index
    %c0_10 = arith.constant 0 : index
    %13 = vector.load %arg4[%c0_9, %c0_10] : memref<8x9xf32, #tpu.memory_space<vmem>>, vector<8x9xf32>
    %c0_11 = arith.constant 0 : index
    %c0_12 = arith.constant 0 : index
    %14 = vector.load %arg8[%c0_11, %c0_12] : memref<2x256xf32, #tpu.memory_space<vmem>>, vector<1x256xf32>
    %c1 = arith.constant 1 : index
    %c0_13 = arith.constant 0 : index
    %15 = vector.load %arg8[%c1, %c0_13] : memref<2x256xf32, #tpu.memory_space<vmem>>, vector<1x256xf32>
    %cst_14 = arith.constant 0.000000e+00 : f32
    %16 = vector.broadcast %cst_14 : f32 to vector<8x256xf32>
    %17 = vector.extract_strided_slice %12 {offsets = [0, 0], sizes = [8, 256], strides = [1, 1]} : vector<8x290xf32> to vector<8x256xf32>
    %18 = vector.broadcast %14 : vector<1x256xf32> to vector<8x256xf32>
    %19 = arith.mulf %17, %18 : vector<8x256xf32>
    %20 = vector.extract_strided_slice %13 {offsets = [0, 0], sizes = [8, 1], strides = [1, 1]} : vector<8x9xf32> to vector<8x1xf32>
    %21 = vector.broadcast %20 : vector<8x1xf32> to vector<8x256xf32>
    %22 = arith.mulf %19, %21 : vector<8x256xf32>
    %23 = arith.addf %16, %22 : vector<8x256xf32>
    %24 = vector.extract_strided_slice %12 {offsets = [0, 1], sizes = [8, 256], strides = [1, 1]} : vector<8x290xf32> to vector<8x256xf32>
    %25 = vector.extract_strided_slice %13 {offsets = [0, 1], sizes = [8, 1], strides = [1, 1]} : vector<8x9xf32> to vector<8x1xf32>
    %26 = vector.broadcast %25 : vector<8x1xf32> to vector<8x256xf32>
    %27 = arith.mulf %24, %26 : vector<8x256xf32>
    %28 = arith.addf %23, %27 : vector<8x256xf32>
    %29 = vector.extract_strided_slice %12 {offsets = [0, 2], sizes = [8, 256], strides = [1, 1]} : vector<8x290xf32> to vector<8x256xf32>
    %30 = vector.broadcast %15 : vector<1x256xf32> to vector<8x256xf32>
    %31 = arith.mulf %29, %30 : vector<8x256xf32>
    %32 = vector.extract_strided_slice %13 {offsets = [0, 2], sizes = [8, 1], strides = [1, 1]} : vector<8x9xf32> to vector<8x1xf32>
    %33 = vector.broadcast %32 : vector<8x1xf32> to vector<8x256xf32>
    %34 = arith.mulf %31, %33 : vector<8x256xf32>
    %35 = arith.addf %28, %34 : vector<8x256xf32>
    %36 = vector.extract_strided_slice %12 {offsets = [0, 16], sizes = [8, 256], strides = [1, 1]} : vector<8x290xf32> to vector<8x256xf32>
    %37 = vector.broadcast %14 : vector<1x256xf32> to vector<8x256xf32>
    %38 = arith.mulf %36, %37 : vector<8x256xf32>
    %39 = vector.extract_strided_slice %13 {offsets = [0, 3], sizes = [8, 1], strides = [1, 1]} : vector<8x9xf32> to vector<8x1xf32>
    %40 = vector.broadcast %39 : vector<8x1xf32> to vector<8x256xf32>
    %41 = arith.mulf %38, %40 : vector<8x256xf32>
    %42 = arith.addf %35, %41 : vector<8x256xf32>
    %43 = vector.extract_strided_slice %12 {offsets = [0, 17], sizes = [8, 256], strides = [1, 1]} : vector<8x290xf32> to vector<8x256xf32>
    %44 = vector.extract_strided_slice %13 {offsets = [0, 4], sizes = [8, 1], strides = [1, 1]} : vector<8x9xf32> to vector<8x1xf32>
    %45 = vector.broadcast %44 : vector<8x1xf32> to vector<8x256xf32>
    %46 = arith.mulf %43, %45 : vector<8x256xf32>
    %47 = arith.addf %42, %46 : vector<8x256xf32>
    %48 = vector.extract_strided_slice %12 {offsets = [0, 18], sizes = [8, 256], strides = [1, 1]} : vector<8x290xf32> to vector<8x256xf32>
    %49 = vector.broadcast %15 : vector<1x256xf32> to vector<8x256xf32>
    %50 = arith.mulf %48, %49 : vector<8x256xf32>
    %51 = vector.extract_strided_slice %13 {offsets = [0, 5], sizes = [8, 1], strides = [1, 1]} : vector<8x9xf32> to vector<8x1xf32>
    %52 = vector.broadcast %51 : vector<8x1xf32> to vector<8x256xf32>
    %53 = arith.mulf %50, %52 : vector<8x256xf32>
    %54 = arith.addf %47, %53 : vector<8x256xf32>
    %55 = vector.extract_strided_slice %12 {offsets = [0, 32], sizes = [8, 256], strides = [1, 1]} : vector<8x290xf32> to vector<8x256xf32>
    %56 = vector.broadcast %14 : vector<1x256xf32> to vector<8x256xf32>
    %57 = arith.mulf %55, %56 : vector<8x256xf32>
    %58 = vector.extract_strided_slice %13 {offsets = [0, 6], sizes = [8, 1], strides = [1, 1]} : vector<8x9xf32> to vector<8x1xf32>
    %59 = vector.broadcast %58 : vector<8x1xf32> to vector<8x256xf32>
    %60 = arith.mulf %57, %59 : vector<8x256xf32>
    %61 = arith.addf %54, %60 : vector<8x256xf32>
    %62 = vector.extract_strided_slice %12 {offsets = [0, 33], sizes = [8, 256], strides = [1, 1]} : vector<8x290xf32> to vector<8x256xf32>
    %63 = vector.extract_strided_slice %13 {offsets = [0, 7], sizes = [8, 1], strides = [1, 1]} : vector<8x9xf32> to vector<8x1xf32>
    %64 = vector.broadcast %63 : vector<8x1xf32> to vector<8x256xf32>
    %65 = arith.mulf %62, %64 : vector<8x256xf32>
    %66 = arith.addf %61, %65 : vector<8x256xf32>
    %67 = vector.extract_strided_slice %12 {offsets = [0, 34], sizes = [8, 256], strides = [1, 1]} : vector<8x290xf32> to vector<8x256xf32>
    %68 = vector.broadcast %15 : vector<1x256xf32> to vector<8x256xf32>
    %69 = arith.mulf %67, %68 : vector<8x256xf32>
    %70 = vector.extract_strided_slice %13 {offsets = [0, 8], sizes = [8, 1], strides = [1, 1]} : vector<8x9xf32> to vector<8x1xf32>
    %71 = vector.broadcast %70 : vector<8x1xf32> to vector<8x256xf32>
    %72 = arith.mulf %69, %71 : vector<8x256xf32>
    %73 = arith.addf %66, %72 : vector<8x256xf32>
    %c0_15 = arith.constant 0 : index
    %c0_16 = arith.constant 0 : index
    %74 = vector.load %arg5[%c0_15, %c0_16] : memref<8x1xf32, #tpu.memory_space<vmem>>, vector<8x1xf32>
    %75 = vector.broadcast %74 : vector<8x1xf32> to vector<8x256xf32>
    %76 = arith.addf %73, %75 : vector<8x256xf32>
    %cst_17 = arith.constant 0.000000e+00 : f32
    %cst_18 = arith.constant 6.000000e+00 : f32
    %77 = vector.broadcast %cst_17 : f32 to vector<8x256xf32>
    %78 = arith.maximumf %77, %76 : vector<8x256xf32>
    %79 = vector.broadcast %cst_18 : f32 to vector<8x256xf32>
    %80 = arith.minimumf %79, %78 : vector<8x256xf32>
    %c0_19 = arith.constant 0 : index
    %c0_20 = arith.constant 0 : index
    %81 = vector.load %arg6[%c0_19, %c0_20] : memref<4x8xf32, #tpu.memory_space<vmem>>, vector<4x8xf32>
    %cst_21 = arith.constant dense<0.000000e+00> : vector<4x256xf32>
    %82 = tpu.matmul %81, %80, %cst_21 {dimension_numbers = #tpu.dot_dimension_numbers<[1], [0], [0], [1], [0, 0, 1, 1], [], []>} : vector<4x8xf32>, vector<8x256xf32>, vector<4x256xf32> -> vector<4x256xf32>
    %c0_22 = arith.constant 0 : index
    %c0_23 = arith.constant 0 : index
    %83 = vector.load %arg7[%c0_22, %c0_23] : memref<4x1xf32, #tpu.memory_space<vmem>>, vector<4x1xf32>
    %84 = vector.broadcast %83 : vector<4x1xf32> to vector<4x256xf32>
    %85 = arith.addf %82, %84 : vector<4x256xf32>
    %86 = arith.addf %85, %1 : vector<4x256xf32>
    %c0_24 = arith.constant 0 : index
    %c0_25 = arith.constant 0 : index
    %c0_26 = arith.constant 0 : index
    %87 = vector.load %arg9[%c0_24, %c0_25, %c0_26] : memref<1x4x256xf32, #tpu.memory_space<vmem>>, vector<1x4x256xf32>
    %88 = vector.shape_cast %87 : vector<1x4x256xf32> to vector<4x256xf32>
    %89 = vector.shape_cast %86 : vector<4x256xf32> to vector<1x4x256xf32>
    tpu.vector_store %arg9[%c0_24, %c0_25, %c0_26], %89 {strides = array<i32>} : memref<1x4x256xf32, #tpu.memory_space<vmem>>, vector<1x4x256xf32>,
    return
  }
  func.func @transform_0(%arg0: i32) -> (i32, i32, i32) {
    %c0_i32 = arith.constant 0 : i32
    %c0_i32_0 = arith.constant 0 : i32
    %c0_i32_1 = arith.constant 0 : i32
    return %arg0, %c0_i32, %c0_i32_0 : i32, i32, i32
  }
  func.func @transform_1(%arg0: i32) -> (i32, i32) {
    %c0_i32 = arith.constant 0 : i32
    %c0_i32_0 = arith.constant 0 : i32
    %c0_i32_1 = arith.constant 0 : i32
    return %c0_i32, %c0_i32_0 : i32, i32
  }
  func.func @transform_2(%arg0: i32) -> (i32, i32) {
    %c0_i32 = arith.constant 0 : i32
    %c0_i32_0 = arith.constant 0 : i32
    %c0_i32_1 = arith.constant 0 : i32
    return %c0_i32, %c0_i32_0 : i32, i32
  }
  func.func @transform_3(%arg0: i32) -> (i32, i32) {
    %c0_i32 = arith.constant 0 : i32
    %c0_i32_0 = arith.constant 0 : i32
    %c0_i32_1 = arith.constant 0 : i32
    return %c0_i32, %c0_i32_0 : i32, i32
  }
  func.func @transform_4(%arg0: i32) -> (i32, i32) {
    %c0_i32 = arith.constant 0 : i32
    %c0_i32_0 = arith.constant 0 : i32
    %c0_i32_1 = arith.constant 0 : i32
    return %c0_i32, %c0_i32_0 : i32, i32
  }
  func.func @transform_5(%arg0: i32) -> (i32, i32) {
    %c0_i32 = arith.constant 0 : i32
    %c0_i32_0 = arith.constant 0 : i32
    %c0_i32_1 = arith.constant 0 : i32
    return %c0_i32, %c0_i32_0 : i32, i32
  }
  func.func @transform_6(%arg0: i32) -> (i32, i32) {
    %c0_i32 = arith.constant 0 : i32
    %c0_i32_0 = arith.constant 0 : i32
    %c0_i32_1 = arith.constant 0 : i32
    return %c0_i32, %c0_i32_0 : i32, i32
  }
  func.func @transform_7(%arg0: i32) -> (i32, i32) {
    %c0_i32 = arith.constant 0 : i32
    %c0_i32_0 = arith.constant 0 : i32
    %c0_i32_1 = arith.constant 0 : i32
    return %c0_i32, %c0_i32_0 : i32, i32
  }
  func.func @transform_8(%arg0: i32) -> (i32, i32, i32) {
    %c0_i32 = arith.constant 0 : i32
    %c0_i32_0 = arith.constant 0 : i32
    %c0_i32_1 = arith.constant 0 : i32
    return %arg0, %c0_i32, %c0_i32_0 : i32, i32, i32
  }
}

module attributes {stable_mosaic.version = 11 : i64} {
  func.func @_mv2_s2_kernel(%arg0: i32, %arg1: memref<1x4x256xf32, #tpu.memory_space<vmem>>, %arg2: memref<8x4xf32, #tpu.memory_space<vmem>>, %arg3: memref<8x1xf32, #tpu.memory_space<vmem>>, %arg4: memref<8x9xf32, #tpu.memory_space<vmem>>, %arg5: memref<8x1xf32, #tpu.memory_space<vmem>>, %arg6: memref<8x8xf32, #tpu.memory_space<vmem>>, %arg7: memref<8x1xf32, #tpu.memory_space<vmem>>, %arg8: memref<2x64xf32, #tpu.memory_space<vmem>>, %arg9: memref<1x8x64xf32, #tpu.memory_space<vmem>>) attributes {dimension_semantics = [#tpu.dimension_semantics<parallel>], iteration_bounds = array<i64: 2>, scalar_prefetch = 0 : i64, scratch_operands = 0 : i64, tpu.core_type = #tpu.core_type<tc>, window_params = [{transform_indices = @transform_0, window_bounds = array<i64: 1, 4, 256>}, {pipeline_mode = #tpu.pipeline_mode<synchronous>, transform_indices = @transform_1, window_bounds = array<i64: 8, 4>}, {pipeline_mode = #tpu.pipeline_mode<synchronous>, transform_indices = @transform_2, window_bounds = array<i64: 8, 1>}, {pipeline_mode = #tpu.pipeline_mode<synchronous>, transform_indices = @transform_3, window_bounds = array<i64: 8, 9>}, {pipeline_mode = #tpu.pipeline_mode<synchronous>, transform_indices = @transform_4, window_bounds = array<i64: 8, 1>}, {pipeline_mode = #tpu.pipeline_mode<synchronous>, transform_indices = @transform_5, window_bounds = array<i64: 8, 8>}, {pipeline_mode = #tpu.pipeline_mode<synchronous>, transform_indices = @transform_6, window_bounds = array<i64: 8, 1>}, {pipeline_mode = #tpu.pipeline_mode<synchronous>, transform_indices = @transform_7, window_bounds = array<i64: 2, 64>}, {transform_indices = @transform_8, window_bounds = array<i64: 1, 8, 64>}]} {
    %c0 = arith.constant 0 : index
    %c0_0 = arith.constant 0 : index
    %c0_1 = arith.constant 0 : index
    %0 = vector.load %arg1[%c0, %c0_0, %c0_1] : memref<1x4x256xf32, #tpu.memory_space<vmem>>, vector<1x4x256xf32>
    %1 = vector.shape_cast %0 : vector<1x4x256xf32> to vector<4x256xf32>
    %c0_2 = arith.constant 0 : index
    %c0_3 = arith.constant 0 : index
    %2 = vector.load %arg2[%c0_2, %c0_3] : memref<8x4xf32, #tpu.memory_space<vmem>>, vector<8x4xf32>
    %cst = arith.constant dense<0.000000e+00> : vector<8x256xf32>
    %3 = tpu.matmul %2, %1, %cst {dimension_numbers = #tpu.dot_dimension_numbers<[1], [0], [0], [1], [0, 0, 1, 1], [], []>} : vector<8x4xf32>, vector<4x256xf32>, vector<8x256xf32> -> vector<8x256xf32>
    %c0_4 = arith.constant 0 : index
    %c0_5 = arith.constant 0 : index
    %4 = vector.load %arg3[%c0_4, %c0_5] : memref<8x1xf32, #tpu.memory_space<vmem>>, vector<8x1xf32>
    %5 = vector.broadcast %4 : vector<8x1xf32> to vector<8x256xf32>
    %6 = arith.addf %3, %5 : vector<8x256xf32>
    %cst_6 = arith.constant 0.000000e+00 : f32
    %cst_7 = arith.constant 6.000000e+00 : f32
    %7 = vector.broadcast %cst_6 : f32 to vector<8x256xf32>
    %8 = arith.maximumf %7, %6 : vector<8x256xf32>
    %9 = vector.broadcast %cst_7 : f32 to vector<8x256xf32>
    %10 = arith.minimumf %9, %8 : vector<8x256xf32>
    %c0_8 = arith.constant 0 : index
    %c0_9 = arith.constant 0 : index
    %11 = vector.load %arg4[%c0_8, %c0_9] : memref<8x9xf32, #tpu.memory_space<vmem>>, vector<8x9xf32>
    %c0_10 = arith.constant 0 : index
    %c0_11 = arith.constant 0 : index
    %12 = vector.load %arg8[%c0_10, %c0_11] : memref<2x64xf32, #tpu.memory_space<vmem>>, vector<1x64xf32>
    %c1 = arith.constant 1 : index
    %c0_12 = arith.constant 0 : index
    %13 = vector.load %arg8[%c1, %c0_12] : memref<2x64xf32, #tpu.memory_space<vmem>>, vector<1x64xf32>
    %cst_13 = arith.constant 0.000000e+00 : f32
    %14 = vector.broadcast %cst_13 : f32 to vector<8x64xf32>
    %15 = vector.extract_strided_slice %10 {offsets = [0, 183], sizes = [8, 64], strides = [1, 1]} : vector<8x256xf32> to vector<8x64xf32>
    %16 = vector.broadcast %13 : vector<1x64xf32> to vector<8x64xf32>
    %17 = arith.mulf %15, %16 : vector<8x64xf32>
    %18 = vector.broadcast %12 : vector<1x64xf32> to vector<8x64xf32>
    %19 = arith.mulf %17, %18 : vector<8x64xf32>
    %20 = vector.extract_strided_slice %11 {offsets = [0, 0], sizes = [8, 1], strides = [1, 1]} : vector<8x9xf32> to vector<8x1xf32>
    %21 = vector.broadcast %20 : vector<8x1xf32> to vector<8x64xf32>
    %22 = arith.mulf %19, %21 : vector<8x64xf32>
    %23 = arith.addf %14, %22 : vector<8x64xf32>
    %24 = vector.extract_strided_slice %10 {offsets = [0, 120], sizes = [8, 64], strides = [1, 1]} : vector<8x256xf32> to vector<8x64xf32>
    %25 = vector.broadcast %13 : vector<1x64xf32> to vector<8x64xf32>
    %26 = arith.mulf %24, %25 : vector<8x64xf32>
    %27 = vector.extract_strided_slice %11 {offsets = [0, 1], sizes = [8, 1], strides = [1, 1]} : vector<8x9xf32> to vector<8x1xf32>
    %28 = vector.broadcast %27 : vector<8x1xf32> to vector<8x64xf32>
    %29 = arith.mulf %26, %28 : vector<8x64xf32>
    %30 = arith.addf %23, %29 : vector<8x64xf32>
    %31 = vector.extract_strided_slice %10 {offsets = [0, 184], sizes = [8, 64], strides = [1, 1]} : vector<8x256xf32> to vector<8x64xf32>
    %32 = vector.broadcast %13 : vector<1x64xf32> to vector<8x64xf32>
    %33 = arith.mulf %31, %32 : vector<8x64xf32>
    %34 = vector.extract_strided_slice %11 {offsets = [0, 2], sizes = [8, 1], strides = [1, 1]} : vector<8x9xf32> to vector<8x1xf32>
    %35 = vector.broadcast %34 : vector<8x1xf32> to vector<8x64xf32>
    %36 = arith.mulf %33, %35 : vector<8x64xf32>
    %37 = arith.addf %30, %36 : vector<8x64xf32>
    %38 = vector.extract_strided_slice %10 {offsets = [0, 63], sizes = [8, 64], strides = [1, 1]} : vector<8x256xf32> to vector<8x64xf32>
    %39 = vector.broadcast %12 : vector<1x64xf32> to vector<8x64xf32>
    %40 = arith.mulf %38, %39 : vector<8x64xf32>
    %41 = vector.extract_strided_slice %11 {offsets = [0, 3], sizes = [8, 1], strides = [1, 1]} : vector<8x9xf32> to vector<8x1xf32>
    %42 = vector.broadcast %41 : vector<8x1xf32> to vector<8x64xf32>
    %43 = arith.mulf %40, %42 : vector<8x64xf32>
    %44 = arith.addf %37, %43 : vector<8x64xf32>
    %45 = vector.extract_strided_slice %10 {offsets = [0, 0], sizes = [8, 64], strides = [1, 1]} : vector<8x256xf32> to vector<8x64xf32>
    %46 = vector.extract_strided_slice %11 {offsets = [0, 4], sizes = [8, 1], strides = [1, 1]} : vector<8x9xf32> to vector<8x1xf32>
    %47 = vector.broadcast %46 : vector<8x1xf32> to vector<8x64xf32>
    %48 = arith.mulf %45, %47 : vector<8x64xf32>
    %49 = arith.addf %44, %48 : vector<8x64xf32>
    %50 = vector.extract_strided_slice %10 {offsets = [0, 64], sizes = [8, 64], strides = [1, 1]} : vector<8x256xf32> to vector<8x64xf32>
    %51 = vector.extract_strided_slice %11 {offsets = [0, 5], sizes = [8, 1], strides = [1, 1]} : vector<8x9xf32> to vector<8x1xf32>
    %52 = vector.broadcast %51 : vector<8x1xf32> to vector<8x64xf32>
    %53 = arith.mulf %50, %52 : vector<8x64xf32>
    %54 = arith.addf %49, %53 : vector<8x64xf32>
    %55 = vector.extract_strided_slice %10 {offsets = [0, 191], sizes = [8, 64], strides = [1, 1]} : vector<8x256xf32> to vector<8x64xf32>
    %56 = vector.broadcast %12 : vector<1x64xf32> to vector<8x64xf32>
    %57 = arith.mulf %55, %56 : vector<8x64xf32>
    %58 = vector.extract_strided_slice %11 {offsets = [0, 6], sizes = [8, 1], strides = [1, 1]} : vector<8x9xf32> to vector<8x1xf32>
    %59 = vector.broadcast %58 : vector<8x1xf32> to vector<8x64xf32>
    %60 = arith.mulf %57, %59 : vector<8x64xf32>
    %61 = arith.addf %54, %60 : vector<8x64xf32>
    %62 = vector.extract_strided_slice %10 {offsets = [0, 128], sizes = [8, 64], strides = [1, 1]} : vector<8x256xf32> to vector<8x64xf32>
    %63 = vector.extract_strided_slice %11 {offsets = [0, 7], sizes = [8, 1], strides = [1, 1]} : vector<8x9xf32> to vector<8x1xf32>
    %64 = vector.broadcast %63 : vector<8x1xf32> to vector<8x64xf32>
    %65 = arith.mulf %62, %64 : vector<8x64xf32>
    %66 = arith.addf %61, %65 : vector<8x64xf32>
    %67 = vector.extract_strided_slice %10 {offsets = [0, 192], sizes = [8, 64], strides = [1, 1]} : vector<8x256xf32> to vector<8x64xf32>
    %68 = vector.extract_strided_slice %11 {offsets = [0, 8], sizes = [8, 1], strides = [1, 1]} : vector<8x9xf32> to vector<8x1xf32>
    %69 = vector.broadcast %68 : vector<8x1xf32> to vector<8x64xf32>
    %70 = arith.mulf %67, %69 : vector<8x64xf32>
    %71 = arith.addf %66, %70 : vector<8x64xf32>
    %c0_14 = arith.constant 0 : index
    %c0_15 = arith.constant 0 : index
    %72 = vector.load %arg5[%c0_14, %c0_15] : memref<8x1xf32, #tpu.memory_space<vmem>>, vector<8x1xf32>
    %73 = vector.broadcast %72 : vector<8x1xf32> to vector<8x64xf32>
    %74 = arith.addf %71, %73 : vector<8x64xf32>
    %cst_16 = arith.constant 0.000000e+00 : f32
    %cst_17 = arith.constant 6.000000e+00 : f32
    %75 = vector.broadcast %cst_16 : f32 to vector<8x64xf32>
    %76 = arith.maximumf %75, %74 : vector<8x64xf32>
    %77 = vector.broadcast %cst_17 : f32 to vector<8x64xf32>
    %78 = arith.minimumf %77, %76 : vector<8x64xf32>
    %c0_18 = arith.constant 0 : index
    %c0_19 = arith.constant 0 : index
    %79 = vector.load %arg6[%c0_18, %c0_19] : memref<8x8xf32, #tpu.memory_space<vmem>>, vector<8x8xf32>
    %cst_20 = arith.constant dense<0.000000e+00> : vector<8x64xf32>
    %80 = tpu.matmul %79, %78, %cst_20 {dimension_numbers = #tpu.dot_dimension_numbers<[1], [0], [0], [1], [0, 0, 1, 1], [], []>} : vector<8x8xf32>, vector<8x64xf32>, vector<8x64xf32> -> vector<8x64xf32>
    %c0_21 = arith.constant 0 : index
    %c0_22 = arith.constant 0 : index
    %81 = vector.load %arg7[%c0_21, %c0_22] : memref<8x1xf32, #tpu.memory_space<vmem>>, vector<8x1xf32>
    %82 = vector.broadcast %81 : vector<8x1xf32> to vector<8x64xf32>
    %83 = arith.addf %80, %82 : vector<8x64xf32>
    %c0_23 = arith.constant 0 : index
    %c0_24 = arith.constant 0 : index
    %c0_25 = arith.constant 0 : index
    %84 = vector.load %arg9[%c0_23, %c0_24, %c0_25] : memref<1x8x64xf32, #tpu.memory_space<vmem>>, vector<1x8x64xf32>
    %85 = vector.shape_cast %84 : vector<1x8x64xf32> to vector<8x64xf32>
    %86 = vector.shape_cast %83 : vector<8x64xf32> to vector<1x8x64xf32>
    tpu.vector_store %arg9[%c0_23, %c0_24, %c0_25], %86 {strides = array<i32>} : memref<1x8x64xf32, #tpu.memory_space<vmem>>, vector<1x8x64xf32>,
    return
  }
  func.func @transform_0(%arg0: i32) -> (i32, i32, i32) {
    %c0_i32 = arith.constant 0 : i32
    %c0_i32_0 = arith.constant 0 : i32
    %c0_i32_1 = arith.constant 0 : i32
    return %arg0, %c0_i32, %c0_i32_0 : i32, i32, i32
  }
  func.func @transform_1(%arg0: i32) -> (i32, i32) {
    %c0_i32 = arith.constant 0 : i32
    %c0_i32_0 = arith.constant 0 : i32
    %c0_i32_1 = arith.constant 0 : i32
    return %c0_i32, %c0_i32_0 : i32, i32
  }
  func.func @transform_2(%arg0: i32) -> (i32, i32) {
    %c0_i32 = arith.constant 0 : i32
    %c0_i32_0 = arith.constant 0 : i32
    %c0_i32_1 = arith.constant 0 : i32
    return %c0_i32, %c0_i32_0 : i32, i32
  }
  func.func @transform_3(%arg0: i32) -> (i32, i32) {
    %c0_i32 = arith.constant 0 : i32
    %c0_i32_0 = arith.constant 0 : i32
    %c0_i32_1 = arith.constant 0 : i32
    return %c0_i32, %c0_i32_0 : i32, i32
  }
  func.func @transform_4(%arg0: i32) -> (i32, i32) {
    %c0_i32 = arith.constant 0 : i32
    %c0_i32_0 = arith.constant 0 : i32
    %c0_i32_1 = arith.constant 0 : i32
    return %c0_i32, %c0_i32_0 : i32, i32
  }
  func.func @transform_5(%arg0: i32) -> (i32, i32) {
    %c0_i32 = arith.constant 0 : i32
    %c0_i32_0 = arith.constant 0 : i32
    %c0_i32_1 = arith.constant 0 : i32
    return %c0_i32, %c0_i32_0 : i32, i32
  }
  func.func @transform_6(%arg0: i32) -> (i32, i32) {
    %c0_i32 = arith.constant 0 : i32
    %c0_i32_0 = arith.constant 0 : i32
    %c0_i32_1 = arith.constant 0 : i32
    return %c0_i32, %c0_i32_0 : i32, i32
  }
  func.func @transform_7(%arg0: i32) -> (i32, i32) {
    %c0_i32 = arith.constant 0 : i32
    %c0_i32_0 = arith.constant 0 : i32
    %c0_i32_1 = arith.constant 0 : i32
    return %c0_i32, %c0_i32_0 : i32, i32
  }
  func.func @transform_8(%arg0: i32) -> (i32, i32, i32) {
    %c0_i32 = arith.constant 0 : i32
    %c0_i32_0 = arith.constant 0 : i32
    %c0_i32_1 = arith.constant 0 : i32
    return %arg0, %c0_i32, %c0_i32_0 : i32, i32, i32
  }
}

module attributes {stable_mosaic.version = 11 : i64} {
  func.func @_mv2_s1_kernel(%arg0: i32, %arg1: memref<1x8x64xf32, #tpu.memory_space<vmem>>, %arg2: memref<16x8xf32, #tpu.memory_space<vmem>>, %arg3: memref<16x1xf32, #tpu.memory_space<vmem>>, %arg4: memref<16x9xf32, #tpu.memory_space<vmem>>, %arg5: memref<16x1xf32, #tpu.memory_space<vmem>>, %arg6: memref<8x16xf32, #tpu.memory_space<vmem>>, %arg7: memref<8x1xf32, #tpu.memory_space<vmem>>, %arg8: memref<2x64xf32, #tpu.memory_space<vmem>>, %arg9: memref<1x8x64xf32, #tpu.memory_space<vmem>>) attributes {dimension_semantics = [#tpu.dimension_semantics<parallel>], iteration_bounds = array<i64: 2>, scalar_prefetch = 0 : i64, scratch_operands = 0 : i64, tpu.core_type = #tpu.core_type<tc>, window_params = [{transform_indices = @transform_0, window_bounds = array<i64: 1, 8, 64>}, {pipeline_mode = #tpu.pipeline_mode<synchronous>, transform_indices = @transform_1, window_bounds = array<i64: 16, 8>}, {pipeline_mode = #tpu.pipeline_mode<synchronous>, transform_indices = @transform_2, window_bounds = array<i64: 16, 1>}, {pipeline_mode = #tpu.pipeline_mode<synchronous>, transform_indices = @transform_3, window_bounds = array<i64: 16, 9>}, {pipeline_mode = #tpu.pipeline_mode<synchronous>, transform_indices = @transform_4, window_bounds = array<i64: 16, 1>}, {pipeline_mode = #tpu.pipeline_mode<synchronous>, transform_indices = @transform_5, window_bounds = array<i64: 8, 16>}, {pipeline_mode = #tpu.pipeline_mode<synchronous>, transform_indices = @transform_6, window_bounds = array<i64: 8, 1>}, {pipeline_mode = #tpu.pipeline_mode<synchronous>, transform_indices = @transform_7, window_bounds = array<i64: 2, 64>}, {transform_indices = @transform_8, window_bounds = array<i64: 1, 8, 64>}]} {
    %c0 = arith.constant 0 : index
    %c0_0 = arith.constant 0 : index
    %c0_1 = arith.constant 0 : index
    %0 = vector.load %arg1[%c0, %c0_0, %c0_1] : memref<1x8x64xf32, #tpu.memory_space<vmem>>, vector<1x8x64xf32>
    %1 = vector.shape_cast %0 : vector<1x8x64xf32> to vector<8x64xf32>
    %c0_2 = arith.constant 0 : index
    %c0_3 = arith.constant 0 : index
    %2 = vector.load %arg2[%c0_2, %c0_3] : memref<16x8xf32, #tpu.memory_space<vmem>>, vector<16x8xf32>
    %cst = arith.constant dense<0.000000e+00> : vector<16x64xf32>
    %3 = tpu.matmul %2, %1, %cst {dimension_numbers = #tpu.dot_dimension_numbers<[1], [0], [0], [1], [0, 0, 1, 1], [], []>} : vector<16x8xf32>, vector<8x64xf32>, vector<16x64xf32> -> vector<16x64xf32>
    %c0_4 = arith.constant 0 : index
    %c0_5 = arith.constant 0 : index
    %4 = vector.load %arg3[%c0_4, %c0_5] : memref<16x1xf32, #tpu.memory_space<vmem>>, vector<16x1xf32>
    %5 = vector.broadcast %4 : vector<16x1xf32> to vector<16x64xf32>
    %6 = arith.addf %3, %5 : vector<16x64xf32>
    %cst_6 = arith.constant 0.000000e+00 : f32
    %cst_7 = arith.constant 6.000000e+00 : f32
    %7 = vector.broadcast %cst_6 : f32 to vector<16x64xf32>
    %8 = arith.maximumf %7, %6 : vector<16x64xf32>
    %9 = vector.broadcast %cst_7 : f32 to vector<16x64xf32>
    %10 = arith.minimumf %9, %8 : vector<16x64xf32>
    %cst_8 = arith.constant 0.000000e+00 : f32
    %11 = vector.broadcast %cst_8 : f32 to vector<16x9xf32>
    %12 = tpu.concatenate %11, %10, %11 in 1 : vector<16x9xf32>, vector<16x64xf32>, vector<16x9xf32> -> vector<16x82xf32>
    %c0_9 = arith.constant 0 : index
    %c0_10 = arith.constant 0 : index
    %13 = vector.load %arg4[%c0_9, %c0_10] : memref<16x9xf32, #tpu.memory_space<vmem>>, vector<16x9xf32>
    %c0_11 = arith.constant 0 : index
    %c0_12 = arith.constant 0 : index
    %14 = vector.load %arg8[%c0_11, %c0_12] : memref<2x64xf32, #tpu.memory_space<vmem>>, vector<1x64xf32>
    %c1 = arith.constant 1 : index
    %c0_13 = arith.constant 0 : index
    %15 = vector.load %arg8[%c1, %c0_13] : memref<2x64xf32, #tpu.memory_space<vmem>>, vector<1x64xf32>
    %cst_14 = arith.constant 0.000000e+00 : f32
    %16 = vector.broadcast %cst_14 : f32 to vector<16x64xf32>
    %17 = vector.extract_strided_slice %12 {offsets = [0, 0], sizes = [16, 64], strides = [1, 1]} : vector<16x82xf32> to vector<16x64xf32>
    %18 = vector.broadcast %14 : vector<1x64xf32> to vector<16x64xf32>
    %19 = arith.mulf %17, %18 : vector<16x64xf32>
    %20 = vector.extract_strided_slice %13 {offsets = [0, 0], sizes = [16, 1], strides = [1, 1]} : vector<16x9xf32> to vector<16x1xf32>
    %21 = vector.broadcast %20 : vector<16x1xf32> to vector<16x64xf32>
    %22 = arith.mulf %19, %21 : vector<16x64xf32>
    %23 = arith.addf %16, %22 : vector<16x64xf32>
    %24 = vector.extract_strided_slice %12 {offsets = [0, 1], sizes = [16, 64], strides = [1, 1]} : vector<16x82xf32> to vector<16x64xf32>
    %25 = vector.extract_strided_slice %13 {offsets = [0, 1], sizes = [16, 1], strides = [1, 1]} : vector<16x9xf32> to vector<16x1xf32>
    %26 = vector.broadcast %25 : vector<16x1xf32> to vector<16x64xf32>
    %27 = arith.mulf %24, %26 : vector<16x64xf32>
    %28 = arith.addf %23, %27 : vector<16x64xf32>
    %29 = vector.extract_strided_slice %12 {offsets = [0, 2], sizes = [16, 64], strides = [1, 1]} : vector<16x82xf32> to vector<16x64xf32>
    %30 = vector.broadcast %15 : vector<1x64xf32> to vector<16x64xf32>
    %31 = arith.mulf %29, %30 : vector<16x64xf32>
    %32 = vector.extract_strided_slice %13 {offsets = [0, 2], sizes = [16, 1], strides = [1, 1]} : vector<16x9xf32> to vector<16x1xf32>
    %33 = vector.broadcast %32 : vector<16x1xf32> to vector<16x64xf32>
    %34 = arith.mulf %31, %33 : vector<16x64xf32>
    %35 = arith.addf %28, %34 : vector<16x64xf32>
    %36 = vector.extract_strided_slice %12 {offsets = [0, 8], sizes = [16, 64], strides = [1, 1]} : vector<16x82xf32> to vector<16x64xf32>
    %37 = vector.broadcast %14 : vector<1x64xf32> to vector<16x64xf32>
    %38 = arith.mulf %36, %37 : vector<16x64xf32>
    %39 = vector.extract_strided_slice %13 {offsets = [0, 3], sizes = [16, 1], strides = [1, 1]} : vector<16x9xf32> to vector<16x1xf32>
    %40 = vector.broadcast %39 : vector<16x1xf32> to vector<16x64xf32>
    %41 = arith.mulf %38, %40 : vector<16x64xf32>
    %42 = arith.addf %35, %41 : vector<16x64xf32>
    %43 = vector.extract_strided_slice %12 {offsets = [0, 9], sizes = [16, 64], strides = [1, 1]} : vector<16x82xf32> to vector<16x64xf32>
    %44 = vector.extract_strided_slice %13 {offsets = [0, 4], sizes = [16, 1], strides = [1, 1]} : vector<16x9xf32> to vector<16x1xf32>
    %45 = vector.broadcast %44 : vector<16x1xf32> to vector<16x64xf32>
    %46 = arith.mulf %43, %45 : vector<16x64xf32>
    %47 = arith.addf %42, %46 : vector<16x64xf32>
    %48 = vector.extract_strided_slice %12 {offsets = [0, 10], sizes = [16, 64], strides = [1, 1]} : vector<16x82xf32> to vector<16x64xf32>
    %49 = vector.broadcast %15 : vector<1x64xf32> to vector<16x64xf32>
    %50 = arith.mulf %48, %49 : vector<16x64xf32>
    %51 = vector.extract_strided_slice %13 {offsets = [0, 5], sizes = [16, 1], strides = [1, 1]} : vector<16x9xf32> to vector<16x1xf32>
    %52 = vector.broadcast %51 : vector<16x1xf32> to vector<16x64xf32>
    %53 = arith.mulf %50, %52 : vector<16x64xf32>
    %54 = arith.addf %47, %53 : vector<16x64xf32>
    %55 = vector.extract_strided_slice %12 {offsets = [0, 16], sizes = [16, 64], strides = [1, 1]} : vector<16x82xf32> to vector<16x64xf32>
    %56 = vector.broadcast %14 : vector<1x64xf32> to vector<16x64xf32>
    %57 = arith.mulf %55, %56 : vector<16x64xf32>
    %58 = vector.extract_strided_slice %13 {offsets = [0, 6], sizes = [16, 1], strides = [1, 1]} : vector<16x9xf32> to vector<16x1xf32>
    %59 = vector.broadcast %58 : vector<16x1xf32> to vector<16x64xf32>
    %60 = arith.mulf %57, %59 : vector<16x64xf32>
    %61 = arith.addf %54, %60 : vector<16x64xf32>
    %62 = vector.extract_strided_slice %12 {offsets = [0, 17], sizes = [16, 64], strides = [1, 1]} : vector<16x82xf32> to vector<16x64xf32>
    %63 = vector.extract_strided_slice %13 {offsets = [0, 7], sizes = [16, 1], strides = [1, 1]} : vector<16x9xf32> to vector<16x1xf32>
    %64 = vector.broadcast %63 : vector<16x1xf32> to vector<16x64xf32>
    %65 = arith.mulf %62, %64 : vector<16x64xf32>
    %66 = arith.addf %61, %65 : vector<16x64xf32>
    %67 = vector.extract_strided_slice %12 {offsets = [0, 18], sizes = [16, 64], strides = [1, 1]} : vector<16x82xf32> to vector<16x64xf32>
    %68 = vector.broadcast %15 : vector<1x64xf32> to vector<16x64xf32>
    %69 = arith.mulf %67, %68 : vector<16x64xf32>
    %70 = vector.extract_strided_slice %13 {offsets = [0, 8], sizes = [16, 1], strides = [1, 1]} : vector<16x9xf32> to vector<16x1xf32>
    %71 = vector.broadcast %70 : vector<16x1xf32> to vector<16x64xf32>
    %72 = arith.mulf %69, %71 : vector<16x64xf32>
    %73 = arith.addf %66, %72 : vector<16x64xf32>
    %c0_15 = arith.constant 0 : index
    %c0_16 = arith.constant 0 : index
    %74 = vector.load %arg5[%c0_15, %c0_16] : memref<16x1xf32, #tpu.memory_space<vmem>>, vector<16x1xf32>
    %75 = vector.broadcast %74 : vector<16x1xf32> to vector<16x64xf32>
    %76 = arith.addf %73, %75 : vector<16x64xf32>
    %cst_17 = arith.constant 0.000000e+00 : f32
    %cst_18 = arith.constant 6.000000e+00 : f32
    %77 = vector.broadcast %cst_17 : f32 to vector<16x64xf32>
    %78 = arith.maximumf %77, %76 : vector<16x64xf32>
    %79 = vector.broadcast %cst_18 : f32 to vector<16x64xf32>
    %80 = arith.minimumf %79, %78 : vector<16x64xf32>
    %c0_19 = arith.constant 0 : index
    %c0_20 = arith.constant 0 : index
    %81 = vector.load %arg6[%c0_19, %c0_20] : memref<8x16xf32, #tpu.memory_space<vmem>>, vector<8x16xf32>
    %cst_21 = arith.constant dense<0.000000e+00> : vector<8x64xf32>
    %82 = tpu.matmul %81, %80, %cst_21 {dimension_numbers = #tpu.dot_dimension_numbers<[1], [0], [0], [1], [0, 0, 1, 1], [], []>} : vector<8x16xf32>, vector<16x64xf32>, vector<8x64xf32> -> vector<8x64xf32>
    %c0_22 = arith.constant 0 : index
    %c0_23 = arith.constant 0 : index
    %83 = vector.load %arg7[%c0_22, %c0_23] : memref<8x1xf32, #tpu.memory_space<vmem>>, vector<8x1xf32>
    %84 = vector.broadcast %83 : vector<8x1xf32> to vector<8x64xf32>
    %85 = arith.addf %82, %84 : vector<8x64xf32>
    %86 = arith.addf %85, %1 : vector<8x64xf32>
    %c0_24 = arith.constant 0 : index
    %c0_25 = arith.constant 0 : index
    %c0_26 = arith.constant 0 : index
    %87 = vector.load %arg9[%c0_24, %c0_25, %c0_26] : memref<1x8x64xf32, #tpu.memory_space<vmem>>, vector<1x8x64xf32>
    %88 = vector.shape_cast %87 : vector<1x8x64xf32> to vector<8x64xf32>
    %89 = vector.shape_cast %86 : vector<8x64xf32> to vector<1x8x64xf32>
    tpu.vector_store %arg9[%c0_24, %c0_25, %c0_26], %89 {strides = array<i32>} : memref<1x8x64xf32, #tpu.memory_space<vmem>>, vector<1x8x64xf32>,
    return
  }
  func.func @transform_0(%arg0: i32) -> (i32, i32, i32) {
    %c0_i32 = arith.constant 0 : i32
    %c0_i32_0 = arith.constant 0 : i32
    %c0_i32_1 = arith.constant 0 : i32
    return %arg0, %c0_i32, %c0_i32_0 : i32, i32, i32
  }
  func.func @transform_1(%arg0: i32) -> (i32, i32) {
    %c0_i32 = arith.constant 0 : i32
    %c0_i32_0 = arith.constant 0 : i32
    %c0_i32_1 = arith.constant 0 : i32
    return %c0_i32, %c0_i32_0 : i32, i32
  }
  func.func @transform_2(%arg0: i32) -> (i32, i32) {
    %c0_i32 = arith.constant 0 : i32
    %c0_i32_0 = arith.constant 0 : i32
    %c0_i32_1 = arith.constant 0 : i32
    return %c0_i32, %c0_i32_0 : i32, i32
  }
  func.func @transform_3(%arg0: i32) -> (i32, i32) {
    %c0_i32 = arith.constant 0 : i32
    %c0_i32_0 = arith.constant 0 : i32
    %c0_i32_1 = arith.constant 0 : i32
    return %c0_i32, %c0_i32_0 : i32, i32
  }
  func.func @transform_4(%arg0: i32) -> (i32, i32) {
    %c0_i32 = arith.constant 0 : i32
    %c0_i32_0 = arith.constant 0 : i32
    %c0_i32_1 = arith.constant 0 : i32
    return %c0_i32, %c0_i32_0 : i32, i32
  }
  func.func @transform_5(%arg0: i32) -> (i32, i32) {
    %c0_i32 = arith.constant 0 : i32
    %c0_i32_0 = arith.constant 0 : i32
    %c0_i32_1 = arith.constant 0 : i32
    return %c0_i32, %c0_i32_0 : i32, i32
  }
  func.func @transform_6(%arg0: i32) -> (i32, i32) {
    %c0_i32 = arith.constant 0 : i32
    %c0_i32_0 = arith.constant 0 : i32
    %c0_i32_1 = arith.constant 0 : i32
    return %c0_i32, %c0_i32_0 : i32, i32
  }
  func.func @transform_7(%arg0: i32) -> (i32, i32) {
    %c0_i32 = arith.constant 0 : i32
    %c0_i32_0 = arith.constant 0 : i32
    %c0_i32_1 = arith.constant 0 : i32
    return %c0_i32, %c0_i32_0 : i32, i32
  }
  func.func @transform_8(%arg0: i32) -> (i32, i32, i32) {
    %c0_i32 = arith.constant 0 : i32
    %c0_i32_0 = arith.constant 0 : i32
    %c0_i32_1 = arith.constant 0 : i32
    return %arg0, %c0_i32, %c0_i32_0 : i32, i32, i32
  }
}

module attributes {stable_mosaic.version = 11 : i64} {
  func.func @_mv2_s2_kernel(%arg0: i32, %arg1: memref<1x8x64xf32, #tpu.memory_space<vmem>>, %arg2: memref<16x8xf32, #tpu.memory_space<vmem>>, %arg3: memref<16x1xf32, #tpu.memory_space<vmem>>, %arg4: memref<16x9xf32, #tpu.memory_space<vmem>>, %arg5: memref<16x1xf32, #tpu.memory_space<vmem>>, %arg6: memref<16x16xf32, #tpu.memory_space<vmem>>, %arg7: memref<16x1xf32, #tpu.memory_space<vmem>>, %arg8: memref<2x16xf32, #tpu.memory_space<vmem>>, %arg9: memref<1x16x16xf32, #tpu.memory_space<vmem>>) attributes {dimension_semantics = [#tpu.dimension_semantics<parallel>], iteration_bounds = array<i64: 2>, scalar_prefetch = 0 : i64, scratch_operands = 0 : i64, tpu.core_type = #tpu.core_type<tc>, window_params = [{transform_indices = @transform_0, window_bounds = array<i64: 1, 8, 64>}, {pipeline_mode = #tpu.pipeline_mode<synchronous>, transform_indices = @transform_1, window_bounds = array<i64: 16, 8>}, {pipeline_mode = #tpu.pipeline_mode<synchronous>, transform_indices = @transform_2, window_bounds = array<i64: 16, 1>}, {pipeline_mode = #tpu.pipeline_mode<synchronous>, transform_indices = @transform_3, window_bounds = array<i64: 16, 9>}, {pipeline_mode = #tpu.pipeline_mode<synchronous>, transform_indices = @transform_4, window_bounds = array<i64: 16, 1>}, {pipeline_mode = #tpu.pipeline_mode<synchronous>, transform_indices = @transform_5, window_bounds = array<i64: 16, 16>}, {pipeline_mode = #tpu.pipeline_mode<synchronous>, transform_indices = @transform_6, window_bounds = array<i64: 16, 1>}, {pipeline_mode = #tpu.pipeline_mode<synchronous>, transform_indices = @transform_7, window_bounds = array<i64: 2, 16>}, {transform_indices = @transform_8, window_bounds = array<i64: 1, 16, 16>}]} {
    %c0 = arith.constant 0 : index
    %c0_0 = arith.constant 0 : index
    %c0_1 = arith.constant 0 : index
    %0 = vector.load %arg1[%c0, %c0_0, %c0_1] : memref<1x8x64xf32, #tpu.memory_space<vmem>>, vector<1x8x64xf32>
    %1 = vector.shape_cast %0 : vector<1x8x64xf32> to vector<8x64xf32>
    %c0_2 = arith.constant 0 : index
    %c0_3 = arith.constant 0 : index
    %2 = vector.load %arg2[%c0_2, %c0_3] : memref<16x8xf32, #tpu.memory_space<vmem>>, vector<16x8xf32>
    %cst = arith.constant dense<0.000000e+00> : vector<16x64xf32>
    %3 = tpu.matmul %2, %1, %cst {dimension_numbers = #tpu.dot_dimension_numbers<[1], [0], [0], [1], [0, 0, 1, 1], [], []>} : vector<16x8xf32>, vector<8x64xf32>, vector<16x64xf32> -> vector<16x64xf32>
    %c0_4 = arith.constant 0 : index
    %c0_5 = arith.constant 0 : index
    %4 = vector.load %arg3[%c0_4, %c0_5] : memref<16x1xf32, #tpu.memory_space<vmem>>, vector<16x1xf32>
    %5 = vector.broadcast %4 : vector<16x1xf32> to vector<16x64xf32>
    %6 = arith.addf %3, %5 : vector<16x64xf32>
    %cst_6 = arith.constant 0.000000e+00 : f32
    %cst_7 = arith.constant 6.000000e+00 : f32
    %7 = vector.broadcast %cst_6 : f32 to vector<16x64xf32>
    %8 = arith.maximumf %7, %6 : vector<16x64xf32>
    %9 = vector.broadcast %cst_7 : f32 to vector<16x64xf32>
    %10 = arith.minimumf %9, %8 : vector<16x64xf32>
    %c0_8 = arith.constant 0 : index
    %c0_9 = arith.constant 0 : index
    %11 = vector.load %arg4[%c0_8, %c0_9] : memref<16x9xf32, #tpu.memory_space<vmem>>, vector<16x9xf32>
    %c0_10 = arith.constant 0 : index
    %c0_11 = arith.constant 0 : index
    %12 = vector.load %arg8[%c0_10, %c0_11] : memref<2x16xf32, #tpu.memory_space<vmem>>, vector<1x16xf32>
    %c1 = arith.constant 1 : index
    %c0_12 = arith.constant 0 : index
    %13 = vector.load %arg8[%c1, %c0_12] : memref<2x16xf32, #tpu.memory_space<vmem>>, vector<1x16xf32>
    %cst_13 = arith.constant 0.000000e+00 : f32
    %14 = vector.broadcast %cst_13 : f32 to vector<16x16xf32>
    %15 = vector.extract_strided_slice %10 {offsets = [0, 43], sizes = [16, 16], strides = [1, 1]} : vector<16x64xf32> to vector<16x16xf32>
    %16 = vector.broadcast %13 : vector<1x16xf32> to vector<16x16xf32>
    %17 = arith.mulf %15, %16 : vector<16x16xf32>
    %18 = vector.broadcast %12 : vector<1x16xf32> to vector<16x16xf32>
    %19 = arith.mulf %17, %18 : vector<16x16xf32>
    %20 = vector.extract_strided_slice %11 {offsets = [0, 0], sizes = [16, 1], strides = [1, 1]} : vector<16x9xf32> to vector<16x1xf32>
    %21 = vector.broadcast %20 : vector<16x1xf32> to vector<16x16xf32>
    %22 = arith.mulf %19, %21 : vector<16x16xf32>
    %23 = arith.addf %14, %22 : vector<16x16xf32>
    %24 = vector.extract_strided_slice %10 {offsets = [0, 28], sizes = [16, 16], strides = [1, 1]} : vector<16x64xf32> to vector<16x16xf32>
    %25 = vector.broadcast %13 : vector<1x16xf32> to vector<16x16xf32>
    %26 = arith.mulf %24, %25 : vector<16x16xf32>
    %27 = vector.extract_strided_slice %11 {offsets = [0, 1], sizes = [16, 1], strides = [1, 1]} : vector<16x9xf32> to vector<16x1xf32>
    %28 = vector.broadcast %27 : vector<16x1xf32> to vector<16x16xf32>
    %29 = arith.mulf %26, %28 : vector<16x16xf32>
    %30 = arith.addf %23, %29 : vector<16x16xf32>
    %31 = vector.extract_strided_slice %10 {offsets = [0, 44], sizes = [16, 16], strides = [1, 1]} : vector<16x64xf32> to vector<16x16xf32>
    %32 = vector.broadcast %13 : vector<1x16xf32> to vector<16x16xf32>
    %33 = arith.mulf %31, %32 : vector<16x16xf32>
    %34 = vector.extract_strided_slice %11 {offsets = [0, 2], sizes = [16, 1], strides = [1, 1]} : vector<16x9xf32> to vector<16x1xf32>
    %35 = vector.broadcast %34 : vector<16x1xf32> to vector<16x16xf32>
    %36 = arith.mulf %33, %35 : vector<16x16xf32>
    %37 = arith.addf %30, %36 : vector<16x16xf32>
    %38 = vector.extract_strided_slice %10 {offsets = [0, 15], sizes = [16, 16], strides = [1, 1]} : vector<16x64xf32> to vector<16x16xf32>
    %39 = vector.broadcast %12 : vector<1x16xf32> to vector<16x16xf32>
    %40 = arith.mulf %38, %39 : vector<16x16xf32>
    %41 = vector.extract_strided_slice %11 {offsets = [0, 3], sizes = [16, 1], strides = [1, 1]} : vector<16x9xf32> to vector<16x1xf32>
    %42 = vector.broadcast %41 : vector<16x1xf32> to vector<16x16xf32>
    %43 = arith.mulf %40, %42 : vector<16x16xf32>
    %44 = arith.addf %37, %43 : vector<16x16xf32>
    %45 = vector.extract_strided_slice %10 {offsets = [0, 0], sizes = [16, 16], strides = [1, 1]} : vector<16x64xf32> to vector<16x16xf32>
    %46 = vector.extract_strided_slice %11 {offsets = [0, 4], sizes = [16, 1], strides = [1, 1]} : vector<16x9xf32> to vector<16x1xf32>
    %47 = vector.broadcast %46 : vector<16x1xf32> to vector<16x16xf32>
    %48 = arith.mulf %45, %47 : vector<16x16xf32>
    %49 = arith.addf %44, %48 : vector<16x16xf32>
    %50 = vector.extract_strided_slice %10 {offsets = [0, 16], sizes = [16, 16], strides = [1, 1]} : vector<16x64xf32> to vector<16x16xf32>
    %51 = vector.extract_strided_slice %11 {offsets = [0, 5], sizes = [16, 1], strides = [1, 1]} : vector<16x9xf32> to vector<16x1xf32>
    %52 = vector.broadcast %51 : vector<16x1xf32> to vector<16x16xf32>
    %53 = arith.mulf %50, %52 : vector<16x16xf32>
    %54 = arith.addf %49, %53 : vector<16x16xf32>
    %55 = vector.extract_strided_slice %10 {offsets = [0, 47], sizes = [16, 16], strides = [1, 1]} : vector<16x64xf32> to vector<16x16xf32>
    %56 = vector.broadcast %12 : vector<1x16xf32> to vector<16x16xf32>
    %57 = arith.mulf %55, %56 : vector<16x16xf32>
    %58 = vector.extract_strided_slice %11 {offsets = [0, 6], sizes = [16, 1], strides = [1, 1]} : vector<16x9xf32> to vector<16x1xf32>
    %59 = vector.broadcast %58 : vector<16x1xf32> to vector<16x16xf32>
    %60 = arith.mulf %57, %59 : vector<16x16xf32>
    %61 = arith.addf %54, %60 : vector<16x16xf32>
    %62 = vector.extract_strided_slice %10 {offsets = [0, 32], sizes = [16, 16], strides = [1, 1]} : vector<16x64xf32> to vector<16x16xf32>
    %63 = vector.extract_strided_slice %11 {offsets = [0, 7], sizes = [16, 1], strides = [1, 1]} : vector<16x9xf32> to vector<16x1xf32>
    %64 = vector.broadcast %63 : vector<16x1xf32> to vector<16x16xf32>
    %65 = arith.mulf %62, %64 : vector<16x16xf32>
    %66 = arith.addf %61, %65 : vector<16x16xf32>
    %67 = vector.extract_strided_slice %10 {offsets = [0, 48], sizes = [16, 16], strides = [1, 1]} : vector<16x64xf32> to vector<16x16xf32>
    %68 = vector.extract_strided_slice %11 {offsets = [0, 8], sizes = [16, 1], strides = [1, 1]} : vector<16x9xf32> to vector<16x1xf32>
    %69 = vector.broadcast %68 : vector<16x1xf32> to vector<16x16xf32>
    %70 = arith.mulf %67, %69 : vector<16x16xf32>
    %71 = arith.addf %66, %70 : vector<16x16xf32>
    %c0_14 = arith.constant 0 : index
    %c0_15 = arith.constant 0 : index
    %72 = vector.load %arg5[%c0_14, %c0_15] : memref<16x1xf32, #tpu.memory_space<vmem>>, vector<16x1xf32>
    %73 = vector.broadcast %72 : vector<16x1xf32> to vector<16x16xf32>
    %74 = arith.addf %71, %73 : vector<16x16xf32>
    %cst_16 = arith.constant 0.000000e+00 : f32
    %cst_17 = arith.constant 6.000000e+00 : f32
    %75 = vector.broadcast %cst_16 : f32 to vector<16x16xf32>
    %76 = arith.maximumf %75, %74 : vector<16x16xf32>
    %77 = vector.broadcast %cst_17 : f32 to vector<16x16xf32>
    %78 = arith.minimumf %77, %76 : vector<16x16xf32>
    %c0_18 = arith.constant 0 : index
    %c0_19 = arith.constant 0 : index
    %79 = vector.load %arg6[%c0_18, %c0_19] : memref<16x16xf32, #tpu.memory_space<vmem>>, vector<16x16xf32>
    %cst_20 = arith.constant dense<0.000000e+00> : vector<16x16xf32>
    %80 = tpu.matmul %79, %78, %cst_20 {dimension_numbers = #tpu.dot_dimension_numbers<[1], [0], [0], [1], [0, 0, 1, 1], [], []>} : vector<16x16xf32>, vector<16x16xf32>, vector<16x16xf32> -> vector<16x16xf32>
    %c0_21 = arith.constant 0 : index
    %c0_22 = arith.constant 0 : index
    %81 = vector.load %arg7[%c0_21, %c0_22] : memref<16x1xf32, #tpu.memory_space<vmem>>, vector<16x1xf32>
    %82 = vector.broadcast %81 : vector<16x1xf32> to vector<16x16xf32>
    %83 = arith.addf %80, %82 : vector<16x16xf32>
    %c0_23 = arith.constant 0 : index
    %c0_24 = arith.constant 0 : index
    %c0_25 = arith.constant 0 : index
    %84 = vector.load %arg9[%c0_23, %c0_24, %c0_25] : memref<1x16x16xf32, #tpu.memory_space<vmem>>, vector<1x16x16xf32>
    %85 = vector.shape_cast %84 : vector<1x16x16xf32> to vector<16x16xf32>
    %86 = vector.shape_cast %83 : vector<16x16xf32> to vector<1x16x16xf32>
    tpu.vector_store %arg9[%c0_23, %c0_24, %c0_25], %86 {strides = array<i32>} : memref<1x16x16xf32, #tpu.memory_space<vmem>>, vector<1x16x16xf32>,
    return
  }
  func.func @transform_0(%arg0: i32) -> (i32, i32, i32) {
    %c0_i32 = arith.constant 0 : i32
    %c0_i32_0 = arith.constant 0 : i32
    %c0_i32_1 = arith.constant 0 : i32
    return %arg0, %c0_i32, %c0_i32_0 : i32, i32, i32
  }
  func.func @transform_1(%arg0: i32) -> (i32, i32) {
    %c0_i32 = arith.constant 0 : i32
    %c0_i32_0 = arith.constant 0 : i32
    %c0_i32_1 = arith.constant 0 : i32
    return %c0_i32, %c0_i32_0 : i32, i32
  }
  func.func @transform_2(%arg0: i32) -> (i32, i32) {
    %c0_i32 = arith.constant 0 : i32
    %c0_i32_0 = arith.constant 0 : i32
    %c0_i32_1 = arith.constant 0 : i32
    return %c0_i32, %c0_i32_0 : i32, i32
  }
  func.func @transform_3(%arg0: i32) -> (i32, i32) {
    %c0_i32 = arith.constant 0 : i32
    %c0_i32_0 = arith.constant 0 : i32
    %c0_i32_1 = arith.constant 0 : i32
    return %c0_i32, %c0_i32_0 : i32, i32
  }
  func.func @transform_4(%arg0: i32) -> (i32, i32) {
    %c0_i32 = arith.constant 0 : i32
    %c0_i32_0 = arith.constant 0 : i32
    %c0_i32_1 = arith.constant 0 : i32
    return %c0_i32, %c0_i32_0 : i32, i32
  }
  func.func @transform_5(%arg0: i32) -> (i32, i32) {
    %c0_i32 = arith.constant 0 : i32
    %c0_i32_0 = arith.constant 0 : i32
    %c0_i32_1 = arith.constant 0 : i32
    return %c0_i32, %c0_i32_0 : i32, i32
  }
  func.func @transform_6(%arg0: i32) -> (i32, i32) {
    %c0_i32 = arith.constant 0 : i32
    %c0_i32_0 = arith.constant 0 : i32
    %c0_i32_1 = arith.constant 0 : i32
    return %c0_i32, %c0_i32_0 : i32, i32
  }
  func.func @transform_7(%arg0: i32) -> (i32, i32) {
    %c0_i32 = arith.constant 0 : i32
    %c0_i32_0 = arith.constant 0 : i32
    %c0_i32_1 = arith.constant 0 : i32
    return %c0_i32, %c0_i32_0 : i32, i32
  }
  func.func @transform_8(%arg0: i32) -> (i32, i32, i32) {
    %c0_i32 = arith.constant 0 : i32
    %c0_i32_0 = arith.constant 0 : i32
    %c0_i32_1 = arith.constant 0 : i32
    return %arg0, %c0_i32, %c0_i32_0 : i32, i32, i32
  }
}

module attributes {stable_mosaic.version = 11 : i64} {
  func.func @_mv2_s1_kernel(%arg0: i32, %arg1: memref<1x16x16xf32, #tpu.memory_space<vmem>>, %arg2: memref<32x16xf32, #tpu.memory_space<vmem>>, %arg3: memref<32x1xf32, #tpu.memory_space<vmem>>, %arg4: memref<32x9xf32, #tpu.memory_space<vmem>>, %arg5: memref<32x1xf32, #tpu.memory_space<vmem>>, %arg6: memref<16x32xf32, #tpu.memory_space<vmem>>, %arg7: memref<16x1xf32, #tpu.memory_space<vmem>>, %arg8: memref<2x16xf32, #tpu.memory_space<vmem>>, %arg9: memref<1x16x16xf32, #tpu.memory_space<vmem>>) attributes {dimension_semantics = [#tpu.dimension_semantics<parallel>], iteration_bounds = array<i64: 2>, scalar_prefetch = 0 : i64, scratch_operands = 0 : i64, tpu.core_type = #tpu.core_type<tc>, window_params = [{transform_indices = @transform_0, window_bounds = array<i64: 1, 16, 16>}, {pipeline_mode = #tpu.pipeline_mode<synchronous>, transform_indices = @transform_1, window_bounds = array<i64: 32, 16>}, {pipeline_mode = #tpu.pipeline_mode<synchronous>, transform_indices = @transform_2, window_bounds = array<i64: 32, 1>}, {pipeline_mode = #tpu.pipeline_mode<synchronous>, transform_indices = @transform_3, window_bounds = array<i64: 32, 9>}, {pipeline_mode = #tpu.pipeline_mode<synchronous>, transform_indices = @transform_4, window_bounds = array<i64: 32, 1>}, {pipeline_mode = #tpu.pipeline_mode<synchronous>, transform_indices = @transform_5, window_bounds = array<i64: 16, 32>}, {pipeline_mode = #tpu.pipeline_mode<synchronous>, transform_indices = @transform_6, window_bounds = array<i64: 16, 1>}, {pipeline_mode = #tpu.pipeline_mode<synchronous>, transform_indices = @transform_7, window_bounds = array<i64: 2, 16>}, {transform_indices = @transform_8, window_bounds = array<i64: 1, 16, 16>}]} {
    %c0 = arith.constant 0 : index
    %c0_0 = arith.constant 0 : index
    %c0_1 = arith.constant 0 : index
    %0 = vector.load %arg1[%c0, %c0_0, %c0_1] : memref<1x16x16xf32, #tpu.memory_space<vmem>>, vector<1x16x16xf32>
    %1 = vector.shape_cast %0 : vector<1x16x16xf32> to vector<16x16xf32>
    %c0_2 = arith.constant 0 : index
    %c0_3 = arith.constant 0 : index
    %2 = vector.load %arg2[%c0_2, %c0_3] : memref<32x16xf32, #tpu.memory_space<vmem>>, vector<32x16xf32>
    %cst = arith.constant dense<0.000000e+00> : vector<32x16xf32>
    %3 = tpu.matmul %2, %1, %cst {dimension_numbers = #tpu.dot_dimension_numbers<[1], [0], [0], [1], [0, 0, 1, 1], [], []>} : vector<32x16xf32>, vector<16x16xf32>, vector<32x16xf32> -> vector<32x16xf32>
    %c0_4 = arith.constant 0 : index
    %c0_5 = arith.constant 0 : index
    %4 = vector.load %arg3[%c0_4, %c0_5] : memref<32x1xf32, #tpu.memory_space<vmem>>, vector<32x1xf32>
    %5 = vector.broadcast %4 : vector<32x1xf32> to vector<32x16xf32>
    %6 = arith.addf %3, %5 : vector<32x16xf32>
    %cst_6 = arith.constant 0.000000e+00 : f32
    %cst_7 = arith.constant 6.000000e+00 : f32
    %7 = vector.broadcast %cst_6 : f32 to vector<32x16xf32>
    %8 = arith.maximumf %7, %6 : vector<32x16xf32>
    %9 = vector.broadcast %cst_7 : f32 to vector<32x16xf32>
    %10 = arith.minimumf %9, %8 : vector<32x16xf32>
    %cst_8 = arith.constant 0.000000e+00 : f32
    %11 = vector.broadcast %cst_8 : f32 to vector<32x5xf32>
    %12 = tpu.concatenate %11, %10, %11 in 1 : vector<32x5xf32>, vector<32x16xf32>, vector<32x5xf32> -> vector<32x26xf32>
    %c0_9 = arith.constant 0 : index
    %c0_10 = arith.constant 0 : index
    %13 = vector.load %arg4[%c0_9, %c0_10] : memref<32x9xf32, #tpu.memory_space<vmem>>, vector<32x9xf32>
    %c0_11 = arith.constant 0 : index
    %c0_12 = arith.constant 0 : index
    %14 = vector.load %arg8[%c0_11, %c0_12] : memref<2x16xf32, #tpu.memory_space<vmem>>, vector<1x16xf32>
    %c1 = arith.constant 1 : index
    %c0_13 = arith.constant 0 : index
    %15 = vector.load %arg8[%c1, %c0_13] : memref<2x16xf32, #tpu.memory_space<vmem>>, vector<1x16xf32>
    %cst_14 = arith.constant 0.000000e+00 : f32
    %16 = vector.broadcast %cst_14 : f32 to vector<32x16xf32>
    %17 = vector.extract_strided_slice %12 {offsets = [0, 0], sizes = [32, 16], strides = [1, 1]} : vector<32x26xf32> to vector<32x16xf32>
    %18 = vector.broadcast %14 : vector<1x16xf32> to vector<32x16xf32>
    %19 = arith.mulf %17, %18 : vector<32x16xf32>
    %20 = vector.extract_strided_slice %13 {offsets = [0, 0], sizes = [32, 1], strides = [1, 1]} : vector<32x9xf32> to vector<32x1xf32>
    %21 = vector.broadcast %20 : vector<32x1xf32> to vector<32x16xf32>
    %22 = arith.mulf %19, %21 : vector<32x16xf32>
    %23 = arith.addf %16, %22 : vector<32x16xf32>
    %24 = vector.extract_strided_slice %12 {offsets = [0, 1], sizes = [32, 16], strides = [1, 1]} : vector<32x26xf32> to vector<32x16xf32>
    %25 = vector.extract_strided_slice %13 {offsets = [0, 1], sizes = [32, 1], strides = [1, 1]} : vector<32x9xf32> to vector<32x1xf32>
    %26 = vector.broadcast %25 : vector<32x1xf32> to vector<32x16xf32>
    %27 = arith.mulf %24, %26 : vector<32x16xf32>
    %28 = arith.addf %23, %27 : vector<32x16xf32>
    %29 = vector.extract_strided_slice %12 {offsets = [0, 2], sizes = [32, 16], strides = [1, 1]} : vector<32x26xf32> to vector<32x16xf32>
    %30 = vector.broadcast %15 : vector<1x16xf32> to vector<32x16xf32>
    %31 = arith.mulf %29, %30 : vector<32x16xf32>
    %32 = vector.extract_strided_slice %13 {offsets = [0, 2], sizes = [32, 1], strides = [1, 1]} : vector<32x9xf32> to vector<32x1xf32>
    %33 = vector.broadcast %32 : vector<32x1xf32> to vector<32x16xf32>
    %34 = arith.mulf %31, %33 : vector<32x16xf32>
    %35 = arith.addf %28, %34 : vector<32x16xf32>
    %36 = vector.extract_strided_slice %12 {offsets = [0, 4], sizes = [32, 16], strides = [1, 1]} : vector<32x26xf32> to vector<32x16xf32>
    %37 = vector.broadcast %14 : vector<1x16xf32> to vector<32x16xf32>
    %38 = arith.mulf %36, %37 : vector<32x16xf32>
    %39 = vector.extract_strided_slice %13 {offsets = [0, 3], sizes = [32, 1], strides = [1, 1]} : vector<32x9xf32> to vector<32x1xf32>
    %40 = vector.broadcast %39 : vector<32x1xf32> to vector<32x16xf32>
    %41 = arith.mulf %38, %40 : vector<32x16xf32>
    %42 = arith.addf %35, %41 : vector<32x16xf32>
    %43 = vector.extract_strided_slice %12 {offsets = [0, 5], sizes = [32, 16], strides = [1, 1]} : vector<32x26xf32> to vector<32x16xf32>
    %44 = vector.extract_strided_slice %13 {offsets = [0, 4], sizes = [32, 1], strides = [1, 1]} : vector<32x9xf32> to vector<32x1xf32>
    %45 = vector.broadcast %44 : vector<32x1xf32> to vector<32x16xf32>
    %46 = arith.mulf %43, %45 : vector<32x16xf32>
    %47 = arith.addf %42, %46 : vector<32x16xf32>
    %48 = vector.extract_strided_slice %12 {offsets = [0, 6], sizes = [32, 16], strides = [1, 1]} : vector<32x26xf32> to vector<32x16xf32>
    %49 = vector.broadcast %15 : vector<1x16xf32> to vector<32x16xf32>
    %50 = arith.mulf %48, %49 : vector<32x16xf32>
    %51 = vector.extract_strided_slice %13 {offsets = [0, 5], sizes = [32, 1], strides = [1, 1]} : vector<32x9xf32> to vector<32x1xf32>
    %52 = vector.broadcast %51 : vector<32x1xf32> to vector<32x16xf32>
    %53 = arith.mulf %50, %52 : vector<32x16xf32>
    %54 = arith.addf %47, %53 : vector<32x16xf32>
    %55 = vector.extract_strided_slice %12 {offsets = [0, 8], sizes = [32, 16], strides = [1, 1]} : vector<32x26xf32> to vector<32x16xf32>
    %56 = vector.broadcast %14 : vector<1x16xf32> to vector<32x16xf32>
    %57 = arith.mulf %55, %56 : vector<32x16xf32>
    %58 = vector.extract_strided_slice %13 {offsets = [0, 6], sizes = [32, 1], strides = [1, 1]} : vector<32x9xf32> to vector<32x1xf32>
    %59 = vector.broadcast %58 : vector<32x1xf32> to vector<32x16xf32>
    %60 = arith.mulf %57, %59 : vector<32x16xf32>
    %61 = arith.addf %54, %60 : vector<32x16xf32>
    %62 = vector.extract_strided_slice %12 {offsets = [0, 9], sizes = [32, 16], strides = [1, 1]} : vector<32x26xf32> to vector<32x16xf32>
    %63 = vector.extract_strided_slice %13 {offsets = [0, 7], sizes = [32, 1], strides = [1, 1]} : vector<32x9xf32> to vector<32x1xf32>
    %64 = vector.broadcast %63 : vector<32x1xf32> to vector<32x16xf32>
    %65 = arith.mulf %62, %64 : vector<32x16xf32>
    %66 = arith.addf %61, %65 : vector<32x16xf32>
    %67 = vector.extract_strided_slice %12 {offsets = [0, 10], sizes = [32, 16], strides = [1, 1]} : vector<32x26xf32> to vector<32x16xf32>
    %68 = vector.broadcast %15 : vector<1x16xf32> to vector<32x16xf32>
    %69 = arith.mulf %67, %68 : vector<32x16xf32>
    %70 = vector.extract_strided_slice %13 {offsets = [0, 8], sizes = [32, 1], strides = [1, 1]} : vector<32x9xf32> to vector<32x1xf32>
    %71 = vector.broadcast %70 : vector<32x1xf32> to vector<32x16xf32>
    %72 = arith.mulf %69, %71 : vector<32x16xf32>
    %73 = arith.addf %66, %72 : vector<32x16xf32>
    %c0_15 = arith.constant 0 : index
    %c0_16 = arith.constant 0 : index
    %74 = vector.load %arg5[%c0_15, %c0_16] : memref<32x1xf32, #tpu.memory_space<vmem>>, vector<32x1xf32>
    %75 = vector.broadcast %74 : vector<32x1xf32> to vector<32x16xf32>
    %76 = arith.addf %73, %75 : vector<32x16xf32>
    %cst_17 = arith.constant 0.000000e+00 : f32
    %cst_18 = arith.constant 6.000000e+00 : f32
    %77 = vector.broadcast %cst_17 : f32 to vector<32x16xf32>
    %78 = arith.maximumf %77, %76 : vector<32x16xf32>
    %79 = vector.broadcast %cst_18 : f32 to vector<32x16xf32>
    %80 = arith.minimumf %79, %78 : vector<32x16xf32>
    %c0_19 = arith.constant 0 : index
    %c0_20 = arith.constant 0 : index
    %81 = vector.load %arg6[%c0_19, %c0_20] : memref<16x32xf32, #tpu.memory_space<vmem>>, vector<16x32xf32>
    %cst_21 = arith.constant dense<0.000000e+00> : vector<16x16xf32>
    %82 = tpu.matmul %81, %80, %cst_21 {dimension_numbers = #tpu.dot_dimension_numbers<[1], [0], [0], [1], [0, 0, 1, 1], [], []>} : vector<16x32xf32>, vector<32x16xf32>, vector<16x16xf32> -> vector<16x16xf32>
    %c0_22 = arith.constant 0 : index
    %c0_23 = arith.constant 0 : index
    %83 = vector.load %arg7[%c0_22, %c0_23] : memref<16x1xf32, #tpu.memory_space<vmem>>, vector<16x1xf32>
    %84 = vector.broadcast %83 : vector<16x1xf32> to vector<16x16xf32>
    %85 = arith.addf %82, %84 : vector<16x16xf32>
    %86 = arith.addf %85, %1 : vector<16x16xf32>
    %c0_24 = arith.constant 0 : index
    %c0_25 = arith.constant 0 : index
    %c0_26 = arith.constant 0 : index
    %87 = vector.load %arg9[%c0_24, %c0_25, %c0_26] : memref<1x16x16xf32, #tpu.memory_space<vmem>>, vector<1x16x16xf32>
    %88 = vector.shape_cast %87 : vector<1x16x16xf32> to vector<16x16xf32>
    %89 = vector.shape_cast %86 : vector<16x16xf32> to vector<1x16x16xf32>
    tpu.vector_store %arg9[%c0_24, %c0_25, %c0_26], %89 {strides = array<i32>} : memref<1x16x16xf32, #tpu.memory_space<vmem>>, vector<1x16x16xf32>,
    return
  }
  func.func @transform_0(%arg0: i32) -> (i32, i32, i32) {
    %c0_i32 = arith.constant 0 : i32
    %c0_i32_0 = arith.constant 0 : i32
    %c0_i32_1 = arith.constant 0 : i32
    return %arg0, %c0_i32, %c0_i32_0 : i32, i32, i32
  }
  func.func @transform_1(%arg0: i32) -> (i32, i32) {
    %c0_i32 = arith.constant 0 : i32
    %c0_i32_0 = arith.constant 0 : i32
    %c0_i32_1 = arith.constant 0 : i32
    return %c0_i32, %c0_i32_0 : i32, i32
  }
  func.func @transform_2(%arg0: i32) -> (i32, i32) {
    %c0_i32 = arith.constant 0 : i32
    %c0_i32_0 = arith.constant 0 : i32
    %c0_i32_1 = arith.constant 0 : i32
    return %c0_i32, %c0_i32_0 : i32, i32
  }
  func.func @transform_3(%arg0: i32) -> (i32, i32) {
    %c0_i32 = arith.constant 0 : i32
    %c0_i32_0 = arith.constant 0 : i32
    %c0_i32_1 = arith.constant 0 : i32
    return %c0_i32, %c0_i32_0 : i32, i32
  }
  func.func @transform_4(%arg0: i32) -> (i32, i32) {
    %c0_i32 = arith.constant 0 : i32
    %c0_i32_0 = arith.constant 0 : i32
    %c0_i32_1 = arith.constant 0 : i32
    return %c0_i32, %c0_i32_0 : i32, i32
  }
  func.func @transform_5(%arg0: i32) -> (i32, i32) {
    %c0_i32 = arith.constant 0 : i32
    %c0_i32_0 = arith.constant 0 : i32
    %c0_i32_1 = arith.constant 0 : i32
    return %c0_i32, %c0_i32_0 : i32, i32
  }
  func.func @transform_6(%arg0: i32) -> (i32, i32) {
    %c0_i32 = arith.constant 0 : i32
    %c0_i32_0 = arith.constant 0 : i32
    %c0_i32_1 = arith.constant 0 : i32
    return %c0_i32, %c0_i32_0 : i32, i32
  }
  func.func @transform_7(%arg0: i32) -> (i32, i32) {
    %c0_i32 = arith.constant 0 : i32
    %c0_i32_0 = arith.constant 0 : i32
    %c0_i32_1 = arith.constant 0 : i32
    return %c0_i32, %c0_i32_0 : i32, i32
  }
  func.func @transform_8(%arg0: i32) -> (i32, i32, i32) {
    %c0_i32 = arith.constant 0 : i32
    %c0_i32_0 = arith.constant 0 : i32
    %c0_i32_1 = arith.constant 0 : i32
    return %arg0, %c0_i32, %c0_i32_0 : i32, i32, i32
  }
}

module attributes {stable_mosaic.version = 11 : i64} {
  func.func @_deconv_kernel(%arg0: i32, %arg1: memref<1x16x16xf32, #tpu.memory_space<vmem>>, %arg2: memref<32x64xf32, #tpu.memory_space<vmem>>, %arg3: memref<32x1xf32, #tpu.memory_space<vmem>>, %arg4: memref<1x32x16xf32, #tpu.memory_space<vmem>>, %arg5: memref<1x16xf32, #tpu.memory_space<vmem>>, %arg6: memref<1x32x16xf32, #tpu.memory_space<vmem>>) attributes {dimension_semantics = [#tpu.dimension_semantics<parallel>], iteration_bounds = array<i64: 2>, scalar_prefetch = 0 : i64, scratch_operands = 0 : i64, tpu.core_type = #tpu.core_type<tc>, window_params = [{transform_indices = @transform_0, window_bounds = array<i64: 1, 16, 16>}, {pipeline_mode = #tpu.pipeline_mode<synchronous>, transform_indices = @transform_1, window_bounds = array<i64: 32, 64>}, {pipeline_mode = #tpu.pipeline_mode<synchronous>, transform_indices = @transform_2, window_bounds = array<i64: 32, 1>}, {transform_indices = @transform_3, window_bounds = array<i64: 1, 32, 16>}, {pipeline_mode = #tpu.pipeline_mode<synchronous>, transform_indices = @transform_4, window_bounds = array<i64: 1, 16>}, {transform_indices = @transform_5, window_bounds = array<i64: 1, 32, 16>}]} {
    %c0 = arith.constant 0 : index
    %c0_0 = arith.constant 0 : index
    %c0_1 = arith.constant 0 : index
    %0 = vector.load %arg1[%c0, %c0_0, %c0_1] : memref<1x16x16xf32, #tpu.memory_space<vmem>>, vector<1x16x16xf32>
    %1 = vector.shape_cast %0 : vector<1x16x16xf32> to vector<16x16xf32>
    %cst = arith.constant 0.000000e+00 : f32
    %2 = vector.broadcast %cst : f32 to vector<16x5xf32>
    %3 = tpu.concatenate %1, %2 in 1 : vector<16x16xf32>, vector<16x5xf32> -> vector<16x21xf32>
    %c0_2 = arith.constant 0 : index
    %c0_3 = arith.constant 0 : index
    %4 = vector.load %arg5[%c0_2, %c0_3] : memref<1x16xf32, #tpu.memory_space<vmem>>, vector<1x16xf32>
    %5 = vector.extract_strided_slice %3 {offsets = [0, 1], sizes = [16, 16], strides = [1, 1]} : vector<16x21xf32> to vector<16x16xf32>
    %6 = vector.broadcast %4 : vector<1x16xf32> to vector<16x16xf32>
    %7 = arith.mulf %5, %6 : vector<16x16xf32>
    %8 = vector.extract_strided_slice %3 {offsets = [0, 4], sizes = [16, 16], strides = [1, 1]} : vector<16x21xf32> to vector<16x16xf32>
    %9 = vector.extract_strided_slice %3 {offsets = [0, 5], sizes = [16, 16], strides = [1, 1]} : vector<16x21xf32> to vector<16x16xf32>
    %10 = vector.broadcast %4 : vector<1x16xf32> to vector<16x16xf32>
    %11 = arith.mulf %9, %10 : vector<16x16xf32>
    %12 = tpu.concatenate %1, %7, %8, %11 in 0 : vector<16x16xf32>, vector<16x16xf32>, vector<16x16xf32>, vector<16x16xf32> -> vector<64x16xf32>
    %c0_4 = arith.constant 0 : index
    %c0_5 = arith.constant 0 : index
    %13 = vector.load %arg2[%c0_4, %c0_5] : memref<32x64xf32, #tpu.memory_space<vmem>>, vector<32x64xf32>
    %cst_6 = arith.constant dense<0.000000e+00> : vector<32x16xf32>
    %14 = tpu.matmul %13, %12, %cst_6 {dimension_numbers = #tpu.dot_dimension_numbers<[1], [0], [0], [1], [0, 0, 1, 1], [], []>} : vector<32x64xf32>, vector<64x16xf32>, vector<32x16xf32> -> vector<32x16xf32>
    %c0_7 = arith.constant 0 : index
    %c0_8 = arith.constant 0 : index
    %15 = vector.load %arg3[%c0_7, %c0_8] : memref<32x1xf32, #tpu.memory_space<vmem>>, vector<32x1xf32>
    %16 = vector.broadcast %15 : vector<32x1xf32> to vector<32x16xf32>
    %17 = arith.addf %14, %16 : vector<32x16xf32>
    %c0_9 = arith.constant 0 : index
    %c0_10 = arith.constant 0 : index
    %c0_11 = arith.constant 0 : index
    %18 = vector.load %arg4[%c0_9, %c0_10, %c0_11] : memref<1x32x16xf32, #tpu.memory_space<vmem>>, vector<1x32x16xf32>
    %19 = vector.shape_cast %18 : vector<1x32x16xf32> to vector<32x16xf32>
    %20 = arith.addf %17, %19 : vector<32x16xf32>
    %cst_12 = arith.constant 0.000000e+00 : f32
    %21 = vector.broadcast %cst_12 : f32 to vector<32x16xf32>
    %22 = arith.maximumf %20, %21 : vector<32x16xf32>
    %c0_13 = arith.constant 0 : index
    %c0_14 = arith.constant 0 : index
    %c0_15 = arith.constant 0 : index
    %23 = vector.load %arg6[%c0_13, %c0_14, %c0_15] : memref<1x32x16xf32, #tpu.memory_space<vmem>>, vector<1x32x16xf32>
    %24 = vector.shape_cast %23 : vector<1x32x16xf32> to vector<32x16xf32>
    %25 = vector.shape_cast %22 : vector<32x16xf32> to vector<1x32x16xf32>
    tpu.vector_store %arg6[%c0_13, %c0_14, %c0_15], %25 {strides = array<i32>} : memref<1x32x16xf32, #tpu.memory_space<vmem>>, vector<1x32x16xf32>,
    return
  }
  func.func @transform_0(%arg0: i32) -> (i32, i32, i32) {
    %c0_i32 = arith.constant 0 : i32
    %c0_i32_0 = arith.constant 0 : i32
    %c0_i32_1 = arith.constant 0 : i32
    return %arg0, %c0_i32, %c0_i32_0 : i32, i32, i32
  }
  func.func @transform_1(%arg0: i32) -> (i32, i32) {
    %c0_i32 = arith.constant 0 : i32
    %c0_i32_0 = arith.constant 0 : i32
    %c0_i32_1 = arith.constant 0 : i32
    return %c0_i32, %c0_i32_0 : i32, i32
  }
  func.func @transform_2(%arg0: i32) -> (i32, i32) {
    %c0_i32 = arith.constant 0 : i32
    %c0_i32_0 = arith.constant 0 : i32
    %c0_i32_1 = arith.constant 0 : i32
    return %c0_i32, %c0_i32_0 : i32, i32
  }
  func.func @transform_3(%arg0: i32) -> (i32, i32, i32) {
    %c0_i32 = arith.constant 0 : i32
    %c0_i32_0 = arith.constant 0 : i32
    %c0_i32_1 = arith.constant 0 : i32
    return %arg0, %c0_i32, %c0_i32_0 : i32, i32, i32
  }
  func.func @transform_4(%arg0: i32) -> (i32, i32) {
    %c0_i32 = arith.constant 0 : i32
    %c0_i32_0 = arith.constant 0 : i32
    %c0_i32_1 = arith.constant 0 : i32
    return %c0_i32, %c0_i32_0 : i32, i32
  }
  func.func @transform_5(%arg0: i32) -> (i32, i32, i32) {
    %c0_i32 = arith.constant 0 : i32
    %c0_i32_0 = arith.constant 0 : i32
    %c0_i32_1 = arith.constant 0 : i32
    return %arg0, %c0_i32, %c0_i32_0 : i32, i32, i32
  }
}

module attributes {stable_mosaic.version = 11 : i64} {
  func.func @_deconv_kernel(%arg0: i32, %arg1: memref<1x8x64xf32, #tpu.memory_space<vmem>>, %arg2: memref<16x32xf32, #tpu.memory_space<vmem>>, %arg3: memref<16x1xf32, #tpu.memory_space<vmem>>, %arg4: memref<1x16x64xf32, #tpu.memory_space<vmem>>, %arg5: memref<1x64xf32, #tpu.memory_space<vmem>>, %arg6: memref<1x16x64xf32, #tpu.memory_space<vmem>>) attributes {dimension_semantics = [#tpu.dimension_semantics<parallel>], iteration_bounds = array<i64: 2>, scalar_prefetch = 0 : i64, scratch_operands = 0 : i64, tpu.core_type = #tpu.core_type<tc>, window_params = [{transform_indices = @transform_0, window_bounds = array<i64: 1, 8, 64>}, {pipeline_mode = #tpu.pipeline_mode<synchronous>, transform_indices = @transform_1, window_bounds = array<i64: 16, 32>}, {pipeline_mode = #tpu.pipeline_mode<synchronous>, transform_indices = @transform_2, window_bounds = array<i64: 16, 1>}, {transform_indices = @transform_3, window_bounds = array<i64: 1, 16, 64>}, {pipeline_mode = #tpu.pipeline_mode<synchronous>, transform_indices = @transform_4, window_bounds = array<i64: 1, 64>}, {transform_indices = @transform_5, window_bounds = array<i64: 1, 16, 64>}]} {
    %c0 = arith.constant 0 : index
    %c0_0 = arith.constant 0 : index
    %c0_1 = arith.constant 0 : index
    %0 = vector.load %arg1[%c0, %c0_0, %c0_1] : memref<1x8x64xf32, #tpu.memory_space<vmem>>, vector<1x8x64xf32>
    %1 = vector.shape_cast %0 : vector<1x8x64xf32> to vector<8x64xf32>
    %cst = arith.constant 0.000000e+00 : f32
    %2 = vector.broadcast %cst : f32 to vector<8x9xf32>
    %3 = tpu.concatenate %1, %2 in 1 : vector<8x64xf32>, vector<8x9xf32> -> vector<8x73xf32>
    %c0_2 = arith.constant 0 : index
    %c0_3 = arith.constant 0 : index
    %4 = vector.load %arg5[%c0_2, %c0_3] : memref<1x64xf32, #tpu.memory_space<vmem>>, vector<1x64xf32>
    %5 = vector.extract_strided_slice %3 {offsets = [0, 1], sizes = [8, 64], strides = [1, 1]} : vector<8x73xf32> to vector<8x64xf32>
    %6 = vector.broadcast %4 : vector<1x64xf32> to vector<8x64xf32>
    %7 = arith.mulf %5, %6 : vector<8x64xf32>
    %8 = vector.extract_strided_slice %3 {offsets = [0, 8], sizes = [8, 64], strides = [1, 1]} : vector<8x73xf32> to vector<8x64xf32>
    %9 = vector.extract_strided_slice %3 {offsets = [0, 9], sizes = [8, 64], strides = [1, 1]} : vector<8x73xf32> to vector<8x64xf32>
    %10 = vector.broadcast %4 : vector<1x64xf32> to vector<8x64xf32>
    %11 = arith.mulf %9, %10 : vector<8x64xf32>
    %12 = tpu.concatenate %1, %7, %8, %11 in 0 : vector<8x64xf32>, vector<8x64xf32>, vector<8x64xf32>, vector<8x64xf32> -> vector<32x64xf32>
    %c0_4 = arith.constant 0 : index
    %c0_5 = arith.constant 0 : index
    %13 = vector.load %arg2[%c0_4, %c0_5] : memref<16x32xf32, #tpu.memory_space<vmem>>, vector<16x32xf32>
    %cst_6 = arith.constant dense<0.000000e+00> : vector<16x64xf32>
    %14 = tpu.matmul %13, %12, %cst_6 {dimension_numbers = #tpu.dot_dimension_numbers<[1], [0], [0], [1], [0, 0, 1, 1], [], []>} : vector<16x32xf32>, vector<32x64xf32>, vector<16x64xf32> -> vector<16x64xf32>
    %c0_7 = arith.constant 0 : index
    %c0_8 = arith.constant 0 : index
    %15 = vector.load %arg3[%c0_7, %c0_8] : memref<16x1xf32, #tpu.memory_space<vmem>>, vector<16x1xf32>
    %16 = vector.broadcast %15 : vector<16x1xf32> to vector<16x64xf32>
    %17 = arith.addf %14, %16 : vector<16x64xf32>
    %c0_9 = arith.constant 0 : index
    %c0_10 = arith.constant 0 : index
    %c0_11 = arith.constant 0 : index
    %18 = vector.load %arg4[%c0_9, %c0_10, %c0_11] : memref<1x16x64xf32, #tpu.memory_space<vmem>>, vector<1x16x64xf32>
    %19 = vector.shape_cast %18 : vector<1x16x64xf32> to vector<16x64xf32>
    %20 = arith.addf %17, %19 : vector<16x64xf32>
    %cst_12 = arith.constant 0.000000e+00 : f32
    %21 = vector.broadcast %cst_12 : f32 to vector<16x64xf32>
    %22 = arith.maximumf %20, %21 : vector<16x64xf32>
    %c0_13 = arith.constant 0 : index
    %c0_14 = arith.constant 0 : index
    %c0_15 = arith.constant 0 : index
    %23 = vector.load %arg6[%c0_13, %c0_14, %c0_15] : memref<1x16x64xf32, #tpu.memory_space<vmem>>, vector<1x16x64xf32>
    %24 = vector.shape_cast %23 : vector<1x16x64xf32> to vector<16x64xf32>
    %25 = vector.shape_cast %22 : vector<16x64xf32> to vector<1x16x64xf32>
    tpu.vector_store %arg6[%c0_13, %c0_14, %c0_15], %25 {strides = array<i32>} : memref<1x16x64xf32, #tpu.memory_space<vmem>>, vector<1x16x64xf32>,
    return
  }
  func.func @transform_0(%arg0: i32) -> (i32, i32, i32) {
    %c0_i32 = arith.constant 0 : i32
    %c0_i32_0 = arith.constant 0 : i32
    %c0_i32_1 = arith.constant 0 : i32
    return %arg0, %c0_i32, %c0_i32_0 : i32, i32, i32
  }
  func.func @transform_1(%arg0: i32) -> (i32, i32) {
    %c0_i32 = arith.constant 0 : i32
    %c0_i32_0 = arith.constant 0 : i32
    %c0_i32_1 = arith.constant 0 : i32
    return %c0_i32, %c0_i32_0 : i32, i32
  }
  func.func @transform_2(%arg0: i32) -> (i32, i32) {
    %c0_i32 = arith.constant 0 : i32
    %c0_i32_0 = arith.constant 0 : i32
    %c0_i32_1 = arith.constant 0 : i32
    return %c0_i32, %c0_i32_0 : i32, i32
  }
  func.func @transform_3(%arg0: i32) -> (i32, i32, i32) {
    %c0_i32 = arith.constant 0 : i32
    %c0_i32_0 = arith.constant 0 : i32
    %c0_i32_1 = arith.constant 0 : i32
    return %arg0, %c0_i32, %c0_i32_0 : i32, i32, i32
  }
  func.func @transform_4(%arg0: i32) -> (i32, i32) {
    %c0_i32 = arith.constant 0 : i32
    %c0_i32_0 = arith.constant 0 : i32
    %c0_i32_1 = arith.constant 0 : i32
    return %c0_i32, %c0_i32_0 : i32, i32
  }
  func.func @transform_5(%arg0: i32) -> (i32, i32, i32) {
    %c0_i32 = arith.constant 0 : i32
    %c0_i32_0 = arith.constant 0 : i32
    %c0_i32_1 = arith.constant 0 : i32
    return %arg0, %c0_i32, %c0_i32_0 : i32, i32, i32
  }
}

</mosaic_0001>

<llo_original>
// kernel: hourglass2d.14
$region0: #{hourglass2d.14}
  #allocation0 [shape = 'u32[]', space=smem, size = 0x4, offset = 0x4, fixed_abs, tag = 'smem constant byte address 0x4 - core index']
  #allocation1 [shape = 'u32[144,128]{1,0:T(1,128)}', space=vmem, size = 0x12000, scoped, tag = 'internal scratch']
  %s0 = inlined_call_operand.vmem [shape: f32[2,4,256], index: 0, kind: input, shape index: {}]
  %s1 = inlined_call_operand.vmem [shape: f32[8,4], index: 1, kind: input, shape index: {}]
  %s2 = inlined_call_operand.vmem [shape: f32[8,1], index: 2, kind: input, shape index: {}]
  %s3 = inlined_call_operand.vmem [shape: f32[8,9], index: 3, kind: input, shape index: {}]
  %s4 = inlined_call_operand.vmem [shape: f32[8,1], index: 4, kind: input, shape index: {}]
  %s5 = inlined_call_operand.vmem [shape: f32[4,8], index: 5, kind: input, shape index: {}]
  %s6 = inlined_call_operand.vmem [shape: f32[4,1], index: 6, kind: input, shape index: {}]
  %s7 = inlined_call_operand.vmem [shape: f32[2,256], index: 7, kind: input, shape index: {}]
  %s8 = inlined_call_operand.vmem [shape: f32[2,4,256], index: 8, kind: output, shape index: {}]
  %s9 = sld [smem:[#allocation0]]
  $region65: #{hourglass2d.14} parent=0
    _
  %s11 = ssub.s32 1, %s9
  %s12 = scalar_select 0, %s11, %s9
  loop: start=0, step=1, limit=4
  $region2: #{hourglass2d.14} parent=0 // loop_pre_header
    _
  $region3: #{hourglass2d.14} parent=0 // loop_header
    %s14 = sphi 0, %s18
    %p15 = scmp.ge.s32.totalorder %s14, 4
    %s24 = sphi 0, %s26
    %s27 = sphi 0, %s24
    %s28 = sphi 0, %s27
    %s44 = sphi 0, %s28
    %s48 = sphi 0, %s48
    %s50 = sphi 0, %s48
    %s51 = sphi 0, %s50
    %s65 = sphi 0, %s51
    %s69 = sphi 0, %s69
    %s71 = sphi 0, %s69
    %s72 = sphi 0, %s71
    %s86 = sphi 0, %s72
    %s90 = sphi 0, %s90
    %s92 = sphi 0, %s90
    %s93 = sphi 0, %s92
    %s107 = sphi 0, %s93
    %s111 = sphi 0, %s111
    %s113 = sphi 0, %s111
    %s114 = sphi 0, %s113
    %s128 = sphi 0, %s114
    %s132 = sphi 0, %s132
    %s134 = sphi 0, %s132
    %s135 = sphi 0, %s134
    %s149 = sphi 0, %s135
    %s153 = sphi 0, %s153
    %s155 = sphi 0, %s153
    %s156 = sphi 0, %s155
    %s170 = sphi 0, %s156
    %s174 = sphi 0, %s174
    %s176 = sphi 0, %s174
    %s177 = sphi 0, %s176
    %s191 = sphi 0, %s177
    %s197 = sphi 0, %s199
    %s200 = sphi 0, %s197
    %s201 = sphi 0, %s200
    %s217 = sphi 0, %s201
  $region4: #{hourglass2d.14} parent=0 // loop_header_branch
    %17 = sbr.rel (%p15) target = $region8
  $region5: #{hourglass2d.14} parent=0 // loop_body
    %s19 = ssub.s32 %s14, 1
    %s20 = ssub.s32 %s14, 2
    %s21 = sadd.s32 %s14, 1
    %s22 = ssub.s32 %s14, %s21
    %p23 = scmp.eq.s32.totalorder %s22, 0
    %s25 = sadd.s32 %s24, 1
    %s26 = scalar_select %p23, %s24, %s25
    %p29 = pneg %p23
    %p30 = scmp.eq.s32.totalorder %s14, 1
    %p31 = por %p29, %p30
    %p32 = scmp.ne.s32.totalorder %s24, %s27
    %p33 = scmp.eq.s32.totalorder %s14, 0
    %p34 = por %p32, %p33
    %p35 = scmp.ne.s32.totalorder %s24, %s27
    %p36 = scmp.eq.s32.totalorder %s19, 1
    %p37 = por %p35, %p36
    %p38 = scmp.ne.s32.totalorder %s27, %s28
    %p39 = scmp.eq.s32.totalorder %s19, 0
    %p40 = por %p38, %p39
    %p41 = scmp.ne.s32.totalorder %s27, %s28
    %p42 = scmp.eq.s32.totalorder %s20, 1
    %p43 = por %p41, %p42
    %p45 = scmp.ne.s32.totalorder %s28, %s44
    %p46 = scmp.eq.s32.totalorder %s20, 0
    %p47 = por %p45, %p46
    %s49 = sadd.s32 %s48, 1
    %p52 = scmp.eq.s32.totalorder %s14, 1
    %p53 = scmp.ne.s32.totalorder %s48, %s50
    %p54 = scmp.eq.s32.totalorder %s14, 0
    %p55 = por %p53, %p54
    %p56 = scmp.ne.s32.totalorder %s48, %s50
    %p57 = scmp.eq.s32.totalorder %s19, 1
    %p58 = por %p56, %p57
    %p59 = scmp.ne.s32.totalorder %s50, %s51
    %p60 = scmp.eq.s32.totalorder %s19, 0
    %p61 = por %p59, %p60
    %p62 = scmp.ne.s32.totalorder %s50, %s51
    %p63 = scmp.eq.s32.totalorder %s20, 1
    %p64 = por %p62, %p63
    %p66 = scmp.ne.s32.totalorder %s51, %s65
    %p67 = scmp.eq.s32.totalorder %s20, 0
    %p68 = por %p66, %p67
    %s70 = sadd.s32 %s69, 1
    %p73 = scmp.eq.s32.totalorder %s14, 1
    %p74 = scmp.ne.s32.totalorder %s69, %s71
    %p75 = scmp.eq.s32.totalorder %s14, 0
    %p76 = por %p74, %p75
    %p77 = scmp.ne.s32.totalorder %s69, %s71
    %p78 = scmp.eq.s32.totalorder %s19, 1
    %p79 = por %p77, %p78
    %p80 = scmp.ne.s32.totalorder %s71, %s72
    %p81 = scmp.eq.s32.totalorder %s19, 0
    %p82 = por %p80, %p81
    %p83 = scmp.ne.s32.totalorder %s71, %s72
    %p84 = scmp.eq.s32.totalorder %s20, 1
    %p85 = por %p83, %p84
    %p87 = scmp.ne.s32.totalorder %s72, %s86
    %p88 = scmp.eq.s32.totalorder %s20, 0
    %p89 = por %p87, %p88
    %s91 = sadd.s32 %s90, 1
    %p94 = scmp.eq.s32.totalorder %s14, 1
    %p95 = scmp.ne.s32.totalorder %s90, %s92
    %p96 = scmp.eq.s32.totalorder %s14, 0
    %p97 = por %p95, %p96
    %p98 = scmp.ne.s32.totalorder %s90, %s92
    %p99 = scmp.eq.s32.totalorder %s19, 1
    %p100 = por %p98, %p99
    %p101 = scmp.ne.s32.totalorder %s92, %s93
    %p102 = scmp.eq.s32.totalorder %s19, 0
    %p103 = por %p101, %p102
    %p104 = scmp.ne.s32.totalorder %s92, %s93
    %p105 = scmp.eq.s32.totalorder %s20, 1
    %p106 = por %p104, %p105
    %p108 = scmp.ne.s32.totalorder %s93, %s107
    %p109 = scmp.eq.s32.totalorder %s20, 0
    %p110 = por %p108, %p109
    %s112 = sadd.s32 %s111, 1
    %p115 = scmp.eq.s32.totalorder %s14, 1
    %p116 = scmp.ne.s32.totalorder %s111, %s113
    %p117 = scmp.eq.s32.totalorder %s14, 0
    %p118 = por %p116, %p117
    %p119 = scmp.ne.s32.totalorder %s111, %s113
    %p120 = scmp.eq.s32.totalorder %s19, 1
    %p121 = por %p119, %p120
    %p122 = scmp.ne.s32.totalorder %s113, %s114
    %p123 = scmp.eq.s32.totalorder %s19, 0
    %p124 = por %p122, %p123
    %p125 = scmp.ne.s32.totalorder %s113, %s114
    %p126 = scmp.eq.s32.totalorder %s20, 1
    %p127 = por %p125, %p126
    %p129 = scmp.ne.s32.totalorder %s114, %s128
    %p130 = scmp.eq.s32.totalorder %s20, 0
    %p131 = por %p129, %p130
    %s133 = sadd.s32 %s132, 1
    %p136 = scmp.eq.s32.totalorder %s14, 1
    %p137 = scmp.ne.s32.totalorder %s132, %s134
    %p138 = scmp.eq.s32.totalorder %s14, 0
    %p139 = por %p137, %p138
    %p140 = scmp.ne.s32.totalorder %s132, %s134
    %p141 = scmp.eq.s32.totalorder %s19, 1
    %p142 = por %p140, %p141
    %p143 = scmp.ne.s32.totalorder %s134, %s135
    %p144 = scmp.eq.s32.totalorder %s19, 0
    %p145 = por %p143, %p144
    %p146 = scmp.ne.s32.totalorder %s134, %s135
    %p147 = scmp.eq.s32.totalorder %s20, 1
    %p148 = por %p146, %p147
    %p150 = scmp.ne.s32.totalorder %s135, %s149
    %p151 = scmp.eq.s32.totalorder %s20, 0
    %p152 = por %p150, %p151
    %s154 = sadd.s32 %s153, 1
    %p157 = scmp.eq.s32.totalorder %s14, 1
    %p158 = scmp.ne.s32.totalorder %s153, %s155
    %p159 = scmp.eq.s32.totalorder %s14, 0
    %p160 = por %p158, %p159
    %p161 = scmp.ne.s32.totalorder %s153, %s155
    %p162 = scmp.eq.s32.totalorder %s19, 1
    %p163 = por %p161, %p162
    %p164 = scmp.ne.s32.totalorder %s155, %s156
    %p165 = scmp.eq.s32.totalorder %s19, 0
    %p166 = por %p164, %p165
    %p167 = scmp.ne.s32.totalorder %s155, %s156
    %p168 = scmp.eq.s32.totalorder %s20, 1
    %p169 = por %p167, %p168
    %p171 = scmp.ne.s32.totalorder %s156, %s170
    %p172 = scmp.eq.s32.totalorder %s20, 0
    %p173 = por %p171, %p172
    %s175 = sadd.s32 %s174, 1
    %p178 = scmp.eq.s32.totalorder %s14, 1
    %p179 = scmp.ne.s32.totalorder %s174, %s176
    %p180 = scmp.eq.s32.totalorder %s14, 0
    %p181 = por %p179, %p180
    %p182 = scmp.ne.s32.totalorder %s174, %s176
    %p183 = scmp.eq.s32.totalorder %s19, 1
    %p184 = por %p182, %p183
    %p185 = scmp.ne.s32.totalorder %s176, %s177
    %p186 = scmp.eq.s32.totalorder %s19, 0
    %p187 = por %p185, %p186
    %p188 = scmp.ne.s32.totalorder %s176, %s177
    %p189 = scmp.eq.s32.totalorder %s20, 1
    %p190 = por %p188, %p189
    %p192 = scmp.ne.s32.totalorder %s177, %s191
    %p193 = scmp.eq.s32.totalorder %s20, 0
    %p194 = por %p192, %p193
    %s195 = ssub.s32 %s14, %s21
    %p196 = scmp.eq.s32.totalorder %s195, 0
    %s198 = sadd.s32 %s197, 1
    %s199 = scalar_select %p196, %s197, %s198
    %p202 = pneg %p196
    %p203 = scmp.eq.s32.totalorder %s14, 1
    %p204 = por %p202, %p203
    %p205 = scmp.ne.s32.totalorder %s197, %s200
    %p206 = scmp.eq.s32.totalorder %s14, 0
    %p207 = por %p205, %p206
    %p208 = scmp.ne.s32.totalorder %s197, %s200
    %p209 = scmp.eq.s32.totalorder %s19, 1
    %p210 = por %p208, %p209
    %p211 = scmp.ne.s32.totalorder %s200, %s201
    %p212 = scmp.eq.s32.totalorder %s19, 0
    %p213 = por %p211, %p212
    %p214 = scmp.ne.s32.totalorder %s200, %s201
    %p215 = scmp.eq.s32.totalorder %s20, 1
    %p216 = por %p214, %p215
    %p218 = scmp.ne.s32.totalorder %s201, %s217
    %p219 = scmp.eq.s32.totalorder %s20, 0
    %p220 = por %p218, %p219
    %p221 = scmp.le.s32.totalorder 1, %s14
    %p222 = scmp.lt.s32.totalorder %s14, 3
    %p223 = pnand %p221, %p222
    %p224 = pneg %p223
    // Predicated region
    $region9: #{hourglass2d.14} parent=5 // pred_check
      _
    $region10: #{hourglass2d.14} parent=5 // pred_check_branch
      %226 = sbr.rel (%p223) target = $region12
    $region11: #{hourglass2d.14} parent=5 // pred_region
      %s227 = ssub.s32 %s14, 1
      // Predicated region
      $region13: #{hourglass2d.14} parent=11 // pred_check
        %p228 = pneg %p61
      $region14: #{hourglass2d.14} parent=11 // pred_check_branch
        %230 = sbr.rel (%p228) target = $region16
      $region15: #{hourglass2d.14} parent=11 // pred_region
        _
      $region16: #{hourglass2d.14} parent=11 // pred_fallthru
        _
      // Predicated region
      $region17: #{hourglass2d.14} parent=11 // pred_check
        %p231 = pneg %p82
      $region18: #{hourglass2d.14} parent=11 // pred_check_branch
        %233 = sbr.rel (%p231) target = $region20
      $region19: #{hourglass2d.14} parent=11 // pred_region
        _
      $region20: #{hourglass2d.14} parent=11 // pred_fallthru
        _
      // Predicated region
      $region21: #{hourglass2d.14} parent=11 // pred_check
        %p234 = pneg %p103
      $region22: #{hourglass2d.14} parent=11 // pred_check_branch
        %236 = sbr.rel (%p234) target = $region24
      $region23: #{hourglass2d.14} parent=11 // pred_region
        _
      $region24: #{hourglass2d.14} parent=11 // pred_fallthru
        _
      // Predicated region
      $region25: #{hourglass2d.14} parent=11 // pred_check
        %p237 = pneg %p124
      $region26: #{hourglass2d.14} parent=11 // pred_check_branch
        %239 = sbr.rel (%p237) target = $region28
      $region27: #{hourglass2d.14} parent=11 // pred_region
        _
      $region28: #{hourglass2d.14} parent=11 // pred_fallthru
        _
      // Predicated region
      $region29: #{hourglass2d.14} parent=11 // pred_check
        %p240 = pneg %p145
      $region30: #{hourglass2d.14} parent=11 // pred_check_branch
        %242 = sbr.rel (%p240) target = $region32
      $region31: #{hourglass2d.14} parent=11 // pred_region
        _
      $region32: #{hourglass2d.14} parent=11 // pred_fallthru
        _
      // Predicated region
      $region33: #{hourglass2d.14} parent=11 // pred_check
        %p243 = pneg %p166
      $region34: #{hourglass2d.14} parent=11 // pred_check_branch
        %245 = sbr.rel (%p243) target = $region36
      $region35: #{hourglass2d.14} parent=11 // pred_region
        _
      $region36: #{hourglass2d.14} parent=11 // pred_fallthru
        _
      // Predicated region
      $region37: #{hourglass2d.14} parent=11 // pred_check
        %p246 = pneg %p187
      $region38: #{hourglass2d.14} parent=11 // pred_check_branch
        %248 = sbr.rel (%p246) target = $region40
      $region39: #{hourglass2d.14} parent=11 // pred_region
        _
      $region40: #{hourglass2d.14} parent=11 // pred_fallthru
        _
    $region12: #{hourglass2d.14} parent=5 // pred_fallthru
      _
    %p249 = scmp.lt.s32.totalorder %s14, 2
    // Predicated region
    $region41: #{hourglass2d.14} parent=5 // pred_check
      %p250 = pneg %p249
    $region42: #{hourglass2d.14} parent=5 // pred_check_branch
      %252 = sbr.rel (%p250) target = $region44
    $region43: #{hourglass2d.14} parent=5 // pred_region
      // Predicated region
      $region45: #{hourglass2d.14} parent=43 // pred_check
        %p253 = pneg %p34
      $region46: #{hourglass2d.14} parent=43 // pred_check_branch
        %255 = sbr.rel (%p253) target = $region48
      $region47: #{hourglass2d.14} parent=43 // pred_region
        %p256 = scmp.lt.s32.totalorder %s14, 1
        %s257 = scalar_select %p256, %s14, 1
        %s258 = smul.addr %s257, 2
        %s259 = smul.addr %s258, 4
        %s260 = scalar_lea.vmem %s0, %s259
      $region48: #{hourglass2d.14} parent=43 // pred_fallthru
        _
    $region44: #{hourglass2d.14} parent=5 // pred_fallthru
      _
    %p261 = scmp.le.s32.totalorder 1, %s14
    %p262 = scmp.lt.s32.totalorder %s14, 3
    %p263 = pnand %p261, %p262
    %p264 = pneg %p263
    // Predicated region
    $region49: #{hourglass2d.14} parent=5 // pred_check
      _
    $region50: #{hourglass2d.14} parent=5 // pred_check_branch
      %266 = sbr.rel (%p263) target = $region52
    $region51: #{hourglass2d.14} parent=5 // pred_region
      %s267 = ssub.s32 %s14, 1
      %p268 = scmp.lt.s32.totalorder %s19, 1
      %s269 = scalar_select %p268, %s19, 1
      %s270 = smul.addr %s269, 2
      %s271 = smul.addr %s270, 4
      %s272 = scalar_lea.vmem %s0, %s271
      %p273 = pneg %p40
      %p274 = pneg %p37
      %p275 = pneg %p61
      %p276 = pneg %p58
      %p277 = pneg %p82
      %p278 = pneg %p79
      %p279 = pneg %p103
      %p280 = pneg %p100
      %p281 = pneg %p124
      %p282 = pneg %p121
      %p283 = pneg %p145
      %p284 = pneg %p142
      %p285 = pneg %p166
      %p286 = pneg %p163
      %p287 = pneg %p187
      %p288 = pneg %p184
      %p289 = pneg %p213
      %p290 = pneg %p210
      %p291 = scmp.lt.s32.totalorder %s19, 1
      %s292 = scalar_select %p291, %s19, 1
      %s293 = smul.addr %s292, 2
      %s294 = smul.addr %s293, 4
      %s295 = scalar_lea.vmem %s8, %s294
      %p296 = scmp.lt.s32.totalorder %s19, 1
      %s297 = scalar_select %p296, %s19, 1
      %s298 = smul.addr %s297, 2
      %s299 = smul.addr %s298, 4
      %s300 = scalar_lea.vmem %s0, %s299
      %p301 = scmp.lt.s32.totalorder %s19, 1
      %s302 = scalar_select %p301, %s19, 1
      %s303 = smul.addr %s302, 2
      %s304 = smul.addr %s303, 4
      %s305 = scalar_lea.vmem %s8, %s304
      %v306 = vld [vmem:[%s300] sm:$0xff]
      %v307 = vld [vmem:[%s1] sm:$0xff]
      %v308 = vld [vmem:[%s2] sm:$0xff]
      %310 = vset.pattern.permute.xlu0 0
      %311 = vperm.xlu0 %310, %v308
      %v312 = vpop.permute.xlu0 %311
      %v315 = vcombine.high %v306, %v306
      %vm316 = vcmask 31744
      %v318 = vsel %vm316, %v307, 0
      %vm320 = vcmask 1043456
      %v321 = vsel %vm320, %v306, 0
      %v323 = vsel %vm320, %v315, 0
      %325 = vmatprep.subr.mxu0 0.0
      %326 = vmatpush1.msra.mxu0 0.0
      %327 = vmatprep.subr.mxu0 0.0
      %328 = vmatpush1.msra.mxu0 0.0
      %329 = vmatprep.subr.mxu0 0.0
      %330 = vmatpush1.msra.mxu0 0.0
      %331 = vmatprep.subr.mxu0 0.0
      %332 = vmatpush1.msra.mxu0 0.0
      %333 = vmatprep.subr.mxu0 0.0
      %334 = vmatpush1.msra.mxu0 0.0
      %335 = vmatprep.subr.mxu0 0.0
      %336 = vmatpush1.msra.mxu0 0.0
      %337 = vmatprep.subr.mxu0 0.0
      %338 = vmatpush1.msra.mxu0 0.0
      %339 = vmatprep.subr.mxu0 0.0
      %340 = vmatpush1.msra.mxu0 0.0
      %341 = vmatprep.subr.mxu0 0.0
      %342 = vmatpush1.msra.mxu0 0.0
      %343 = vmatprep.subr.mxu0 0.0
      %344 = vmatpush1.msra.mxu0 0.0
      %345 = vmatprep.subr.mxu0 0.0
      %346 = vmatpush1.msra.mxu0 0.0
      %347 = vmatprep.subr.mxu0 0.0
      %348 = vmatpush1.msra.mxu0 0.0
      %349 = vmatprep.subr.mxu0 0.0
      %350 = vmatpush1.msra.mxu0 0.0
      %351 = vmatprep.subr.mxu0 0.0
      %352 = vmatpush1.msra.mxu0 0.0
      %353 = vmatprep.subr.mxu0 0.0
      %354 = vmatpush1.msra.mxu0 0.0
      %355 = vmatprep.subr.mxu0 %v323
      %356 = vmatpush1.msra.mxu0 %v321
      %357 = vmatprep.subr.mxu0 0.0
      %358 = vmatpush2.msra.mxu0 0.0
      %359 = vmatprep.subr.mxu0 0.0
      %360 = vmatpush2.msra.mxu0 0.0
      %361 = vmatprep.subr.mxu0 0.0
      %362 = vmatpush2.msra.mxu0 0.0
      %363 = vmatprep.subr.mxu0 0.0
      %364 = vmatpush2.msra.mxu0 0.0
      %365 = vmatprep.subr.mxu0 0.0
      %366 = vmatpush2.msra.mxu0 0.0
      %367 = vmatprep.subr.mxu0 0.0
      %368 = vmatpush2.msra.mxu0 0.0
      %369 = vmatprep.subr.mxu0 0.0
      %370 = vmatpush2.msra.mxu0 0.0
      %371 = vmatprep.subr.mxu0 0.0
      %372 = vmatpush2.msra.mxu0 0.0
      %373 = vmatprep.subr.mxu0 0.0
      %374 = vmatpush2.msra.mxu0 0.0
      %375 = vmatprep.subr.mxu0 0.0
      %376 = vmatpush2.msra.mxu0 0.0
      %377 = vmatprep.subr.mxu0 0.0
      %378 = vmatpush2.msra.mxu0 0.0
      %379 = vmatprep.subr.mxu0 0.0
      %380 = vmatpush2.msra.mxu0 0.0
      %381 = vmatprep.subr.mxu0 0.0
      %382 = vmatpush2.msra.mxu0 0.0
      %383 = vmatprep.subr.mxu0 0.0
      %384 = vmatpush2.msra.mxu0 0.0
      %385 = vmatprep.subr.mxu0 0.0
      %386 = vmatpush2.msra.mxu0 0.0
      %387 = vmatprep.subr.mxu0 0.0
      %388 = vmatpush2.msra.mxu0 0.0
      %389 = vmatprep.mubr.f32.mxu0 0.0
      %390 = vmatmul.mubr.f32.gmra.mxu0 %v318
      %v391 = vpop.f32.mrf.mxu0
      %v392 = vadd.f32 %v312, %v391
      %v393 = vpop.f32.mrf.mxu0
      %v394 = vadd.f32 %v312, %v393
      %395 = vdwg.mxu0
      %v396 = vmax.f32 %v392, 0.0
      %v397 = vmax.f32 %v394, 0.0
      %v398 = vmin.f32 %v396, 6.0
      %v399 = vmin.f32 %v397, 6.0
      %402 = vrot.lane.b32.xlu0 %v398, 17
      %v403 = vpop.permute.xlu0 %402
      %404 = vrot.lane.b32.xlu0 %v399, 17
      %v405 = vpop.permute.xlu0 %404
      %vm406 = vcmask 138240
      %v407 = vsel %vm406, %v403, %v405
      %v411 = vsel %vm406, 0.0, %v403
      %v412 = vsel %vm406, %v405, 0.0
      %v413 = vld [vmem:[%s3] sm:$0xff]
      %v414 = vld [vmem:[%s7] ss:$2 sm:$0x3]
      %s415 = scalar_lea.vmem %s7, 1
      %v416 = vld [vmem:[%s415] ss:$2 sm:$0x3]
      %v418 = vlaneseq
      %v419 = vshrl.u32 %v418, 7
      %v420 = vsub.s32 0, %v419
      %v421 = vrot.slane %v414, %v420
      %v422 = vlaneseq
      %v423 = vshrl.u32 %v422, 7
      %v424 = vsub.s32 1, %v423
      %v425 = vrot.slane %v414, %v424
      %v428 = vmul.f32 %v411, %v421
      %v429 = vmul.f32 %v407, %v425
      %431 = vset.pattern.permute.xlu0 0
      %432 = vperm.xlu0 %431, %v413
      %v433 = vpop.permute.xlu0 %432
      %v435 = vmul.f32 %v428, %v433
      %v436 = vmul.f32 %v429, %v433
      %v437 = vadd.f32 %v435, 0.0
      %v438 = vadd.f32 %v436, 0.0
      %439 = vset.pattern.permute.xlu0 1
      %440 = vperm.xlu0 %439, %v413
      %v441 = vpop.permute.xlu0 %440
      %v443 = vmul.f32 %v411, %v441
      %v444 = vmul.f32 %v407, %v441
      %v445 = vmul.f32 %v412, %v441
      %449 = vrot.lane.b32.xlu0 %v443, 127
      %v450 = vpop.permute.xlu0 %449
      %451 = vrot.lane.b32.xlu0 %v444, 127
      %v452 = vpop.permute.xlu0 %451
      %453 = vrot.lane.b32.xlu0 %v445, 127
      %v454 = vpop.permute.xlu0 %453
      %vm455 = vcmask 1039360
      %v456 = vsel %vm455, %v450, %v452
      %v457 = vsel %vm455, %v452, %v454
      %v460 = vadd.f32 %v437, %v456
      %v461 = vadd.f32 %v438, %v457
      %v463 = vlaneseq
      %v464 = vshrl.u32 %v463, 7
      %v465 = vsub.s32 0, %v464
      %v466 = vrot.slane %v416, %v465
      %v467 = vlaneseq
      %v468 = vshrl.u32 %v467, 7
      %v469 = vsub.s32 1, %v468
      %v470 = vrot.slane %v416, %v469
      %471 = vrot.lane.b32.xlu0 %v466, 2
      %v472 = vpop.permute.xlu0 %471
      %473 = vrot.lane.b32.xlu0 %v470, 2
      %v474 = vpop.permute.xlu0 %473
      %vm475 = vcmask 15360
      %v476 = vsel %vm475, %v472, %v474
      %v480 = vmul.f32 %v411, %v472
      %v481 = vmul.f32 %v407, %v476
      %v482 = vmul.f32 %v412, %v474
      %483 = vset.pattern.permute.xlu0 2
      %484 = vperm.xlu0 %483, %v413
      %v485 = vpop.permute.xlu0 %484
      %v487 = vmul.f32 %v480, %v485
      %v488 = vmul.f32 %v481, %v485
      %v489 = vmul.f32 %v482, %v485
      %493 = vrot.lane.b32.xlu0 %v487, 126
      %v494 = vpop.permute.xlu0 %493
      %495 = vrot.lane.b32.xlu0 %v488, 126
      %v496 = vpop.permute.xlu0 %495
      %497 = vrot.lane.b32.xlu0 %v489, 126
      %v498 = vpop.permute.xlu0 %497
      %vm499 = vcmask 1031168
      %v500 = vsel %vm499, %v494, %v496
      %v501 = vsel %vm499, %v496, %v498
      %v504 = vadd.f32 %v460, %v500
      %v505 = vadd.f32 %v461, %v501
      %506 = vrot.lane.b32.xlu0 %v421, 16
      %v507 = vpop.permute.xlu0 %506
      %508 = vrot.lane.b32.xlu0 %v425, 16
      %v509 = vpop.permute.xlu0 %508
      %vm510 = vcmask 130048
      %v511 = vsel %vm510, %v507, %v509
      %v515 = vmul.f32 %v411, %v507
      %v516 = vmul.f32 %v407, %v511
      %v517 = vmul.f32 %v412, %v509
      %518 = vset.pattern.permute.xlu0 3
      %519 = vperm.xlu0 %518, %v413
      %v520 = vpop.permute.xlu0 %519
      %v522 = vmul.f32 %v515, %v520
      %v523 = vmul.f32 %v516, %v520
      %v524 = vmul.f32 %v517, %v520
      %528 = vrot.lane.b32.xlu0 %v522, 112
      %v529 = vpop.permute.xlu0 %528
      %530 = vrot.lane.b32.xlu0 %v523, 112
      %v531 = vpop.permute.xlu0 %530
      %532 = vrot.lane.b32.xlu0 %v524, 112
      %v533 = vpop.permute.xlu0 %532
      %vm534 = vcmask 916480
      %v535 = vsel %vm534, %v529, %v531
      %v536 = vsel %vm534, %v531, %v533
      %v539 = vadd.f32 %v504, %v535
      %v540 = vadd.f32 %v505, %v536
      %541 = vset.pattern.permute.xlu0 4
      %542 = vperm.xlu0 %541, %v413
      %v543 = vpop.permute.xlu0 %542
      %v545 = vmul.f32 %v411, %v543
      %v546 = vmul.f32 %v407, %v543
      %v547 = vmul.f32 %v412, %v543
      %551 = vrot.lane.b32.xlu0 %v545, 111
      %v552 = vpop.permute.xlu0 %551
      %553 = vrot.lane.b32.xlu0 %v546, 111
      %v554 = vpop.permute.xlu0 %553
      %555 = vrot.lane.b32.xlu0 %v547, 111
      %v556 = vpop.permute.xlu0 %555
      %vm557 = vcmask 908288
      %v558 = vsel %vm557, %v552, %v554
      %v559 = vsel %vm557, %v554, %v556
      %v562 = vadd.f32 %v539, %v558
      %v563 = vadd.f32 %v540, %v559
      %564 = vrot.lane.b32.xlu0 %v466, 18
      %v565 = vpop.permute.xlu0 %564
      %566 = vrot.lane.b32.xlu0 %v470, 18
      %v567 = vpop.permute.xlu0 %566
      %vm568 = vcmask 146432
      %v569 = vsel %vm568, %v565, %v567
      %v573 = vmul.f32 %v411, %v565
      %v574 = vmul.f32 %v407, %v569
      %v575 = vmul.f32 %v412, %v567
      %576 = vset.pattern.permute.xlu0 5
      %577 = vperm.xlu0 %576, %v413
      %v578 = vpop.permute.xlu0 %577
      %v580 = vmul.f32 %v573, %v578
      %v581 = vmul.f32 %v574, %v578
      %v582 = vmul.f32 %v575, %v578
      %586 = vrot.lane.b32.xlu0 %v580, 110
      %v587 = vpop.permute.xlu0 %586
      %588 = vrot.lane.b32.xlu0 %v581, 110
      %v589 = vpop.permute.xlu0 %588
      %590 = vrot.lane.b32.xlu0 %v582, 110
      %v591 = vpop.permute.xlu0 %590
      %vm592 = vcmask 900096
      %v593 = vsel %vm592, %v587, %v589
      %v594 = vsel %vm592, %v589, %v591
      %v597 = vadd.f32 %v562, %v593
      %v598 = vadd.f32 %v563, %v594
      %599 = vrot.lane.b32.xlu0 %v421, 32
      %v600 = vpop.permute.xlu0 %599
      %601 = vrot.lane.b32.xlu0 %v425, 32
      %v602 = vpop.permute.xlu0 %601
      %vm603 = vcmask 261120
      %v604 = vsel %vm603, %v600, %v602
      %v608 = vmul.f32 %v411, %v600
      %v609 = vmul.f32 %v407, %v604
      %v610 = vmul.f32 %v412, %v602
      %611 = vset.pattern.permute.xlu0 6
      %612 = vperm.xlu0 %611, %v413
      %v613 = vpop.permute.xlu0 %612
      %v615 = vmul.f32 %v608, %v613
      %v616 = vmul.f32 %v609, %v613
      %v617 = vmul.f32 %v610, %v613
      %621 = vrot.lane.b32.xlu0 %v615, 96
      %v622 = vpop.permute.xlu0 %621
      %623 = vrot.lane.b32.xlu0 %v616, 96
      %v624 = vpop.permute.xlu0 %623
      %625 = vrot.lane.b32.xlu0 %v617, 96
      %v626 = vpop.permute.xlu0 %625
      %vm627 = vcmask 785408
      %v628 = vsel %vm627, %v622, %v624
      %v629 = vsel %vm627, %v624, %v626
      %v632 = vadd.f32 %v597, %v628
      %v633 = vadd.f32 %v598, %v629
      %634 = vset.pattern.permute.xlu0 7
      %635 = vperm.xlu0 %634, %v413
      %v636 = vpop.permute.xlu0 %635
      %v638 = vmul.f32 %v411, %v636
      %v639 = vmul.f32 %v407, %v636
      %v640 = vmul.f32 %v412, %v636
      %644 = vrot.lane.b32.xlu0 %v638, 95
      %v645 = vpop.permute.xlu0 %644
      %646 = vrot.lane.b32.xlu0 %v639, 95
      %v647 = vpop.permute.xlu0 %646
      %648 = vrot.lane.b32.xlu0 %v640, 95
      %v649 = vpop.permute.xlu0 %648
      %vm650 = vcmask 777216
      %v651 = vsel %vm650, %v645, %v647
      %v652 = vsel %vm650, %v647, %v649
      %v655 = vadd.f32 %v632, %v651
      %v656 = vadd.f32 %v633, %v652
      %657 = vrot.lane.b32.xlu0 %v466, 34
      %v658 = vpop.permute.xlu0 %657
      %659 = vrot.lane.b32.xlu0 %v470, 34
      %v660 = vpop.permute.xlu0 %659
      %vm661 = vcmask 277504
      %v662 = vsel %vm661, %v658, %v660
      %v666 = vmul.f32 %v411, %v658
      %v667 = vmul.f32 %v407, %v662
      %v668 = vmul.f32 %v412, %v660
      %669 = vset.pattern.permute.xlu0 8
      %670 = vperm.xlu0 %669, %v413
      %v671 = vpop.permute.xlu0 %670
      %v673 = vmul.f32 %v666, %v671
      %v674 = vmul.f32 %v667, %v671
      %v675 = vmul.f32 %v668, %v671
      %679 = vrot.lane.b32.xlu0 %v673, 94
      %v680 = vpop.permute.xlu0 %679
      %681 = vrot.lane.b32.xlu0 %v674, 94
      %v682 = vpop.permute.xlu0 %681
      %683 = vrot.lane.b32.xlu0 %v675, 94
      %v684 = vpop.permute.xlu0 %683
      %vm685 = vcmask 769024
      %v686 = vsel %vm685, %v680, %v682
      %v687 = vsel %vm685, %v682, %v684
      %v690 = vadd.f32 %v655, %v686
      %v691 = vadd.f32 %v656, %v687
      %v692 = vld [vmem:[%s4] sm:$0xff]
      %694 = vset.pattern.permute.xlu0 0
      %695 = vperm.xlu0 %694, %v692
      %v696 = vpop.permute.xlu0 %695
      %v698 = vadd.f32 %v690, %v696
      %v699 = vadd.f32 %v691, %v696
      %v700 = vmax.f32 %v698, 0.0
      %v701 = vmax.f32 %v699, 0.0
      %v702 = vmin.f32 %v700, 6.0
      %v703 = vmin.f32 %v701, 6.0
      %v704 = vld [vmem:[%s5] sm:$0xf]
      %v705 = vld [vmem:[%s6] sm:$0xf]
      %707 = vset.pattern.permute.xlu0 0
      %708 = vperm.xlu0 %707, %v705
      %v709 = vpop.permute.xlu0 %708
      %vm711 = vcmask 64512
      %v713 = vsel %vm711, %v704, 0
      %715 = vmatprep.subr.mxu0 0.0
      %716 = vmatpush1.msra.mxu0 0.0
      %717 = vmatprep.subr.mxu0 0.0
      %718 = vmatpush1.msra.mxu0 0.0
      %719 = vmatprep.subr.mxu0 0.0
      %720 = vmatpush1.msra.mxu0 0.0
      %721 = vmatprep.subr.mxu0 0.0
      %722 = vmatpush1.msra.mxu0 0.0
      %723 = vmatprep.subr.mxu0 0.0
      %724 = vmatpush1.msra.mxu0 0.0
      %725 = vmatprep.subr.mxu0 0.0
      %726 = vmatpush1.msra.mxu0 0.0
      %727 = vmatprep.subr.mxu0 0.0
      %728 = vmatpush1.msra.mxu0 0.0
      %729 = vmatprep.subr.mxu0 0.0
      %730 = vmatpush1.msra.mxu0 0.0
      %731 = vmatprep.subr.mxu0 0.0
      %732 = vmatpush1.msra.mxu0 0.0
      %733 = vmatprep.subr.mxu0 0.0
      %734 = vmatpush1.msra.mxu0 0.0
      %735 = vmatprep.subr.mxu0 0.0
      %736 = vmatpush1.msra.mxu0 0.0
      %737 = vmatprep.subr.mxu0 0.0
      %738 = vmatpush1.msra.mxu0 0.0
      %739 = vmatprep.subr.mxu0 0.0
      %740 = vmatpush1.msra.mxu0 0.0
      %741 = vmatprep.subr.mxu0 0.0
      %742 = vmatpush1.msra.mxu0 0.0
      %743 = vmatprep.subr.mxu0 0.0
      %744 = vmatpush1.msra.mxu0 0.0
      %745 = vmatprep.subr.mxu0 %v703
      %746 = vmatpush1.msra.mxu0 %v702
      %747 = vmatprep.subr.mxu0 0.0
      %748 = vmatpush2.msra.mxu0 0.0
      %749 = vmatprep.subr.mxu0 0.0
      %750 = vmatpush2.msra.mxu0 0.0
      %751 = vmatprep.subr.mxu0 0.0
      %752 = vmatpush2.msra.mxu0 0.0
      %753 = vmatprep.subr.mxu0 0.0
      %754 = vmatpush2.msra.mxu0 0.0
      %755 = vmatprep.subr.mxu0 0.0
      %756 = vmatpush2.msra.mxu0 0.0
      %757 = vmatprep.subr.mxu0 0.0
      %758 = vmatpush2.msra.mxu0 0.0
      %759 = vmatprep.subr.mxu0 0.0
      %760 = vmatpush2.msra.mxu0 0.0
      %761 = vmatprep.subr.mxu0 0.0
      %762 = vmatpush2.msra.mxu0 0.0
      %763 = vmatprep.subr.mxu0 0.0
      %764 = vmatpush2.msra.mxu0 0.0
      %765 = vmatprep.subr.mxu0 0.0
      %766 = vmatpush2.msra.mxu0 0.0
      %767 = vmatprep.subr.mxu0 0.0
      %768 = vmatpush2.msra.mxu0 0.0
      %769 = vmatprep.subr.mxu0 0.0
      %770 = vmatpush2.msra.mxu0 0.0
      %771 = vmatprep.subr.mxu0 0.0
      %772 = vmatpush2.msra.mxu0 0.0
      %773 = vmatprep.subr.mxu0 0.0
      %774 = vmatpush2.msra.mxu0 0.0
      %775 = vmatprep.subr.mxu0 0.0
      %776 = vmatpush2.msra.mxu0 0.0
      %777 = vmatprep.subr.mxu0 0.0
      %778 = vmatpush2.msra.mxu0 0.0
      %779 = vmatprep.mubr.f32.mxu0 0.0
      %780 = vmatmul.mubr.f32.gmra.mxu0 %v713
      %v781 = vpop.f32.mrf.mxu0
      %v782 = vadd.f32 %v709, %v781
      %v783 = vpop.f32.mrf.mxu0
      %v784 = vadd.f32 %v709, %v783
      %785 = vdwg.mxu0
      %v787 = vadd.f32 %v782, %v306
      %v788 = vadd.f32 %v784, %v315
      %v791 = vcombine.low %v787, %v788
      %793 = vst [vmem:[%s305] sm:$0xff] %v791
      %p794 = scmp.lt.s32.totalorder %s19, 1
      %s795 = scalar_select %p794, %s19, 1
      %s796 = smul.addr %s795, 2
      %s797 = smul.addr %s796, 4
      %s798 = scalar_lea.vmem %s8, %s797
      // Predicated region
      $region53: #{hourglass2d.14} parent=51 // pred_check
        %p799 = pneg %p210
      $region54: #{hourglass2d.14} parent=51 // pred_check_branch
        %801 = sbr.rel (%p799) target = $region56
      $region55: #{hourglass2d.14} parent=51 // pred_region
        _
      $region56: #{hourglass2d.14} parent=51 // pred_fallthru
        _
    $region52: #{hourglass2d.14} parent=5 // pred_fallthru
      _
    %p802 = scmp.le.s32.totalorder 2, %s14
    // Predicated region
    $region57: #{hourglass2d.14} parent=5 // pred_check
      %p803 = pneg %p802
    $region58: #{hourglass2d.14} parent=5 // pred_check_branch
      %805 = sbr.rel (%p803) target = $region60
    $region59: #{hourglass2d.14} parent=5 // pred_region
      %s806 = ssub.s32 %s14, 2
      // Predicated region
      $region61: #{hourglass2d.14} parent=59 // pred_check
        %p807 = pneg %p216
      $region62: #{hourglass2d.14} parent=59 // pred_check_branch
        %809 = sbr.rel (%p807) target = $region64
      $region63: #{hourglass2d.14} parent=59 // pred_region
        %p810 = scmp.lt.s32.totalorder %s20, 1
        %s811 = scalar_select %p810, %s20, 1
        %s812 = smul.addr %s811, 2
        %s813 = smul.addr %s812, 4
        %s814 = scalar_lea.vmem %s8, %s813
      $region64: #{hourglass2d.14} parent=59 // pred_fallthru
        _
    $region60: #{hourglass2d.14} parent=5 // pred_fallthru
      _
  $region6: #{hourglass2d.14} parent=0 // loop_footer
    %s18 = sadd.s32 1, %s14
  $region7: #{hourglass2d.14} parent=0 // loop_footer_branch
    %13 = sbr.rel target = $region3
  $region8: #{hourglass2d.14} parent=0 // loop_exit
    _

// kernel: hourglass2d.9
$region0: #{hourglass2d.9}
  #allocation0 [shape = 'u32[]', space=smem, size = 0x4, offset = 0x4, fixed_abs, tag = 'smem constant byte address 0x4 - core index']
  #allocation1 [shape = 'u32[144,128]{1,0:T(1,128)}', space=vmem, size = 0x12000, scoped, tag = 'internal scratch']
  %s0 = inlined_call_operand.vmem [shape: f32[2,8,64], index: 0, kind: input, shape index: {}]
  %s1 = inlined_call_operand.vmem [shape: f32[16,8], index: 1, kind: input, shape index: {}]
  %s2 = inlined_call_operand.vmem [shape: f32[16,1], index: 2, kind: input, shape index: {}]
  %s3 = inlined_call_operand.vmem [shape: f32[16,9], index: 3, kind: input, shape index: {}]
  %s4 = inlined_call_operand.vmem [shape: f32[16,1], index: 4, kind: input, shape index: {}]
  %s5 = inlined_call_operand.vmem [shape: f32[8,16], index: 5, kind: input, shape index: {}]
  %s6 = inlined_call_operand.vmem [shape: f32[8,1], index: 6, kind: input, shape index: {}]
  %s7 = inlined_call_operand.vmem [shape: f32[2,64], index: 7, kind: input, shape index: {}]
  %s8 = inlined_call_operand.vmem [shape: f32[2,8,64], index: 8, kind: output, shape index: {}]
  %s9 = sld [smem:[#allocation0]]
  $region65: #{hourglass2d.9} parent=0
    _
  %s11 = ssub.s32 1, %s9
  %s12 = scalar_select 0, %s11, %s9
  loop: start=0, step=1, limit=4
  $region2: #{hourglass2d.9} parent=0 // loop_pre_header
    _
  $region3: #{hourglass2d.9} parent=0 // loop_header
    %s14 = sphi 0, %s18
    %p15 = scmp.ge.s32.totalorder %s14, 4
    %s24 = sphi 0, %s26
    %s27 = sphi 0, %s24
    %s28 = sphi 0, %s27
    %s44 = sphi 0, %s28
    %s48 = sphi 0, %s48
    %s50 = sphi 0, %s48
    %s51 = sphi 0, %s50
    %s65 = sphi 0, %s51
    %s69 = sphi 0, %s69
    %s71 = sphi 0, %s69
    %s72 = sphi 0, %s71
    %s86 = sphi 0, %s72
    %s90 = sphi 0, %s90
    %s92 = sphi 0, %s90
    %s93 = sphi 0, %s92
    %s107 = sphi 0, %s93
    %s111 = sphi 0, %s111
    %s113 = sphi 0, %s111
    %s114 = sphi 0, %s113
    %s128 = sphi 0, %s114
    %s132 = sphi 0, %s132
    %s134 = sphi 0, %s132
    %s135 = sphi 0, %s134
    %s149 = sphi 0, %s135
    %s153 = sphi 0, %s153
    %s155 = sphi 0, %s153
    %s156 = sphi 0, %s155
    %s170 = sphi 0, %s156
    %s174 = sphi 0, %s174
    %s176 = sphi 0, %s174
    %s177 = sphi 0, %s176
    %s191 = sphi 0, %s177
    %s197 = sphi 0, %s199
    %s200 = sphi 0, %s197
    %s201 = sphi 0, %s200
    %s217 = sphi 0, %s201
  $region4: #{hourglass2d.9} parent=0 // loop_header_branch
    %17 = sbr.rel (%p15) target = $region8
  $region5: #{hourglass2d.9} parent=0 // loop_body
    %s19 = ssub.s32 %s14, 1
    %s20 = ssub.s32 %s14, 2
    %s21 = sadd.s32 %s14, 1
    %s22 = ssub.s32 %s14, %s21
    %p23 = scmp.eq.s32.totalorder %s22, 0
    %s25 = sadd.s32 %s24, 1
    %s26 = scalar_select %p23, %s24, %s25
    %p29 = pneg %p23
    %p30 = scmp.eq.s32.totalorder %s14, 1
    %p31 = por %p29, %p30
    %p32 = scmp.ne.s32.totalorder %s24, %s27
    %p33 = scmp.eq.s32.totalorder %s14, 0
    %p34 = por %p32, %p33
    %p35 = scmp.ne.s32.totalorder %s24, %s27
    %p36 = scmp.eq.s32.totalorder %s19, 1
    %p37 = por %p35, %p36
    %p38 = scmp.ne.s32.totalorder %s27, %s28
    %p39 = scmp.eq.s32.totalorder %s19, 0
    %p40 = por %p38, %p39
    %p41 = scmp.ne.s32.totalorder %s27, %s28
    %p42 = scmp.eq.s32.totalorder %s20, 1
    %p43 = por %p41, %p42
    %p45 = scmp.ne.s32.totalorder %s28, %s44
    %p46 = scmp.eq.s32.totalorder %s20, 0
    %p47 = por %p45, %p46
    %s49 = sadd.s32 %s48, 1
    %p52 = scmp.eq.s32.totalorder %s14, 1
    %p53 = scmp.ne.s32.totalorder %s48, %s50
    %p54 = scmp.eq.s32.totalorder %s14, 0
    %p55 = por %p53, %p54
    %p56 = scmp.ne.s32.totalorder %s48, %s50
    %p57 = scmp.eq.s32.totalorder %s19, 1
    %p58 = por %p56, %p57
    %p59 = scmp.ne.s32.totalorder %s50, %s51
    %p60 = scmp.eq.s32.totalorder %s19, 0
    %p61 = por %p59, %p60
    %p62 = scmp.ne.s32.totalorder %s50, %s51
    %p63 = scmp.eq.s32.totalorder %s20, 1
    %p64 = por %p62, %p63
    %p66 = scmp.ne.s32.totalorder %s51, %s65
    %p67 = scmp.eq.s32.totalorder %s20, 0
    %p68 = por %p66, %p67
    %s70 = sadd.s32 %s69, 1
    %p73 = scmp.eq.s32.totalorder %s14, 1
    %p74 = scmp.ne.s32.totalorder %s69, %s71
    %p75 = scmp.eq.s32.totalorder %s14, 0
    %p76 = por %p74, %p75
    %p77 = scmp.ne.s32.totalorder %s69, %s71
    %p78 = scmp.eq.s32.totalorder %s19, 1
    %p79 = por %p77, %p78
    %p80 = scmp.ne.s32.totalorder %s71, %s72
    %p81 = scmp.eq.s32.totalorder %s19, 0
    %p82 = por %p80, %p81
    %p83 = scmp.ne.s32.totalorder %s71, %s72
    %p84 = scmp.eq.s32.totalorder %s20, 1
    %p85 = por %p83, %p84
    %p87 = scmp.ne.s32.totalorder %s72, %s86
    %p88 = scmp.eq.s32.totalorder %s20, 0
    %p89 = por %p87, %p88
    %s91 = sadd.s32 %s90, 1
    %p94 = scmp.eq.s32.totalorder %s14, 1
    %p95 = scmp.ne.s32.totalorder %s90, %s92
    %p96 = scmp.eq.s32.totalorder %s14, 0
    %p97 = por %p95, %p96
    %p98 = scmp.ne.s32.totalorder %s90, %s92
    %p99 = scmp.eq.s32.totalorder %s19, 1
    %p100 = por %p98, %p99
    %p101 = scmp.ne.s32.totalorder %s92, %s93
    %p102 = scmp.eq.s32.totalorder %s19, 0
    %p103 = por %p101, %p102
    %p104 = scmp.ne.s32.totalorder %s92, %s93
    %p105 = scmp.eq.s32.totalorder %s20, 1
    %p106 = por %p104, %p105
    %p108 = scmp.ne.s32.totalorder %s93, %s107
    %p109 = scmp.eq.s32.totalorder %s20, 0
    %p110 = por %p108, %p109
    %s112 = sadd.s32 %s111, 1
    %p115 = scmp.eq.s32.totalorder %s14, 1
    %p116 = scmp.ne.s32.totalorder %s111, %s113
    %p117 = scmp.eq.s32.totalorder %s14, 0
    %p118 = por %p116, %p117
    %p119 = scmp.ne.s32.totalorder %s111, %s113
    %p120 = scmp.eq.s32.totalorder %s19, 1
    %p121 = por %p119, %p120
    %p122 = scmp.ne.s32.totalorder %s113, %s114
    %p123 = scmp.eq.s32.totalorder %s19, 0
    %p124 = por %p122, %p123
    %p125 = scmp.ne.s32.totalorder %s113, %s114
    %p126 = scmp.eq.s32.totalorder %s20, 1
    %p127 = por %p125, %p126
    %p129 = scmp.ne.s32.totalorder %s114, %s128
    %p130 = scmp.eq.s32.totalorder %s20, 0
    %p131 = por %p129, %p130
    %s133 = sadd.s32 %s132, 1
    %p136 = scmp.eq.s32.totalorder %s14, 1
    %p137 = scmp.ne.s32.totalorder %s132, %s134
    %p138 = scmp.eq.s32.totalorder %s14, 0
    %p139 = por %p137, %p138
    %p140 = scmp.ne.s32.totalorder %s132, %s134
    %p141 = scmp.eq.s32.totalorder %s19, 1
    %p142 = por %p140, %p141
    %p143 = scmp.ne.s32.totalorder %s134, %s135
    %p144 = scmp.eq.s32.totalorder %s19, 0
    %p145 = por %p143, %p144
    %p146 = scmp.ne.s32.totalorder %s134, %s135
    %p147 = scmp.eq.s32.totalorder %s20, 1
    %p148 = por %p146, %p147
    %p150 = scmp.ne.s32.totalorder %s135, %s149
    %p151 = scmp.eq.s32.totalorder %s20, 0
    %p152 = por %p150, %p151
    %s154 = sadd.s32 %s153, 1
    %p157 = scmp.eq.s32.totalorder %s14, 1
    %p158 = scmp.ne.s32.totalorder %s153, %s155
    %p159 = scmp.eq.s32.totalorder %s14, 0
    %p160 = por %p158, %p159
    %p161 = scmp.ne.s32.totalorder %s153, %s155
    %p162 = scmp.eq.s32.totalorder %s19, 1
    %p163 = por %p161, %p162
    %p164 = scmp.ne.s32.totalorder %s155, %s156
    %p165 = scmp.eq.s32.totalorder %s19, 0
    %p166 = por %p164, %p165
    %p167 = scmp.ne.s32.totalorder %s155, %s156
    %p168 = scmp.eq.s32.totalorder %s20, 1
    %p169 = por %p167, %p168
    %p171 = scmp.ne.s32.totalorder %s156, %s170
    %p172 = scmp.eq.s32.totalorder %s20, 0
    %p173 = por %p171, %p172
    %s175 = sadd.s32 %s174, 1
    %p178 = scmp.eq.s32.totalorder %s14, 1
    %p179 = scmp.ne.s32.totalorder %s174, %s176
    %p180 = scmp.eq.s32.totalorder %s14, 0
    %p181 = por %p179, %p180
    %p182 = scmp.ne.s32.totalorder %s174, %s176
    %p183 = scmp.eq.s32.totalorder %s19, 1
    %p184 = por %p182, %p183
    %p185 = scmp.ne.s32.totalorder %s176, %s177
    %p186 = scmp.eq.s32.totalorder %s19, 0
    %p187 = por %p185, %p186
    %p188 = scmp.ne.s32.totalorder %s176, %s177
    %p189 = scmp.eq.s32.totalorder %s20, 1
    %p190 = por %p188, %p189
    %p192 = scmp.ne.s32.totalorder %s177, %s191
    %p193 = scmp.eq.s32.totalorder %s20, 0
    %p194 = por %p192, %p193
    %s195 = ssub.s32 %s14, %s21
    %p196 = scmp.eq.s32.totalorder %s195, 0
    %s198 = sadd.s32 %s197, 1
    %s199 = scalar_select %p196, %s197, %s198
    %p202 = pneg %p196
    %p203 = scmp.eq.s32.totalorder %s14, 1
    %p204 = por %p202, %p203
    %p205 = scmp.ne.s32.totalorder %s197, %s200
    %p206 = scmp.eq.s32.totalorder %s14, 0
    %p207 = por %p205, %p206
    %p208 = scmp.ne.s32.totalorder %s197, %s200
    %p209 = scmp.eq.s32.totalorder %s19, 1
    %p210 = por %p208, %p209
    %p211 = scmp.ne.s32.totalorder %s200, %s201
    %p212 = scmp.eq.s32.totalorder %s19, 0
    %p213 = por %p211, %p212
    %p214 = scmp.ne.s32.totalorder %s200, %s201
    %p215 = scmp.eq.s32.totalorder %s20, 1
    %p216 = por %p214, %p215
    %p218 = scmp.ne.s32.totalorder %s201, %s217
    %p219 = scmp.eq.s32.totalorder %s20, 0
    %p220 = por %p218, %p219
    %p221 = scmp.le.s32.totalorder 1, %s14
    %p222 = scmp.lt.s32.totalorder %s14, 3
    %p223 = pnand %p221, %p222
    %p224 = pneg %p223
    // Predicated region
    $region9: #{hourglass2d.9} parent=5 // pred_check
      _
    $region10: #{hourglass2d.9} parent=5 // pred_check_branch
      %226 = sbr.rel (%p223) target = $region12
    $region11: #{hourglass2d.9} parent=5 // pred_region
      %s227 = ssub.s32 %s14, 1
      // Predicated region
      $region13: #{hourglass2d.9} parent=11 // pred_check
        %p228 = pneg %p61
      $region14: #{hourglass2d.9} parent=11 // pred_check_branch
        %230 = sbr.rel (%p228) target = $region16
      $region15: #{hourglass2d.9} parent=11 // pred_region
        _
      $region16: #{hourglass2d.9} parent=11 // pred_fallthru
        _
      // Predicated region
      $region17: #{hourglass2d.9} parent=11 // pred_check
        %p231 = pneg %p82
      $region18: #{hourglass2d.9} parent=11 // pred_check_branch
        %233 = sbr.rel (%p231) target = $region20
      $region19: #{hourglass2d.9} parent=11 // pred_region
        _
      $region20: #{hourglass2d.9} parent=11 // pred_fallthru
        _
      // Predicated region
      $region21: #{hourglass2d.9} parent=11 // pred_check
        %p234 = pneg %p103
      $region22: #{hourglass2d.9} parent=11 // pred_check_branch
        %236 = sbr.rel (%p234) target = $region24
      $region23: #{hourglass2d.9} parent=11 // pred_region
        _
      $region24: #{hourglass2d.9} parent=11 // pred_fallthru
        _
      // Predicated region
      $region25: #{hourglass2d.9} parent=11 // pred_check
        %p237 = pneg %p124
      $region26: #{hourglass2d.9} parent=11 // pred_check_branch
        %239 = sbr.rel (%p237) target = $region28
      $region27: #{hourglass2d.9} parent=11 // pred_region
        _
      $region28: #{hourglass2d.9} parent=11 // pred_fallthru
        _
      // Predicated region
      $region29: #{hourglass2d.9} parent=11 // pred_check
        %p240 = pneg %p145
      $region30: #{hourglass2d.9} parent=11 // pred_check_branch
        %242 = sbr.rel (%p240) target = $region32
      $region31: #{hourglass2d.9} parent=11 // pred_region
        _
      $region32: #{hourglass2d.9} parent=11 // pred_fallthru
        _
      // Predicated region
      $region33: #{hourglass2d.9} parent=11 // pred_check
        %p243 = pneg %p166
      $region34: #{hourglass2d.9} parent=11 // pred_check_branch
        %245 = sbr.rel (%p243) target = $region36
      $region35: #{hourglass2d.9} parent=11 // pred_region
        _
      $region36: #{hourglass2d.9} parent=11 // pred_fallthru
        _
      // Predicated region
      $region37: #{hourglass2d.9} parent=11 // pred_check
        %p246 = pneg %p187
      $region38: #{hourglass2d.9} parent=11 // pred_check_branch
        %248 = sbr.rel (%p246) target = $region40
      $region39: #{hourglass2d.9} parent=11 // pred_region
        _
      $region40: #{hourglass2d.9} parent=11 // pred_fallthru
        _
    $region12: #{hourglass2d.9} parent=5 // pred_fallthru
      _
    %p249 = scmp.lt.s32.totalorder %s14, 2
    // Predicated region
    $region41: #{hourglass2d.9} parent=5 // pred_check
      %p250 = pneg %p249
    $region42: #{hourglass2d.9} parent=5 // pred_check_branch
      %252 = sbr.rel (%p250) target = $region44
    $region43: #{hourglass2d.9} parent=5 // pred_region
      // Predicated region
      $region45: #{hourglass2d.9} parent=43 // pred_check
        %p253 = pneg %p34
      $region46: #{hourglass2d.9} parent=43 // pred_check_branch
        %255 = sbr.rel (%p253) target = $region48
      $region47: #{hourglass2d.9} parent=43 // pred_region
        %p256 = scmp.lt.s32.totalorder %s14, 1
        %s257 = scalar_select %p256, %s14, 1
        %s258 = smul.addr %s257, 8
        %s259 = scalar_lea.vmem %s0, %s258
      $region48: #{hourglass2d.9} parent=43 // pred_fallthru
        _
    $region44: #{hourglass2d.9} parent=5 // pred_fallthru
      _
    %p260 = scmp.le.s32.totalorder 1, %s14
    %p261 = scmp.lt.s32.totalorder %s14, 3
    %p262 = pnand %p260, %p261
    %p263 = pneg %p262
    // Predicated region
    $region49: #{hourglass2d.9} parent=5 // pred_check
      _
    $region50: #{hourglass2d.9} parent=5 // pred_check_branch
      %265 = sbr.rel (%p262) target = $region52
    $region51: #{hourglass2d.9} parent=5 // pred_region
      %s266 = ssub.s32 %s14, 1
      %p267 = scmp.lt.s32.totalorder %s19, 1
      %s268 = scalar_select %p267, %s19, 1
      %s269 = smul.addr %s268, 8
      %s270 = scalar_lea.vmem %s0, %s269
      %p271 = pneg %p40
      %p272 = pneg %p37
      %p273 = pneg %p61
      %p274 = pneg %p58
      %p275 = pneg %p82
      %p276 = pneg %p79
      %p277 = pneg %p103
      %p278 = pneg %p100
      %p279 = pneg %p124
      %p280 = pneg %p121
      %p281 = pneg %p145
      %p282 = pneg %p142
      %p283 = pneg %p166
      %p284 = pneg %p163
      %p285 = pneg %p187
      %p286 = pneg %p184
      %p287 = pneg %p213
      %p288 = pneg %p210
      %p289 = scmp.lt.s32.totalorder %s19, 1
      %s290 = scalar_select %p289, %s19, 1
      %s291 = smul.addr %s290, 8
      %s292 = scalar_lea.vmem %s8, %s291
      %p293 = scmp.lt.s32.totalorder %s19, 1
      %s294 = scalar_select %p293, %s19, 1
      %s295 = smul.addr %s294, 8
      %s296 = scalar_lea.vmem %s0, %s295
      %p297 = scmp.lt.s32.totalorder %s19, 1
      %s298 = scalar_select %p297, %s19, 1
      %s299 = smul.addr %s298, 8
      %s300 = scalar_lea.vmem %s8, %s299
      %v301 = vld [vmem:[%s296] sm:$0xff]
      %v302 = vld [vmem:[%s1] sm:$0xff]
      %v303 = vld [vmem:[%s1 + $0x8] sm:$0xff]
      %v304 = vld [vmem:[%s2] sm:$0xff]
      %v305 = vld [vmem:[%s2 + $0x8] sm:$0xff]
      %307 = vset.pattern.permute.xlu0 0
      %308 = vperm.xlu0 %307, %v304
      %v309 = vpop.permute.xlu0 %308
      %312 = vset.pattern.permute.xlu0 0
      %313 = vperm.xlu0 %312, %v305
      %v314 = vpop.permute.xlu0 %313
      %vm316 = vcmask 64512
      %v318 = vsel %vm316, %v302, 0
      %v321 = vsel %vm316, %v303, 0
      %323 = vmatprep.subr.mxu0 0.0
      %324 = vmatpush1.msra.mxu0 0.0
      %325 = vmatprep.subr.mxu0 0.0
      %326 = vmatpush1.msra.mxu0 0.0
      %327 = vmatprep.subr.mxu0 0.0
      %328 = vmatpush1.msra.mxu0 0.0
      %329 = vmatprep.subr.mxu0 0.0
      %330 = vmatpush1.msra.mxu0 0.0
      %331 = vmatprep.subr.mxu0 0.0
      %332 = vmatpush1.msra.mxu0 0.0
      %333 = vmatprep.subr.mxu0 0.0
      %334 = vmatpush1.msra.mxu0 0.0
      %335 = vmatprep.subr.mxu0 0.0
      %336 = vmatpush1.msra.mxu0 0.0
      %337 = vmatprep.subr.mxu0 0.0
      %338 = vmatpush1.msra.mxu0 0.0
      %339 = vmatprep.subr.mxu0 0.0
      %340 = vmatpush1.msra.mxu0 0.0
      %341 = vmatprep.subr.mxu0 0.0
      %342 = vmatpush1.msra.mxu0 0.0
      %343 = vmatprep.subr.mxu0 0.0
      %344 = vmatpush1.msra.mxu0 0.0
      %345 = vmatprep.subr.mxu0 0.0
      %346 = vmatpush1.msra.mxu0 0.0
      %347 = vmatprep.subr.mxu0 0.0
      %348 = vmatpush1.msra.mxu0 0.0
      %349 = vmatprep.subr.mxu0 0.0
      %350 = vmatpush1.msra.mxu0 0.0
      %351 = vmatprep.subr.mxu0 0.0
      %352 = vmatpush1.msra.mxu0 0.0
      %353 = vmatprep.subr.mxu0 0.0
      %354 = vmatpush1.msra.mxu0 %v301
      %355 = vmatprep.subr.mxu0 0.0
      %356 = vmatpush2.msra.mxu0 0.0
      %357 = vmatprep.subr.mxu0 0.0
      %358 = vmatpush2.msra.mxu0 0.0
      %359 = vmatprep.subr.mxu0 0.0
      %360 = vmatpush2.msra.mxu0 0.0
      %361 = vmatprep.subr.mxu0 0.0
      %362 = vmatpush2.msra.mxu0 0.0
      %363 = vmatprep.subr.mxu0 0.0
      %364 = vmatpush2.msra.mxu0 0.0
      %365 = vmatprep.subr.mxu0 0.0
      %366 = vmatpush2.msra.mxu0 0.0
      %367 = vmatprep.subr.mxu0 0.0
      %368 = vmatpush2.msra.mxu0 0.0
      %369 = vmatprep.subr.mxu0 0.0
      %370 = vmatpush2.msra.mxu0 0.0
      %371 = vmatprep.subr.mxu0 0.0
      %372 = vmatpush2.msra.mxu0 0.0
      %373 = vmatprep.subr.mxu0 0.0
      %374 = vmatpush2.msra.mxu0 0.0
      %375 = vmatprep.subr.mxu0 0.0
      %376 = vmatpush2.msra.mxu0 0.0
      %377 = vmatprep.subr.mxu0 0.0
      %378 = vmatpush2.msra.mxu0 0.0
      %379 = vmatprep.subr.mxu0 0.0
      %380 = vmatpush2.msra.mxu0 0.0
      %381 = vmatprep.subr.mxu0 0.0
      %382 = vmatpush2.msra.mxu0 0.0
      %383 = vmatprep.subr.mxu0 0.0
      %384 = vmatpush2.msra.mxu0 0.0
      %385 = vmatprep.subr.mxu0 0.0
      %386 = vmatpush2.msra.mxu0 0.0
      %387 = vmatprep.mubr.f32.mxu0 0.0
      %388 = vmatmul.mubr.f32.gmra.mxu0 %v318
      %v389 = vpop.f32.mrf.mxu0
      %v390 = vadd.f32 %v309, %v389
      %v391 = vpop.f32.mrf.mxu0
      %392 = vmatprep.mubr.f32.mxu0 0.0
      %393 = vmatmul.mubr.f32.gmra.mxu0 %v321
      %v394 = vpop.f32.mrf.mxu0
      %v395 = vadd.f32 %v314, %v394
      %v396 = vpop.f32.mrf.mxu0
      %397 = vdwg.mxu0
      %v398 = vmax.f32 %v390, 0.0
      %v399 = vmax.f32 %v395, 0.0
      %v400 = vmin.f32 %v398, 6.0
      %v401 = vmin.f32 %v399, 6.0
      %404 = vrot.lane.b32.xlu0 %v400, 9
      %v405 = vpop.permute.xlu0 %404
      %406 = vrot.lane.b32.xlu0 %v401, 9
      %v407 = vpop.permute.xlu0 %406
      %vm410 = vcmask 72704
      %v411 = vsel %vm410, 0.0, %v405
      %v412 = vsel %vm410, 0.0, %v407
      %vm413 = vcmask 596992
      %v414 = vsel %vm413, %v411, 0.0
      %v415 = vsel %vm413, %v412, 0.0
      %v416 = vld [vmem:[%s3] sm:$0xff]
      %v417 = vld [vmem:[%s3 + $0x8] sm:$0xff]
      %v418 = vld [vmem:[%s7] sm:$0x1]
      %v419 = vld [vmem:[%s7 + $0x1] sm:$0x1]
      %v420 = vlaneseq
      %v421 = vshrl.u32 %v420, 7
      %v422 = vsub.s32 0, %v421
      %v423 = vrot.slane %v418, %v422
      %v424 = vmul.f32 %v414, %v423
      %v425 = vmul.f32 %v415, %v423
      %427 = vset.pattern.permute.xlu0 0
      %428 = vperm.xlu0 %427, %v416
      %v429 = vpop.permute.xlu0 %428
      %432 = vset.pattern.permute.xlu0 0
      %433 = vperm.xlu0 %432, %v417
      %v434 = vpop.permute.xlu0 %433
      %v436 = vmul.f32 %v424, %v429
      %v437 = vmul.f32 %v425, %v434
      %v438 = vadd.f32 %v436, 0.0
      %v439 = vadd.f32 %v437, 0.0
      %440 = vset.pattern.permute.xlu0 1
      %441 = vperm.xlu0 %440, %v416
      %v442 = vpop.permute.xlu0 %441
      %444 = vset.pattern.permute.xlu0 1
      %445 = vperm.xlu0 %444, %v417
      %v446 = vpop.permute.xlu0 %445
      %v448 = vmul.f32 %v414, %v442
      %v449 = vmul.f32 %v415, %v446
      %452 = vrot.lane.b32.xlu0 %v448, 127
      %v453 = vpop.permute.xlu0 %452
      %454 = vrot.lane.b32.xlu0 %v449, 127
      %v455 = vpop.permute.xlu0 %454
      %v458 = vadd.f32 %v438, %v453
      %v459 = vadd.f32 %v439, %v455
      %v460 = vlaneseq
      %v461 = vshrl.u32 %v460, 7
      %v462 = vsub.s32 0, %v461
      %v463 = vrot.slane %v419, %v462
      %465 = vrot.lane.b32.xlu0 %v463, 2
      %v466 = vpop.permute.xlu0 %465
      %v468 = vmul.f32 %v414, %v466
      %v469 = vmul.f32 %v415, %v466
      %470 = vset.pattern.permute.xlu0 2
      %471 = vperm.xlu0 %470, %v416
      %v472 = vpop.permute.xlu0 %471
      %474 = vset.pattern.permute.xlu0 2
      %475 = vperm.xlu0 %474, %v417
      %v476 = vpop.permute.xlu0 %475
      %v478 = vmul.f32 %v468, %v472
      %v479 = vmul.f32 %v469, %v476
      %482 = vrot.lane.b32.xlu0 %v478, 126
      %v483 = vpop.permute.xlu0 %482
      %484 = vrot.lane.b32.xlu0 %v479, 126
      %v485 = vpop.permute.xlu0 %484
      %v488 = vadd.f32 %v458, %v483
      %v489 = vadd.f32 %v459, %v485
      %491 = vrot.lane.b32.xlu0 %v423, 8
      %v492 = vpop.permute.xlu0 %491
      %v494 = vmul.f32 %v414, %v492
      %v495 = vmul.f32 %v415, %v492
      %496 = vset.pattern.permute.xlu0 3
      %497 = vperm.xlu0 %496, %v416
      %v498 = vpop.permute.xlu0 %497
      %500 = vset.pattern.permute.xlu0 3
      %501 = vperm.xlu0 %500, %v417
      %v502 = vpop.permute.xlu0 %501
      %v504 = vmul.f32 %v494, %v498
      %v505 = vmul.f32 %v495, %v502
      %508 = vrot.lane.b32.xlu0 %v504, 120
      %v509 = vpop.permute.xlu0 %508
      %510 = vrot.lane.b32.xlu0 %v505, 120
      %v511 = vpop.permute.xlu0 %510
      %v514 = vadd.f32 %v488, %v509
      %v515 = vadd.f32 %v489, %v511
      %516 = vset.pattern.permute.xlu0 4
      %517 = vperm.xlu0 %516, %v416
      %v518 = vpop.permute.xlu0 %517
      %520 = vset.pattern.permute.xlu0 4
      %521 = vperm.xlu0 %520, %v417
      %v522 = vpop.permute.xlu0 %521
      %v524 = vmul.f32 %v414, %v518
      %v525 = vmul.f32 %v415, %v522
      %528 = vrot.lane.b32.xlu0 %v524, 119
      %v529 = vpop.permute.xlu0 %528
      %530 = vrot.lane.b32.xlu0 %v525, 119
      %v531 = vpop.permute.xlu0 %530
      %v534 = vadd.f32 %v514, %v529
      %v535 = vadd.f32 %v515, %v531
      %536 = vrot.lane.b32.xlu0 %v463, 10
      %v537 = vpop.permute.xlu0 %536
      %v539 = vmul.f32 %v414, %v537
      %v540 = vmul.f32 %v415, %v537
      %541 = vset.pattern.permute.xlu0 5
      %542 = vperm.xlu0 %541, %v416
      %v543 = vpop.permute.xlu0 %542
      %545 = vset.pattern.permute.xlu0 5
      %546 = vperm.xlu0 %545, %v417
      %v547 = vpop.permute.xlu0 %546
      %v549 = vmul.f32 %v539, %v543
      %v550 = vmul.f32 %v540, %v547
      %553 = vrot.lane.b32.xlu0 %v549, 118
      %v554 = vpop.permute.xlu0 %553
      %555 = vrot.lane.b32.xlu0 %v550, 118
      %v556 = vpop.permute.xlu0 %555
      %v559 = vadd.f32 %v534, %v554
      %v560 = vadd.f32 %v535, %v556
      %561 = vrot.lane.b32.xlu0 %v423, 16
      %v562 = vpop.permute.xlu0 %561
      %v564 = vmul.f32 %v414, %v562
      %v565 = vmul.f32 %v415, %v562
      %566 = vset.pattern.permute.xlu0 6
      %567 = vperm.xlu0 %566, %v416
      %v568 = vpop.permute.xlu0 %567
      %570 = vset.pattern.permute.xlu0 6
      %571 = vperm.xlu0 %570, %v417
      %v572 = vpop.permute.xlu0 %571
      %v574 = vmul.f32 %v564, %v568
      %v575 = vmul.f32 %v565, %v572
      %578 = vrot.lane.b32.xlu0 %v574, 112
      %v579 = vpop.permute.xlu0 %578
      %580 = vrot.lane.b32.xlu0 %v575, 112
      %v581 = vpop.permute.xlu0 %580
      %v584 = vadd.f32 %v559, %v579
      %v585 = vadd.f32 %v560, %v581
      %586 = vset.pattern.permute.xlu0 7
      %587 = vperm.xlu0 %586, %v416
      %v588 = vpop.permute.xlu0 %587
      %590 = vset.pattern.permute.xlu0 7
      %591 = vperm.xlu0 %590, %v417
      %v592 = vpop.permute.xlu0 %591
      %v594 = vmul.f32 %v414, %v588
      %v595 = vmul.f32 %v415, %v592
      %598 = vrot.lane.b32.xlu0 %v594, 111
      %v599 = vpop.permute.xlu0 %598
      %600 = vrot.lane.b32.xlu0 %v595, 111
      %v601 = vpop.permute.xlu0 %600
      %v604 = vadd.f32 %v584, %v599
      %v605 = vadd.f32 %v585, %v601
      %606 = vrot.lane.b32.xlu0 %v463, 18
      %v607 = vpop.permute.xlu0 %606
      %v609 = vmul.f32 %v414, %v607
      %v610 = vmul.f32 %v415, %v607
      %611 = vset.pattern.permute.xlu0 8
      %612 = vperm.xlu0 %611, %v416
      %v613 = vpop.permute.xlu0 %612
      %615 = vset.pattern.permute.xlu0 8
      %616 = vperm.xlu0 %615, %v417
      %v617 = vpop.permute.xlu0 %616
      %v619 = vmul.f32 %v609, %v613
      %v620 = vmul.f32 %v610, %v617
      %623 = vrot.lane.b32.xlu0 %v619, 110
      %v624 = vpop.permute.xlu0 %623
      %625 = vrot.lane.b32.xlu0 %v620, 110
      %v626 = vpop.permute.xlu0 %625
      %v629 = vadd.f32 %v604, %v624
      %v630 = vadd.f32 %v605, %v626
      %v631 = vld [vmem:[%s4] sm:$0xff]
      %v632 = vld [vmem:[%s4 + $0x8] sm:$0xff]
      %634 = vset.pattern.permute.xlu0 0
      %635 = vperm.xlu0 %634, %v631
      %v636 = vpop.permute.xlu0 %635
      %639 = vset.pattern.permute.xlu0 0
      %640 = vperm.xlu0 %639, %v632
      %v641 = vpop.permute.xlu0 %640
      %v643 = vadd.f32 %v629, %v636
      %v644 = vadd.f32 %v630, %v641
      %v645 = vmax.f32 %v643, 0.0
      %v646 = vmax.f32 %v644, 0.0
      %v647 = vmin.f32 %v645, 6.0
      %v648 = vmin.f32 %v646, 6.0
      %v649 = vld [vmem:[%s5] sm:$0xff]
      %v650 = vld [vmem:[%s6] sm:$0xff]
      %652 = vset.pattern.permute.xlu0 0
      %653 = vperm.xlu0 %652, %v650
      %v654 = vpop.permute.xlu0 %653
      %vm656 = vcmask 130048
      %v658 = vsel %vm656, %v649, 0
      %660 = vmatprep.subr.mxu0 0.0
      %661 = vmatpush1.msra.mxu0 0.0
      %662 = vmatprep.subr.mxu0 0.0
      %663 = vmatpush1.msra.mxu0 0.0
      %664 = vmatprep.subr.mxu0 0.0
      %665 = vmatpush1.msra.mxu0 0.0
      %666 = vmatprep.subr.mxu0 0.0
      %667 = vmatpush1.msra.mxu0 0.0
      %668 = vmatprep.subr.mxu0 0.0
      %669 = vmatpush1.msra.mxu0 0.0
      %670 = vmatprep.subr.mxu0 0.0
      %671 = vmatpush1.msra.mxu0 0.0
      %672 = vmatprep.subr.mxu0 0.0
      %673 = vmatpush1.msra.mxu0 0.0
      %674 = vmatprep.subr.mxu0 0.0
      %675 = vmatpush1.msra.mxu0 0.0
      %676 = vmatprep.subr.mxu0 0.0
      %677 = vmatpush1.msra.mxu0 0.0
      %678 = vmatprep.subr.mxu0 0.0
      %679 = vmatpush1.msra.mxu0 0.0
      %680 = vmatprep.subr.mxu0 0.0
      %681 = vmatpush1.msra.mxu0 0.0
      %682 = vmatprep.subr.mxu0 0.0
      %683 = vmatpush1.msra.mxu0 0.0
      %684 = vmatprep.subr.mxu0 0.0
      %685 = vmatpush1.msra.mxu0 0.0
      %686 = vmatprep.subr.mxu0 0.0
      %687 = vmatpush1.msra.mxu0 0.0
      %688 = vmatprep.subr.mxu0 0.0
      %689 = vmatpush1.msra.mxu0 %v648
      %690 = vmatprep.subr.mxu0 0.0
      %691 = vmatpush1.msra.mxu0 %v647
      %692 = vmatprep.subr.mxu0 0.0
      %693 = vmatpush2.msra.mxu0 0.0
      %694 = vmatprep.subr.mxu0 0.0
      %695 = vmatpush2.msra.mxu0 0.0
      %696 = vmatprep.subr.mxu0 0.0
      %697 = vmatpush2.msra.mxu0 0.0
      %698 = vmatprep.subr.mxu0 0.0
      %699 = vmatpush2.msra.mxu0 0.0
      %700 = vmatprep.subr.mxu0 0.0
      %701 = vmatpush2.msra.mxu0 0.0
      %702 = vmatprep.subr.mxu0 0.0
      %703 = vmatpush2.msra.mxu0 0.0
      %704 = vmatprep.subr.mxu0 0.0
      %705 = vmatpush2.msra.mxu0 0.0
      %706 = vmatprep.subr.mxu0 0.0
      %707 = vmatpush2.msra.mxu0 0.0
      %708 = vmatprep.subr.mxu0 0.0
      %709 = vmatpush2.msra.mxu0 0.0
      %710 = vmatprep.subr.mxu0 0.0
      %711 = vmatpush2.msra.mxu0 0.0
      %712 = vmatprep.subr.mxu0 0.0
      %713 = vmatpush2.msra.mxu0 0.0
      %714 = vmatprep.subr.mxu0 0.0
      %715 = vmatpush2.msra.mxu0 0.0
      %716 = vmatprep.subr.mxu0 0.0
      %717 = vmatpush2.msra.mxu0 0.0
      %718 = vmatprep.subr.mxu0 0.0
      %719 = vmatpush2.msra.mxu0 0.0
      %720 = vmatprep.subr.mxu0 0.0
      %721 = vmatpush2.msra.mxu0 0.0
      %722 = vmatprep.subr.mxu0 0.0
      %723 = vmatpush2.msra.mxu0 0.0
      %724 = vmatprep.mubr.f32.mxu0 0.0
      %725 = vmatmul.mubr.f32.gmra.mxu0 %v658
      %v726 = vpop.f32.mrf.mxu0
      %v727 = vadd.f32 %v654, %v726
      %v728 = vpop.f32.mrf.mxu0
      %729 = vdwg.mxu0
      %v730 = vadd.f32 %v727, %v301
      %vm731 = vcmask 523264
      %732 = vst.msk [vmem:[%s300] sm:$0xff] %vm731, %v730
      %p733 = scmp.lt.s32.totalorder %s19, 1
      %s734 = scalar_select %p733, %s19, 1
      %s735 = smul.addr %s734, 8
      %s736 = scalar_lea.vmem %s8, %s735
      // Predicated region
      $region53: #{hourglass2d.9} parent=51 // pred_check
        %p737 = pneg %p210
      $region54: #{hourglass2d.9} parent=51 // pred_check_branch
        %739 = sbr.rel (%p737) target = $region56
      $region55: #{hourglass2d.9} parent=51 // pred_region
        _
      $region56: #{hourglass2d.9} parent=51 // pred_fallthru
        _
    $region52: #{hourglass2d.9} parent=5 // pred_fallthru
      _
    %p740 = scmp.le.s32.totalorder 2, %s14
    // Predicated region
    $region57: #{hourglass2d.9} parent=5 // pred_check
      %p741 = pneg %p740
    $region58: #{hourglass2d.9} parent=5 // pred_check_branch
      %743 = sbr.rel (%p741) target = $region60
    $region59: #{hourglass2d.9} parent=5 // pred_region
      %s744 = ssub.s32 %s14, 2
      // Predicated region
      $region61: #{hourglass2d.9} parent=59 // pred_check
        %p745 = pneg %p216
      $region62: #{hourglass2d.9} parent=59 // pred_check_branch
        %747 = sbr.rel (%p745) target = $region64
      $region63: #{hourglass2d.9} parent=59 // pred_region
        %p748 = scmp.lt.s32.totalorder %s20, 1
        %s749 = scalar_select %p748, %s20, 1
        %s750 = smul.addr %s749, 8
        %s751 = scalar_lea.vmem %s8, %s750
      $region64: #{hourglass2d.9} parent=59 // pred_fallthru
        _
    $region60: #{hourglass2d.9} parent=5 // pred_fallthru
      _
  $region6: #{hourglass2d.9} parent=0 // loop_footer
    %s18 = sadd.s32 1, %s14
  $region7: #{hourglass2d.9} parent=0 // loop_footer_branch
    %13 = sbr.rel target = $region3
  $region8: #{hourglass2d.9} parent=0 // loop_exit
    _

// kernel: hourglass2d.8
$region0: #{hourglass2d.8}
  #allocation0 [shape = 'u32[]', space=smem, size = 0x4, offset = 0x4, fixed_abs, tag = 'smem constant byte address 0x4 - core index']
  #allocation1 [shape = 'u32[144,128]{1,0:T(1,128)}', space=vmem, size = 0x12000, scoped, tag = 'internal scratch']
  %s0 = inlined_call_operand.vmem [shape: f32[2,4,256], index: 0, kind: input, shape index: {}]
  %s1 = inlined_call_operand.vmem [shape: f32[8,4], index: 1, kind: input, shape index: {}]
  %s2 = inlined_call_operand.vmem [shape: f32[8,1], index: 2, kind: input, shape index: {}]
  %s3 = inlined_call_operand.vmem [shape: f32[8,9], index: 3, kind: input, shape index: {}]
  %s4 = inlined_call_operand.vmem [shape: f32[8,1], index: 4, kind: input, shape index: {}]
  %s5 = inlined_call_operand.vmem [shape: f32[8,8], index: 5, kind: input, shape index: {}]
  %s6 = inlined_call_operand.vmem [shape: f32[8,1], index: 6, kind: input, shape index: {}]
  %s7 = inlined_call_operand.vmem [shape: f32[2,64], index: 7, kind: input, shape index: {}]
  %s8 = inlined_call_operand.vmem [shape: f32[2,8,64], index: 8, kind: output, shape index: {}]
  %s9 = sld [smem:[#allocation0]]
  $region65: #{hourglass2d.8} parent=0
    _
  %s11 = ssub.s32 1, %s9
  %s12 = scalar_select 0, %s11, %s9
  loop: start=0, step=1, limit=4
  $region2: #{hourglass2d.8} parent=0 // loop_pre_header
    _
  $region3: #{hourglass2d.8} parent=0 // loop_header
    %s14 = sphi 0, %s18
    %p15 = scmp.ge.s32.totalorder %s14, 4
    %s24 = sphi 0, %s26
    %s27 = sphi 0, %s24
    %s28 = sphi 0, %s27
    %s44 = sphi 0, %s28
    %s48 = sphi 0, %s48
    %s50 = sphi 0, %s48
    %s51 = sphi 0, %s50
    %s65 = sphi 0, %s51
    %s69 = sphi 0, %s69
    %s71 = sphi 0, %s69
    %s72 = sphi 0, %s71
    %s86 = sphi 0, %s72
    %s90 = sphi 0, %s90
    %s92 = sphi 0, %s90
    %s93 = sphi 0, %s92
    %s107 = sphi 0, %s93
    %s111 = sphi 0, %s111
    %s113 = sphi 0, %s111
    %s114 = sphi 0, %s113
    %s128 = sphi 0, %s114
    %s132 = sphi 0, %s132
    %s134 = sphi 0, %s132
    %s135 = sphi 0, %s134
    %s149 = sphi 0, %s135
    %s153 = sphi 0, %s153
    %s155 = sphi 0, %s153
    %s156 = sphi 0, %s155
    %s170 = sphi 0, %s156
    %s174 = sphi 0, %s174
    %s176 = sphi 0, %s174
    %s177 = sphi 0, %s176
    %s191 = sphi 0, %s177
    %s197 = sphi 0, %s199
    %s200 = sphi 0, %s197
    %s201 = sphi 0, %s200
    %s217 = sphi 0, %s201
  $region4: #{hourglass2d.8} parent=0 // loop_header_branch
    %17 = sbr.rel (%p15) target = $region8
  $region5: #{hourglass2d.8} parent=0 // loop_body
    %s19 = ssub.s32 %s14, 1
    %s20 = ssub.s32 %s14, 2
    %s21 = sadd.s32 %s14, 1
    %s22 = ssub.s32 %s14, %s21
    %p23 = scmp.eq.s32.totalorder %s22, 0
    %s25 = sadd.s32 %s24, 1
    %s26 = scalar_select %p23, %s24, %s25
    %p29 = pneg %p23
    %p30 = scmp.eq.s32.totalorder %s14, 1
    %p31 = por %p29, %p30
    %p32 = scmp.ne.s32.totalorder %s24, %s27
    %p33 = scmp.eq.s32.totalorder %s14, 0
    %p34 = por %p32, %p33
    %p35 = scmp.ne.s32.totalorder %s24, %s27
    %p36 = scmp.eq.s32.totalorder %s19, 1
    %p37 = por %p35, %p36
    %p38 = scmp.ne.s32.totalorder %s27, %s28
    %p39 = scmp.eq.s32.totalorder %s19, 0
    %p40 = por %p38, %p39
    %p41 = scmp.ne.s32.totalorder %s27, %s28
    %p42 = scmp.eq.s32.totalorder %s20, 1
    %p43 = por %p41, %p42
    %p45 = scmp.ne.s32.totalorder %s28, %s44
    %p46 = scmp.eq.s32.totalorder %s20, 0
    %p47 = por %p45, %p46
    %s49 = sadd.s32 %s48, 1
    %p52 = scmp.eq.s32.totalorder %s14, 1
    %p53 = scmp.ne.s32.totalorder %s48, %s50
    %p54 = scmp.eq.s32.totalorder %s14, 0
    %p55 = por %p53, %p54
    %p56 = scmp.ne.s32.totalorder %s48, %s50
    %p57 = scmp.eq.s32.totalorder %s19, 1
    %p58 = por %p56, %p57
    %p59 = scmp.ne.s32.totalorder %s50, %s51
    %p60 = scmp.eq.s32.totalorder %s19, 0
    %p61 = por %p59, %p60
    %p62 = scmp.ne.s32.totalorder %s50, %s51
    %p63 = scmp.eq.s32.totalorder %s20, 1
    %p64 = por %p62, %p63
    %p66 = scmp.ne.s32.totalorder %s51, %s65
    %p67 = scmp.eq.s32.totalorder %s20, 0
    %p68 = por %p66, %p67
    %s70 = sadd.s32 %s69, 1
    %p73 = scmp.eq.s32.totalorder %s14, 1
    %p74 = scmp.ne.s32.totalorder %s69, %s71
    %p75 = scmp.eq.s32.totalorder %s14, 0
    %p76 = por %p74, %p75
    %p77 = scmp.ne.s32.totalorder %s69, %s71
    %p78 = scmp.eq.s32.totalorder %s19, 1
    %p79 = por %p77, %p78
    %p80 = scmp.ne.s32.totalorder %s71, %s72
    %p81 = scmp.eq.s32.totalorder %s19, 0
    %p82 = por %p80, %p81
    %p83 = scmp.ne.s32.totalorder %s71, %s72
    %p84 = scmp.eq.s32.totalorder %s20, 1
    %p85 = por %p83, %p84
    %p87 = scmp.ne.s32.totalorder %s72, %s86
    %p88 = scmp.eq.s32.totalorder %s20, 0
    %p89 = por %p87, %p88
    %s91 = sadd.s32 %s90, 1
    %p94 = scmp.eq.s32.totalorder %s14, 1
    %p95 = scmp.ne.s32.totalorder %s90, %s92
    %p96 = scmp.eq.s32.totalorder %s14, 0
    %p97 = por %p95, %p96
    %p98 = scmp.ne.s32.totalorder %s90, %s92
    %p99 = scmp.eq.s32.totalorder %s19, 1
    %p100 = por %p98, %p99
    %p101 = scmp.ne.s32.totalorder %s92, %s93
    %p102 = scmp.eq.s32.totalorder %s19, 0
    %p103 = por %p101, %p102
    %p104 = scmp.ne.s32.totalorder %s92, %s93
    %p105 = scmp.eq.s32.totalorder %s20, 1
    %p106 = por %p104, %p105
    %p108 = scmp.ne.s32.totalorder %s93, %s107
    %p109 = scmp.eq.s32.totalorder %s20, 0
    %p110 = por %p108, %p109
    %s112 = sadd.s32 %s111, 1
    %p115 = scmp.eq.s32.totalorder %s14, 1
    %p116 = scmp.ne.s32.totalorder %s111, %s113
    %p117 = scmp.eq.s32.totalorder %s14, 0
    %p118 = por %p116, %p117
    %p119 = scmp.ne.s32.totalorder %s111, %s113
    %p120 = scmp.eq.s32.totalorder %s19, 1
    %p121 = por %p119, %p120
    %p122 = scmp.ne.s32.totalorder %s113, %s114
    %p123 = scmp.eq.s32.totalorder %s19, 0
    %p124 = por %p122, %p123
    %p125 = scmp.ne.s32.totalorder %s113, %s114
    %p126 = scmp.eq.s32.totalorder %s20, 1
    %p127 = por %p125, %p126
    %p129 = scmp.ne.s32.totalorder %s114, %s128
    %p130 = scmp.eq.s32.totalorder %s20, 0
    %p131 = por %p129, %p130
    %s133 = sadd.s32 %s132, 1
    %p136 = scmp.eq.s32.totalorder %s14, 1
    %p137 = scmp.ne.s32.totalorder %s132, %s134
    %p138 = scmp.eq.s32.totalorder %s14, 0
    %p139 = por %p137, %p138
    %p140 = scmp.ne.s32.totalorder %s132, %s134
    %p141 = scmp.eq.s32.totalorder %s19, 1
    %p142 = por %p140, %p141
    %p143 = scmp.ne.s32.totalorder %s134, %s135
    %p144 = scmp.eq.s32.totalorder %s19, 0
    %p145 = por %p143, %p144
    %p146 = scmp.ne.s32.totalorder %s134, %s135
    %p147 = scmp.eq.s32.totalorder %s20, 1
    %p148 = por %p146, %p147
    %p150 = scmp.ne.s32.totalorder %s135, %s149
    %p151 = scmp.eq.s32.totalorder %s20, 0
    %p152 = por %p150, %p151
    %s154 = sadd.s32 %s153, 1
    %p157 = scmp.eq.s32.totalorder %s14, 1
    %p158 = scmp.ne.s32.totalorder %s153, %s155
    %p159 = scmp.eq.s32.totalorder %s14, 0
    %p160 = por %p158, %p159
    %p161 = scmp.ne.s32.totalorder %s153, %s155
    %p162 = scmp.eq.s32.totalorder %s19, 1
    %p163 = por %p161, %p162
    %p164 = scmp.ne.s32.totalorder %s155, %s156
    %p165 = scmp.eq.s32.totalorder %s19, 0
    %p166 = por %p164, %p165
    %p167 = scmp.ne.s32.totalorder %s155, %s156
    %p168 = scmp.eq.s32.totalorder %s20, 1
    %p169 = por %p167, %p168
    %p171 = scmp.ne.s32.totalorder %s156, %s170
    %p172 = scmp.eq.s32.totalorder %s20, 0
    %p173 = por %p171, %p172
    %s175 = sadd.s32 %s174, 1
    %p178 = scmp.eq.s32.totalorder %s14, 1
    %p179 = scmp.ne.s32.totalorder %s174, %s176
    %p180 = scmp.eq.s32.totalorder %s14, 0
    %p181 = por %p179, %p180
    %p182 = scmp.ne.s32.totalorder %s174, %s176
    %p183 = scmp.eq.s32.totalorder %s19, 1
    %p184 = por %p182, %p183
    %p185 = scmp.ne.s32.totalorder %s176, %s177
    %p186 = scmp.eq.s32.totalorder %s19, 0
    %p187 = por %p185, %p186
    %p188 = scmp.ne.s32.totalorder %s176, %s177
    %p189 = scmp.eq.s32.totalorder %s20, 1
    %p190 = por %p188, %p189
    %p192 = scmp.ne.s32.totalorder %s177, %s191
    %p193 = scmp.eq.s32.totalorder %s20, 0
    %p194 = por %p192, %p193
    %s195 = ssub.s32 %s14, %s21
    %p196 = scmp.eq.s32.totalorder %s195, 0
    %s198 = sadd.s32 %s197, 1
    %s199 = scalar_select %p196, %s197, %s198
    %p202 = pneg %p196
    %p203 = scmp.eq.s32.totalorder %s14, 1
    %p204 = por %p202, %p203
    %p205 = scmp.ne.s32.totalorder %s197, %s200
    %p206 = scmp.eq.s32.totalorder %s14, 0
    %p207 = por %p205, %p206
    %p208 = scmp.ne.s32.totalorder %s197, %s200
    %p209 = scmp.eq.s32.totalorder %s19, 1
    %p210 = por %p208, %p209
    %p211 = scmp.ne.s32.totalorder %s200, %s201
    %p212 = scmp.eq.s32.totalorder %s19, 0
    %p213 = por %p211, %p212
    %p214 = scmp.ne.s32.totalorder %s200, %s201
    %p215 = scmp.eq.s32.totalorder %s20, 1
    %p216 = por %p214, %p215
    %p218 = scmp.ne.s32.totalorder %s201, %s217
    %p219 = scmp.eq.s32.totalorder %s20, 0
    %p220 = por %p218, %p219
    %p221 = scmp.le.s32.totalorder 1, %s14
    %p222 = scmp.lt.s32.totalorder %s14, 3
    %p223 = pnand %p221, %p222
    %p224 = pneg %p223
    // Predicated region
    $region9: #{hourglass2d.8} parent=5 // pred_check
      _
    $region10: #{hourglass2d.8} parent=5 // pred_check_branch
      %226 = sbr.rel (%p223) target = $region12
    $region11: #{hourglass2d.8} parent=5 // pred_region
      %s227 = ssub.s32 %s14, 1
      // Predicated region
      $region13: #{hourglass2d.8} parent=11 // pred_check
        %p228 = pneg %p61
      $region14: #{hourglass2d.8} parent=11 // pred_check_branch
        %230 = sbr.rel (%p228) target = $region16
      $region15: #{hourglass2d.8} parent=11 // pred_region
        _
      $region16: #{hourglass2d.8} parent=11 // pred_fallthru
        _
      // Predicated region
      $region17: #{hourglass2d.8} parent=11 // pred_check
        %p231 = pneg %p82
      $region18: #{hourglass2d.8} parent=11 // pred_check_branch
        %233 = sbr.rel (%p231) target = $region20
      $region19: #{hourglass2d.8} parent=11 // pred_region
        _
      $region20: #{hourglass2d.8} parent=11 // pred_fallthru
        _
      // Predicated region
      $region21: #{hourglass2d.8} parent=11 // pred_check
        %p234 = pneg %p103
      $region22: #{hourglass2d.8} parent=11 // pred_check_branch
        %236 = sbr.rel (%p234) target = $region24
      $region23: #{hourglass2d.8} parent=11 // pred_region
        _
      $region24: #{hourglass2d.8} parent=11 // pred_fallthru
        _
      // Predicated region
      $region25: #{hourglass2d.8} parent=11 // pred_check
        %p237 = pneg %p124
      $region26: #{hourglass2d.8} parent=11 // pred_check_branch
        %239 = sbr.rel (%p237) target = $region28
      $region27: #{hourglass2d.8} parent=11 // pred_region
        _
      $region28: #{hourglass2d.8} parent=11 // pred_fallthru
        _
      // Predicated region
      $region29: #{hourglass2d.8} parent=11 // pred_check
        %p240 = pneg %p145
      $region30: #{hourglass2d.8} parent=11 // pred_check_branch
        %242 = sbr.rel (%p240) target = $region32
      $region31: #{hourglass2d.8} parent=11 // pred_region
        _
      $region32: #{hourglass2d.8} parent=11 // pred_fallthru
        _
      // Predicated region
      $region33: #{hourglass2d.8} parent=11 // pred_check
        %p243 = pneg %p166
      $region34: #{hourglass2d.8} parent=11 // pred_check_branch
        %245 = sbr.rel (%p243) target = $region36
      $region35: #{hourglass2d.8} parent=11 // pred_region
        _
      $region36: #{hourglass2d.8} parent=11 // pred_fallthru
        _
      // Predicated region
      $region37: #{hourglass2d.8} parent=11 // pred_check
        %p246 = pneg %p187
      $region38: #{hourglass2d.8} parent=11 // pred_check_branch
        %248 = sbr.rel (%p246) target = $region40
      $region39: #{hourglass2d.8} parent=11 // pred_region
        _
      $region40: #{hourglass2d.8} parent=11 // pred_fallthru
        _
    $region12: #{hourglass2d.8} parent=5 // pred_fallthru
      _
    %p249 = scmp.lt.s32.totalorder %s14, 2
    // Predicated region
    $region41: #{hourglass2d.8} parent=5 // pred_check
      %p250 = pneg %p249
    $region42: #{hourglass2d.8} parent=5 // pred_check_branch
      %252 = sbr.rel (%p250) target = $region44
    $region43: #{hourglass2d.8} parent=5 // pred_region
      // Predicated region
      $region45: #{hourglass2d.8} parent=43 // pred_check
        %p253 = pneg %p34
      $region46: #{hourglass2d.8} parent=43 // pred_check_branch
        %255 = sbr.rel (%p253) target = $region48
      $region47: #{hourglass2d.8} parent=43 // pred_region
        %p256 = scmp.lt.s32.totalorder %s14, 1
        %s257 = scalar_select %p256, %s14, 1
        %s258 = smul.addr %s257, 2
        %s259 = smul.addr %s258, 4
        %s260 = scalar_lea.vmem %s0, %s259
      $region48: #{hourglass2d.8} parent=43 // pred_fallthru
        _
    $region44: #{hourglass2d.8} parent=5 // pred_fallthru
      _
    %p261 = scmp.le.s32.totalorder 1, %s14
    %p262 = scmp.lt.s32.totalorder %s14, 3
    %p263 = pnand %p261, %p262
    %p264 = pneg %p263
    // Predicated region
    $region49: #{hourglass2d.8} parent=5 // pred_check
      _
    $region50: #{hourglass2d.8} parent=5 // pred_check_branch
      %266 = sbr.rel (%p263) target = $region52
    $region51: #{hourglass2d.8} parent=5 // pred_region
      %s267 = ssub.s32 %s14, 1
      %p268 = scmp.lt.s32.totalorder %s19, 1
      %s269 = scalar_select %p268, %s19, 1
      %s270 = smul.addr %s269, 2
      %s271 = smul.addr %s270, 4
      %s272 = scalar_lea.vmem %s0, %s271
      %p273 = pneg %p40
      %p274 = pneg %p37
      %p275 = pneg %p61
      %p276 = pneg %p58
      %p277 = pneg %p82
      %p278 = pneg %p79
      %p279 = pneg %p103
      %p280 = pneg %p100
      %p281 = pneg %p124
      %p282 = pneg %p121
      %p283 = pneg %p145
      %p284 = pneg %p142
      %p285 = pneg %p166
      %p286 = pneg %p163
      %p287 = pneg %p187
      %p288 = pneg %p184
      %p289 = pneg %p213
      %p290 = pneg %p210
      %p291 = scmp.lt.s32.totalorder %s19, 1
      %s292 = scalar_select %p291, %s19, 1
      %s293 = smul.addr %s292, 8
      %s294 = scalar_lea.vmem %s8, %s293
      %p295 = scmp.lt.s32.totalorder %s19, 1
      %s296 = scalar_select %p295, %s19, 1
      %s297 = smul.addr %s296, 2
      %s298 = smul.addr %s297, 4
      %s299 = scalar_lea.vmem %s0, %s298
      %p300 = scmp.lt.s32.totalorder %s19, 1
      %s301 = scalar_select %p300, %s19, 1
      %s302 = smul.addr %s301, 8
      %s303 = scalar_lea.vmem %s8, %s302
      %v304 = vld [vmem:[%s299] sm:$0xff]
      %v305 = vld [vmem:[%s1] sm:$0xff]
      %v306 = vld [vmem:[%s2] sm:$0xff]
      %308 = vset.pattern.permute.xlu0 0
      %309 = vperm.xlu0 %308, %v306
      %v310 = vpop.permute.xlu0 %309
      %v313 = vcombine.high %v304, %v304
      %vm314 = vcmask 31744
      %v316 = vsel %vm314, %v305, 0
      %vm318 = vcmask 1043456
      %v319 = vsel %vm318, %v304, 0
      %v321 = vsel %vm318, %v313, 0
      %323 = vmatprep.subr.mxu0 0.0
      %324 = vmatpush1.msra.mxu0 0.0
      %325 = vmatprep.subr.mxu0 0.0
      %326 = vmatpush1.msra.mxu0 0.0
      %327 = vmatprep.subr.mxu0 0.0
      %328 = vmatpush1.msra.mxu0 0.0
      %329 = vmatprep.subr.mxu0 0.0
      %330 = vmatpush1.msra.mxu0 0.0
      %331 = vmatprep.subr.mxu0 0.0
      %332 = vmatpush1.msra.mxu0 0.0
      %333 = vmatprep.subr.mxu0 0.0
      %334 = vmatpush1.msra.mxu0 0.0
      %335 = vmatprep.subr.mxu0 0.0
      %336 = vmatpush1.msra.mxu0 0.0
      %337 = vmatprep.subr.mxu0 0.0
      %338 = vmatpush1.msra.mxu0 0.0
      %339 = vmatprep.subr.mxu0 0.0
      %340 = vmatpush1.msra.mxu0 0.0
      %341 = vmatprep.subr.mxu0 0.0
      %342 = vmatpush1.msra.mxu0 0.0
      %343 = vmatprep.subr.mxu0 0.0
      %344 = vmatpush1.msra.mxu0 0.0
      %345 = vmatprep.subr.mxu0 0.0
      %346 = vmatpush1.msra.mxu0 0.0
      %347 = vmatprep.subr.mxu0 0.0
      %348 = vmatpush1.msra.mxu0 0.0
      %349 = vmatprep.subr.mxu0 0.0
      %350 = vmatpush1.msra.mxu0 0.0
      %351 = vmatprep.subr.mxu0 0.0
      %352 = vmatpush1.msra.mxu0 0.0
      %353 = vmatprep.subr.mxu0 %v321
      %354 = vmatpush1.msra.mxu0 %v319
      %355 = vmatprep.subr.mxu0 0.0
      %356 = vmatpush2.msra.mxu0 0.0
      %357 = vmatprep.subr.mxu0 0.0
      %358 = vmatpush2.msra.mxu0 0.0
      %359 = vmatprep.subr.mxu0 0.0
      %360 = vmatpush2.msra.mxu0 0.0
      %361 = vmatprep.subr.mxu0 0.0
      %362 = vmatpush2.msra.mxu0 0.0
      %363 = vmatprep.subr.mxu0 0.0
      %364 = vmatpush2.msra.mxu0 0.0
      %365 = vmatprep.subr.mxu0 0.0
      %366 = vmatpush2.msra.mxu0 0.0
      %367 = vmatprep.subr.mxu0 0.0
      %368 = vmatpush2.msra.mxu0 0.0
      %369 = vmatprep.subr.mxu0 0.0
      %370 = vmatpush2.msra.mxu0 0.0
      %371 = vmatprep.subr.mxu0 0.0
      %372 = vmatpush2.msra.mxu0 0.0
      %373 = vmatprep.subr.mxu0 0.0
      %374 = vmatpush2.msra.mxu0 0.0
      %375 = vmatprep.subr.mxu0 0.0
      %376 = vmatpush2.msra.mxu0 0.0
      %377 = vmatprep.subr.mxu0 0.0
      %378 = vmatpush2.msra.mxu0 0.0
      %379 = vmatprep.subr.mxu0 0.0
      %380 = vmatpush2.msra.mxu0 0.0
      %381 = vmatprep.subr.mxu0 0.0
      %382 = vmatpush2.msra.mxu0 0.0
      %383 = vmatprep.subr.mxu0 0.0
      %384 = vmatpush2.msra.mxu0 0.0
      %385 = vmatprep.subr.mxu0 0.0
      %386 = vmatpush2.msra.mxu0 0.0
      %387 = vmatprep.mubr.f32.mxu0 0.0
      %388 = vmatmul.mubr.f32.gmra.mxu0 %v316
      %v389 = vpop.f32.mrf.mxu0
      %v390 = vadd.f32 %v310, %v389
      %v391 = vpop.f32.mrf.mxu0
      %v392 = vadd.f32 %v310, %v391
      %393 = vdwg.mxu0
      %v394 = vmax.f32 %v390, 0.0
      %v395 = vmax.f32 %v392, 0.0
      %v396 = vmin.f32 %v394, 6.0
      %v397 = vmin.f32 %v395, 6.0
      %v398 = vld [vmem:[%s3] sm:$0xff]
      %v399 = vld [vmem:[%s7] sm:$0x1]
      %v400 = vld [vmem:[%s7 + $0x1] sm:$0x1]
      %v401 = vlaneseq
      %v402 = vshrl.u32 %v401, 7
      %v403 = vsub.s32 0, %v402
      %v404 = vrot.slane %v400, %v403
      %406 = vrot.lane.b32.xlu0 %v404, 55
      %v407 = vpop.permute.xlu0 %406
      %v409 = vmul.f32 %v397, %v407
      %v410 = vlaneseq
      %v411 = vshrl.u32 %v410, 7
      %v412 = vsub.s32 0, %v411
      %v413 = vrot.slane %v399, %v412
      %415 = vrot.lane.b32.xlu0 %v413, 55
      %v416 = vpop.permute.xlu0 %415
      %v418 = vmul.f32 %v409, %v416
      %420 = vset.pattern.permute.xlu0 0
      %421 = vperm.xlu0 %420, %v398
      %v422 = vpop.permute.xlu0 %421
      %v424 = vmul.f32 %v418, %v422
      %v425 = vadd.f32 %v424, 0.0
      %426 = vrot.lane.b32.xlu0 %v404, 120
      %v427 = vpop.permute.xlu0 %426
      %v429 = vmul.f32 %v396, %v427
      %v430 = vmul.f32 %v397, %v427
      %431 = vset.pattern.permute.xlu0 1
      %432 = vperm.xlu0 %431, %v398
      %v433 = vpop.permute.xlu0 %432
      %v435 = vmul.f32 %v429, %v433
      %v436 = vmul.f32 %v430, %v433
      %439 = vrot.lane.b32.xlu0 %v435, 63
      %v440 = vpop.permute.xlu0 %439
      %441 = vrot.lane.b32.xlu0 %v436, 63
      %v442 = vpop.permute.xlu0 %441
      %vm443 = vcmask 515072
      %v444 = vsel %vm443, %v440, %v442
      %v446 = vadd.f32 %v425, %v444
      %447 = vrot.lane.b32.xlu0 %v404, 56
      %v448 = vpop.permute.xlu0 %447
      %v450 = vmul.f32 %v397, %v448
      %451 = vset.pattern.permute.xlu0 2
      %452 = vperm.xlu0 %451, %v398
      %v453 = vpop.permute.xlu0 %452
      %v455 = vmul.f32 %v450, %v453
      %457 = vrot.lane.b32.xlu0 %v455, 127
      %v458 = vpop.permute.xlu0 %457
      %v460 = vadd.f32 %v446, %v458
      %461 = vrot.lane.b32.xlu0 %v413, 63
      %v462 = vpop.permute.xlu0 %461
      %v464 = vmul.f32 %v396, %v462
      %465 = vset.pattern.permute.xlu0 3
      %466 = vperm.xlu0 %465, %v398
      %v467 = vpop.permute.xlu0 %466
      %v469 = vmul.f32 %v464, %v467
      %471 = vrot.lane.b32.xlu0 %v469, 120
      %v472 = vpop.permute.xlu0 %471
      %v474 = vadd.f32 %v460, %v472
      %475 = vset.pattern.permute.xlu0 4
      %476 = vperm.xlu0 %475, %v398
      %v477 = vpop.permute.xlu0 %476
      %v479 = vmul.f32 %v396, %v477
      %481 = vrot.lane.b32.xlu0 %v479, 55
      %v482 = vpop.permute.xlu0 %481
      %v484 = vadd.f32 %v474, %v482
      %485 = vset.pattern.permute.xlu0 5
      %486 = vperm.xlu0 %485, %v398
      %v487 = vpop.permute.xlu0 %486
      %v489 = vmul.f32 %v396, %v487
      %491 = vrot.lane.b32.xlu0 %v489, 119
      %v492 = vpop.permute.xlu0 %491
      %v494 = vadd.f32 %v484, %v492
      %v495 = vmul.f32 %v397, %v462
      %496 = vset.pattern.permute.xlu0 6
      %497 = vperm.xlu0 %496, %v398
      %v498 = vpop.permute.xlu0 %497
      %v500 = vmul.f32 %v495, %v498
      %502 = vrot.lane.b32.xlu0 %v500, 120
      %v503 = vpop.permute.xlu0 %502
      %v505 = vadd.f32 %v494, %v503
      %506 = vset.pattern.permute.xlu0 7
      %507 = vperm.xlu0 %506, %v398
      %v508 = vpop.permute.xlu0 %507
      %v510 = vmul.f32 %v397, %v508
      %512 = vrot.lane.b32.xlu0 %v510, 55
      %v513 = vpop.permute.xlu0 %512
      %v515 = vadd.f32 %v505, %v513
      %516 = vset.pattern.permute.xlu0 8
      %517 = vperm.xlu0 %516, %v398
      %v518 = vpop.permute.xlu0 %517
      %v520 = vmul.f32 %v397, %v518
      %522 = vrot.lane.b32.xlu0 %v520, 119
      %v523 = vpop.permute.xlu0 %522
      %v525 = vadd.f32 %v515, %v523
      %v526 = vld [vmem:[%s4] sm:$0xff]
      %528 = vset.pattern.permute.xlu0 0
      %529 = vperm.xlu0 %528, %v526
      %v530 = vpop.permute.xlu0 %529
      %v532 = vadd.f32 %v525, %v530
      %v533 = vmax.f32 %v532, 0.0
      %v534 = vmin.f32 %v533, 6.0
      %v535 = vld [vmem:[%s5] sm:$0xff]
      %v536 = vld [vmem:[%s6] sm:$0xff]
      %538 = vset.pattern.permute.xlu0 0
      %539 = vperm.xlu0 %538, %v536
      %v540 = vpop.permute.xlu0 %539
      %543 = vrot.lane.b32.xlu0 %v534, 73
      %v544 = vpop.permute.xlu0 %543
      %vm546 = vcmask 64512
      %v548 = vsel %vm546, %v535, 0
      %550 = vmatprep.subr.mxu0 0.0
      %551 = vmatpush1.msra.mxu0 0.0
      %552 = vmatprep.subr.mxu0 0.0
      %553 = vmatpush1.msra.mxu0 0.0
      %554 = vmatprep.subr.mxu0 0.0
      %555 = vmatpush1.msra.mxu0 0.0
      %556 = vmatprep.subr.mxu0 0.0
      %557 = vmatpush1.msra.mxu0 0.0
      %558 = vmatprep.subr.mxu0 0.0
      %559 = vmatpush1.msra.mxu0 0.0
      %560 = vmatprep.subr.mxu0 0.0
      %561 = vmatpush1.msra.mxu0 0.0
      %562 = vmatprep.subr.mxu0 0.0
      %563 = vmatpush1.msra.mxu0 0.0
      %564 = vmatprep.subr.mxu0 0.0
      %565 = vmatpush1.msra.mxu0 0.0
      %566 = vmatprep.subr.mxu0 0.0
      %567 = vmatpush1.msra.mxu0 0.0
      %568 = vmatprep.subr.mxu0 0.0
      %569 = vmatpush1.msra.mxu0 0.0
      %570 = vmatprep.subr.mxu0 0.0
      %571 = vmatpush1.msra.mxu0 0.0
      %572 = vmatprep.subr.mxu0 0.0
      %573 = vmatpush1.msra.mxu0 0.0
      %574 = vmatprep.subr.mxu0 0.0
      %575 = vmatpush1.msra.mxu0 0.0
      %576 = vmatprep.subr.mxu0 0.0
      %577 = vmatpush1.msra.mxu0 0.0
      %578 = vmatprep.subr.mxu0 0.0
      %579 = vmatpush1.msra.mxu0 0.0
      %580 = vmatprep.subr.mxu0 0.0
      %581 = vmatpush1.msra.mxu0 %v544
      %582 = vmatprep.subr.mxu0 0.0
      %583 = vmatpush2.msra.mxu0 0.0
      %584 = vmatprep.subr.mxu0 0.0
      %585 = vmatpush2.msra.mxu0 0.0
      %586 = vmatprep.subr.mxu0 0.0
      %587 = vmatpush2.msra.mxu0 0.0
      %588 = vmatprep.subr.mxu0 0.0
      %589 = vmatpush2.msra.mxu0 0.0
      %590 = vmatprep.subr.mxu0 0.0
      %591 = vmatpush2.msra.mxu0 0.0
      %592 = vmatprep.subr.mxu0 0.0
      %593 = vmatpush2.msra.mxu0 0.0
      %594 = vmatprep.subr.mxu0 0.0
      %595 = vmatpush2.msra.mxu0 0.0
      %596 = vmatprep.subr.mxu0 0.0
      %597 = vmatpush2.msra.mxu0 0.0
      %598 = vmatprep.subr.mxu0 0.0
      %599 = vmatpush2.msra.mxu0 0.0
      %600 = vmatprep.subr.mxu0 0.0
      %601 = vmatpush2.msra.mxu0 0.0
      %602 = vmatprep.subr.mxu0 0.0
      %603 = vmatpush2.msra.mxu0 0.0
      %604 = vmatprep.subr.mxu0 0.0
      %605 = vmatpush2.msra.mxu0 0.0
      %606 = vmatprep.subr.mxu0 0.0
      %607 = vmatpush2.msra.mxu0 0.0
      %608 = vmatprep.subr.mxu0 0.0
      %609 = vmatpush2.msra.mxu0 0.0
      %610 = vmatprep.subr.mxu0 0.0
      %611 = vmatpush2.msra.mxu0 0.0
      %612 = vmatprep.subr.mxu0 0.0
      %613 = vmatpush2.msra.mxu0 0.0
      %614 = vmatprep.mubr.f32.mxu0 0.0
      %615 = vmatmul.mubr.f32.gmra.mxu0 %v548
      %v616 = vpop.f32.mrf.mxu0
      %v617 = vadd.f32 %v540, %v616
      %v618 = vpop.f32.mrf.mxu0
      %619 = vdwg.mxu0
      %vm620 = vcmask 523264
      %621 = vst.msk [vmem:[%s303] sm:$0xff] %vm620, %v617
      %p622 = scmp.lt.s32.totalorder %s19, 1
      %s623 = scalar_select %p622, %s19, 1
      %s624 = smul.addr %s623, 8
      %s625 = scalar_lea.vmem %s8, %s624
      // Predicated region
      $region53: #{hourglass2d.8} parent=51 // pred_check
        %p626 = pneg %p210
      $region54: #{hourglass2d.8} parent=51 // pred_check_branch
        %628 = sbr.rel (%p626) target = $region56
      $region55: #{hourglass2d.8} parent=51 // pred_region
        _
      $region56: #{hourglass2d.8} parent=51 // pred_fallthru
        _
    $region52: #{hourglass2d.8} parent=5 // pred_fallthru
      _
    %p629 = scmp.le.s32.totalorder 2, %s14
    // Predicated region
    $region57: #{hourglass2d.8} parent=5 // pred_check
      %p630 = pneg %p629
    $region58: #{hourglass2d.8} parent=5 // pred_check_branch
      %632 = sbr.rel (%p630) target = $region60
    $region59: #{hourglass2d.8} parent=5 // pred_region
      %s633 = ssub.s32 %s14, 2
      // Predicated region
      $region61: #{hourglass2d.8} parent=59 // pred_check
        %p634 = pneg %p216
      $region62: #{hourglass2d.8} parent=59 // pred_check_branch
        %636 = sbr.rel (%p634) target = $region64
      $region63: #{hourglass2d.8} parent=59 // pred_region
        %p637 = scmp.lt.s32.totalorder %s20, 1
        %s638 = scalar_select %p637, %s20, 1
        %s639 = smul.addr %s638, 8
        %s640 = scalar_lea.vmem %s8, %s639
      $region64: #{hourglass2d.8} parent=59 // pred_fallthru
        _
    $region60: #{hourglass2d.8} parent=5 // pred_fallthru
      _
  $region6: #{hourglass2d.8} parent=0 // loop_footer
    %s18 = sadd.s32 1, %s14
  $region7: #{hourglass2d.8} parent=0 // loop_footer_branch
    %13 = sbr.rel target = $region3
  $region8: #{hourglass2d.8} parent=0 // loop_exit
    _

// kernel: hourglass2d.13
$region0: #{hourglass2d.13}
  #allocation0 [shape = 'u32[]', space=smem, size = 0x4, offset = 0x4, fixed_abs, tag = 'smem constant byte address 0x4 - core index']
  #allocation1 [shape = 'u32[144,128]{1,0:T(1,128)}', space=vmem, size = 0x12000, scoped, tag = 'internal scratch']
  %s0 = inlined_call_operand.vmem [shape: f32[2,16,16], index: 0, kind: input, shape index: {}]
  %s1 = inlined_call_operand.vmem [shape: f32[32,64], index: 1, kind: input, shape index: {}]
  %s2 = inlined_call_operand.vmem [shape: f32[32,1], index: 2, kind: input, shape index: {}]
  %s3 = inlined_call_operand.vmem [shape: f32[2,32,16], index: 3, kind: input, shape index: {}]
  %s4 = inlined_call_operand.vmem [shape: f32[1,16], index: 4, kind: input, shape index: {}]
  %s5 = inlined_call_operand.vmem [shape: f32[2,32,16], index: 5, kind: output, shape index: {}]
  %s6 = sld [smem:[#allocation0]]
  $region53: #{hourglass2d.13} parent=0
    _
  %s8 = ssub.s32 1, %s6
  %s9 = scalar_select 0, %s8, %s6
  loop: start=0, step=1, limit=4
  $region2: #{hourglass2d.13} parent=0 // loop_pre_header
    _
  $region3: #{hourglass2d.13} parent=0 // loop_header
    %s11 = sphi 0, %s15
    %p12 = scmp.ge.s32.totalorder %s11, 4
    %s21 = sphi 0, %s23
    %s24 = sphi 0, %s21
    %s25 = sphi 0, %s24
    %s41 = sphi 0, %s25
    %s45 = sphi 0, %s45
    %s47 = sphi 0, %s45
    %s48 = sphi 0, %s47
    %s62 = sphi 0, %s48
    %s66 = sphi 0, %s66
    %s68 = sphi 0, %s66
    %s69 = sphi 0, %s68
    %s83 = sphi 0, %s69
    %s89 = sphi 0, %s91
    %s92 = sphi 0, %s89
    %s93 = sphi 0, %s92
    %s109 = sphi 0, %s93
    %s113 = sphi 0, %s113
    %s115 = sphi 0, %s113
    %s116 = sphi 0, %s115
    %s130 = sphi 0, %s116
    %s136 = sphi 0, %s138
    %s139 = sphi 0, %s136
    %s140 = sphi 0, %s139
    %s156 = sphi 0, %s140
  $region4: #{hourglass2d.13} parent=0 // loop_header_branch
    %14 = sbr.rel (%p12) target = $region8
  $region5: #{hourglass2d.13} parent=0 // loop_body
    %s16 = ssub.s32 %s11, 1
    %s17 = ssub.s32 %s11, 2
    %s18 = sadd.s32 %s11, 1
    %s19 = ssub.s32 %s11, %s18
    %p20 = scmp.eq.s32.totalorder %s19, 0
    %s22 = sadd.s32 %s21, 1
    %s23 = scalar_select %p20, %s21, %s22
    %p26 = pneg %p20
    %p27 = scmp.eq.s32.totalorder %s11, 1
    %p28 = por %p26, %p27
    %p29 = scmp.ne.s32.totalorder %s21, %s24
    %p30 = scmp.eq.s32.totalorder %s11, 0
    %p31 = por %p29, %p30
    %p32 = scmp.ne.s32.totalorder %s21, %s24
    %p33 = scmp.eq.s32.totalorder %s16, 1
    %p34 = por %p32, %p33
    %p35 = scmp.ne.s32.totalorder %s24, %s25
    %p36 = scmp.eq.s32.totalorder %s16, 0
    %p37 = por %p35, %p36
    %p38 = scmp.ne.s32.totalorder %s24, %s25
    %p39 = scmp.eq.s32.totalorder %s17, 1
    %p40 = por %p38, %p39
    %p42 = scmp.ne.s32.totalorder %s25, %s41
    %p43 = scmp.eq.s32.totalorder %s17, 0
    %p44 = por %p42, %p43
    %s46 = sadd.s32 %s45, 1
    %p49 = scmp.eq.s32.totalorder %s11, 1
    %p50 = scmp.ne.s32.totalorder %s45, %s47
    %p51 = scmp.eq.s32.totalorder %s11, 0
    %p52 = por %p50, %p51
    %p53 = scmp.ne.s32.totalorder %s45, %s47
    %p54 = scmp.eq.s32.totalorder %s16, 1
    %p55 = por %p53, %p54
    %p56 = scmp.ne.s32.totalorder %s47, %s48
    %p57 = scmp.eq.s32.totalorder %s16, 0
    %p58 = por %p56, %p57
    %p59 = scmp.ne.s32.totalorder %s47, %s48
    %p60 = scmp.eq.s32.totalorder %s17, 1
    %p61 = por %p59, %p60
    %p63 = scmp.ne.s32.totalorder %s48, %s62
    %p64 = scmp.eq.s32.totalorder %s17, 0
    %p65 = por %p63, %p64
    %s67 = sadd.s32 %s66, 1
    %p70 = scmp.eq.s32.totalorder %s11, 1
    %p71 = scmp.ne.s32.totalorder %s66, %s68
    %p72 = scmp.eq.s32.totalorder %s11, 0
    %p73 = por %p71, %p72
    %p74 = scmp.ne.s32.totalorder %s66, %s68
    %p75 = scmp.eq.s32.totalorder %s16, 1
    %p76 = por %p74, %p75
    %p77 = scmp.ne.s32.totalorder %s68, %s69
    %p78 = scmp.eq.s32.totalorder %s16, 0
    %p79 = por %p77, %p78
    %p80 = scmp.ne.s32.totalorder %s68, %s69
    %p81 = scmp.eq.s32.totalorder %s17, 1
    %p82 = por %p80, %p81
    %p84 = scmp.ne.s32.totalorder %s69, %s83
    %p85 = scmp.eq.s32.totalorder %s17, 0
    %p86 = por %p84, %p85
    %s87 = ssub.s32 %s11, %s18
    %p88 = scmp.eq.s32.totalorder %s87, 0
    %s90 = sadd.s32 %s89, 1
    %s91 = scalar_select %p88, %s89, %s90
    %p94 = pneg %p88
    %p95 = scmp.eq.s32.totalorder %s11, 1
    %p96 = por %p94, %p95
    %p97 = scmp.ne.s32.totalorder %s89, %s92
    %p98 = scmp.eq.s32.totalorder %s11, 0
    %p99 = por %p97, %p98
    %p100 = scmp.ne.s32.totalorder %s89, %s92
    %p101 = scmp.eq.s32.totalorder %s16, 1
    %p102 = por %p100, %p101
    %p103 = scmp.ne.s32.totalorder %s92, %s93
    %p104 = scmp.eq.s32.totalorder %s16, 0
    %p105 = por %p103, %p104
    %p106 = scmp.ne.s32.totalorder %s92, %s93
    %p107 = scmp.eq.s32.totalorder %s17, 1
    %p108 = por %p106, %p107
    %p110 = scmp.ne.s32.totalorder %s93, %s109
    %p111 = scmp.eq.s32.totalorder %s17, 0
    %p112 = por %p110, %p111
    %s114 = sadd.s32 %s113, 1
    %p117 = scmp.eq.s32.totalorder %s11, 1
    %p118 = scmp.ne.s32.totalorder %s113, %s115
    %p119 = scmp.eq.s32.totalorder %s11, 0
    %p120 = por %p118, %p119
    %p121 = scmp.ne.s32.totalorder %s113, %s115
    %p122 = scmp.eq.s32.totalorder %s16, 1
    %p123 = por %p121, %p122
    %p124 = scmp.ne.s32.totalorder %s115, %s116
    %p125 = scmp.eq.s32.totalorder %s16, 0
    %p126 = por %p124, %p125
    %p127 = scmp.ne.s32.totalorder %s115, %s116
    %p128 = scmp.eq.s32.totalorder %s17, 1
    %p129 = por %p127, %p128
    %p131 = scmp.ne.s32.totalorder %s116, %s130
    %p132 = scmp.eq.s32.totalorder %s17, 0
    %p133 = por %p131, %p132
    %s134 = ssub.s32 %s11, %s18
    %p135 = scmp.eq.s32.totalorder %s134, 0
    %s137 = sadd.s32 %s136, 1
    %s138 = scalar_select %p135, %s136, %s137
    %p141 = pneg %p135
    %p142 = scmp.eq.s32.totalorder %s11, 1
    %p143 = por %p141, %p142
    %p144 = scmp.ne.s32.totalorder %s136, %s139
    %p145 = scmp.eq.s32.totalorder %s11, 0
    %p146 = por %p144, %p145
    %p147 = scmp.ne.s32.totalorder %s136, %s139
    %p148 = scmp.eq.s32.totalorder %s16, 1
    %p149 = por %p147, %p148
    %p150 = scmp.ne.s32.totalorder %s139, %s140
    %p151 = scmp.eq.s32.totalorder %s16, 0
    %p152 = por %p150, %p151
    %p153 = scmp.ne.s32.totalorder %s139, %s140
    %p154 = scmp.eq.s32.totalorder %s17, 1
    %p155 = por %p153, %p154
    %p157 = scmp.ne.s32.totalorder %s140, %s156
    %p158 = scmp.eq.s32.totalorder %s17, 0
    %p159 = por %p157, %p158
    %p160 = scmp.le.s32.totalorder 1, %s11
    %p161 = scmp.lt.s32.totalorder %s11, 3
    %p162 = pnand %p160, %p161
    %p163 = pneg %p162
    // Predicated region
    $region9: #{hourglass2d.13} parent=5 // pred_check
      _
    $region10: #{hourglass2d.13} parent=5 // pred_check_branch
      %165 = sbr.rel (%p162) target = $region12
    $region11: #{hourglass2d.13} parent=5 // pred_region
      %s166 = ssub.s32 %s11, 1
      // Predicated region
      $region13: #{hourglass2d.13} parent=11 // pred_check
        %p167 = pneg %p58
      $region14: #{hourglass2d.13} parent=11 // pred_check_branch
        %169 = sbr.rel (%p167) target = $region16
      $region15: #{hourglass2d.13} parent=11 // pred_region
        _
      $region16: #{hourglass2d.13} parent=11 // pred_fallthru
        _
      // Predicated region
      $region17: #{hourglass2d.13} parent=11 // pred_check
        %p170 = pneg %p79
      $region18: #{hourglass2d.13} parent=11 // pred_check_branch
        %172 = sbr.rel (%p170) target = $region20
      $region19: #{hourglass2d.13} parent=11 // pred_region
        _
      $region20: #{hourglass2d.13} parent=11 // pred_fallthru
        _
      // Predicated region
      $region21: #{hourglass2d.13} parent=11 // pred_check
        %p173 = pneg %p126
      $region22: #{hourglass2d.13} parent=11 // pred_check_branch
        %175 = sbr.rel (%p173) target = $region24
      $region23: #{hourglass2d.13} parent=11 // pred_region
        _
      $region24: #{hourglass2d.13} parent=11 // pred_fallthru
        _
    $region12: #{hourglass2d.13} parent=5 // pred_fallthru
      _
    %p176 = scmp.lt.s32.totalorder %s11, 2
    // Predicated region
    $region25: #{hourglass2d.13} parent=5 // pred_check
      %p177 = pneg %p176
    $region26: #{hourglass2d.13} parent=5 // pred_check_branch
      %179 = sbr.rel (%p177) target = $region28
    $region27: #{hourglass2d.13} parent=5 // pred_region
      // Predicated region
      $region29: #{hourglass2d.13} parent=27 // pred_check
        %p180 = pneg %p31
      $region30: #{hourglass2d.13} parent=27 // pred_check_branch
        %182 = sbr.rel (%p180) target = $region32
      $region31: #{hourglass2d.13} parent=27 // pred_region
        %p183 = scmp.lt.s32.totalorder %s11, 1
        %s184 = scalar_select %p183, %s11, 1
        %s185 = smul.addr %s184, 2
        %s186 = smul.addr %s185, 8
        %s187 = scalar_lea.vmem %s0, %s186
      $region32: #{hourglass2d.13} parent=27 // pred_fallthru
        _
      // Predicated region
      $region33: #{hourglass2d.13} parent=27 // pred_check
        %p188 = pneg %p99
      $region34: #{hourglass2d.13} parent=27 // pred_check_branch
        %190 = sbr.rel (%p188) target = $region36
      $region35: #{hourglass2d.13} parent=27 // pred_region
        %p191 = scmp.lt.s32.totalorder %s11, 1
        %s192 = scalar_select %p191, %s11, 1
        %s193 = smul.addr %s192, 4
        %s194 = smul.addr %s193, 8
        %s195 = scalar_lea.vmem %s3, %s194
      $region36: #{hourglass2d.13} parent=27 // pred_fallthru
        _
    $region28: #{hourglass2d.13} parent=5 // pred_fallthru
      _
    %p196 = scmp.le.s32.totalorder 1, %s11
    %p197 = scmp.lt.s32.totalorder %s11, 3
    %p198 = pnand %p196, %p197
    %p199 = pneg %p198
    // Predicated region
    $region37: #{hourglass2d.13} parent=5 // pred_check
      _
    $region38: #{hourglass2d.13} parent=5 // pred_check_branch
      %201 = sbr.rel (%p198) target = $region40
    $region39: #{hourglass2d.13} parent=5 // pred_region
      %s202 = ssub.s32 %s11, 1
      %p203 = scmp.lt.s32.totalorder %s16, 1
      %s204 = scalar_select %p203, %s16, 1
      %s205 = smul.addr %s204, 2
      %s206 = smul.addr %s205, 8
      %s207 = scalar_lea.vmem %s0, %s206
      %p208 = pneg %p37
      %p209 = pneg %p34
      %p210 = pneg %p58
      %p211 = pneg %p55
      %p212 = pneg %p79
      %p213 = pneg %p76
      %p214 = scmp.lt.s32.totalorder %s16, 1
      %s215 = scalar_select %p214, %s16, 1
      %s216 = smul.addr %s215, 4
      %s217 = smul.addr %s216, 8
      %s218 = scalar_lea.vmem %s3, %s217
      %p219 = pneg %p105
      %p220 = pneg %p102
      %p221 = pneg %p126
      %p222 = pneg %p123
      %p223 = pneg %p152
      %p224 = pneg %p149
      %p225 = scmp.lt.s32.totalorder %s16, 1
      %s226 = scalar_select %p225, %s16, 1
      %s227 = smul.addr %s226, 4
      %s228 = smul.addr %s227, 8
      %s229 = scalar_lea.vmem %s5, %s228
      %p230 = scmp.lt.s32.totalorder %s16, 1
      %s231 = scalar_select %p230, %s16, 1
      %s232 = smul.addr %s231, 2
      %s233 = smul.addr %s232, 8
      %s234 = scalar_lea.vmem %s0, %s233
      %p235 = scmp.lt.s32.totalorder %s16, 1
      %s236 = scalar_select %p235, %s16, 1
      %s237 = smul.addr %s236, 4
      %s238 = smul.addr %s237, 8
      %s239 = scalar_lea.vmem %s3, %s238
      %p240 = scmp.lt.s32.totalorder %s16, 1
      %s241 = scalar_select %p240, %s16, 1
      %s242 = smul.addr %s241, 4
      %s243 = smul.addr %s242, 8
      %s244 = scalar_lea.vmem %s5, %s243
      %v245 = vld [vmem:[%s234] sm:$0xff]
      %v246 = vld [vmem:[%s234 + $0x8] sm:$0xff]
      %vm247 = vcmask 130048
      %v248 = vsel %vm247, %v245, 0.0
      %v249 = vsel %vm247, %v246, 0.0
      %v250 = vld [vmem:[%s4] sm:$0x1]
      %v252 = vlaneseq
      %v253 = vshrl.u32 %v252, 7
      %v254 = vsub.s32 0, %v253
      %v255 = vrot.slane %v250, %v254
      %256 = vrot.lane.b32.xlu0 %v255, 1
      %v257 = vpop.permute.xlu0 %256
      %v259 = vmul.f32 %v248, %v257
      %v260 = vmul.f32 %v249, %v257
      %261 = vrot.lane.b32.xlu0 %v255, 5
      %v262 = vpop.permute.xlu0 %261
      %v264 = vmul.f32 %v248, %v262
      %v265 = vmul.f32 %v249, %v262
      %268 = vrot.lane.b32.xlu0 %v259, 127
      %v269 = vpop.permute.xlu0 %268
      %270 = vrot.lane.b32.xlu0 %v260, 127
      %v271 = vpop.permute.xlu0 %270
      %276 = vrot.lane.b32.xlu0 %v248, 124
      %v277 = vpop.permute.xlu0 %276
      %278 = vrot.lane.b32.xlu0 %v249, 124
      %v279 = vpop.permute.xlu0 %278
      %284 = vrot.lane.b32.xlu0 %v264, 123
      %v285 = vpop.permute.xlu0 %284
      %286 = vrot.lane.b32.xlu0 %v265, 123
      %v287 = vpop.permute.xlu0 %286
      %v290 = vld [vmem:[%s1] sm:$0xff]
      %v291 = vld [vmem:[%s1 + $0x8] sm:$0xff]
      %v292 = vld [vmem:[%s1 + $0x10] sm:$0xff]
      %v293 = vld [vmem:[%s1 + $0x18] sm:$0xff]
      %v294 = vld [vmem:[%s2] sm:$0xff]
      %v295 = vld [vmem:[%s2 + $0x8] sm:$0xff]
      %v296 = vld [vmem:[%s2 + $0x10] sm:$0xff]
      %v297 = vld [vmem:[%s2 + $0x18] sm:$0xff]
      %299 = vset.pattern.permute.xlu0 0
      %300 = vperm.xlu0 %299, %v294
      %v301 = vpop.permute.xlu0 %300
      %304 = vset.pattern.permute.xlu0 0
      %305 = vperm.xlu0 %304, %v295
      %v306 = vpop.permute.xlu0 %305
      %309 = vset.pattern.permute.xlu0 0
      %310 = vperm.xlu0 %309, %v296
      %v311 = vpop.permute.xlu0 %310
      %314 = vset.pattern.permute.xlu0 0
      %315 = vperm.xlu0 %314, %v297
      %v316 = vpop.permute.xlu0 %315
      %vm318 = vcmask 523264
      %v320 = vsel %vm318, %v290, 0
      %v323 = vsel %vm318, %v291, 0
      %v326 = vsel %vm318, %v292, 0
      %v329 = vsel %vm318, %v293, 0
      %331 = vmatprep.subr.mxu0 0.0
      %332 = vmatpush1.msra.mxu0 0.0
      %333 = vmatprep.subr.mxu0 0.0
      %334 = vmatpush1.msra.mxu0 0.0
      %335 = vmatprep.subr.mxu0 0.0
      %336 = vmatpush1.msra.mxu0 0.0
      %337 = vmatprep.subr.mxu0 0.0
      %338 = vmatpush1.msra.mxu0 0.0
      %339 = vmatprep.subr.mxu0 0.0
      %340 = vmatpush1.msra.mxu0 0.0
      %341 = vmatprep.subr.mxu0 0.0
      %342 = vmatpush1.msra.mxu0 0.0
      %343 = vmatprep.subr.mxu0 0.0
      %344 = vmatpush1.msra.mxu0 0.0
      %345 = vmatprep.subr.mxu0 0.0
      %346 = vmatpush1.msra.mxu0 0.0
      %347 = vmatprep.subr.mxu0 0.0
      %348 = vmatpush1.msra.mxu0 %v287
      %349 = vmatprep.subr.mxu0 0.0
      %350 = vmatpush1.msra.mxu0 %v285
      %351 = vmatprep.subr.mxu0 0.0
      %352 = vmatpush1.msra.mxu0 %v279
      %353 = vmatprep.subr.mxu0 0.0
      %354 = vmatpush1.msra.mxu0 %v277
      %355 = vmatprep.subr.mxu0 0.0
      %356 = vmatpush1.msra.mxu0 %v271
      %357 = vmatprep.subr.mxu0 0.0
      %358 = vmatpush1.msra.mxu0 %v269
      %359 = vmatprep.subr.mxu0 0.0
      %360 = vmatpush1.msra.mxu0 %v246
      %361 = vmatprep.subr.mxu0 0.0
      %362 = vmatpush1.msra.mxu0 %v245
      %363 = vmatprep.subr.mxu0 0.0
      %364 = vmatpush2.msra.mxu0 0.0
      %365 = vmatprep.subr.mxu0 0.0
      %366 = vmatpush2.msra.mxu0 0.0
      %367 = vmatprep.subr.mxu0 0.0
      %368 = vmatpush2.msra.mxu0 0.0
      %369 = vmatprep.subr.mxu0 0.0
      %370 = vmatpush2.msra.mxu0 0.0
      %371 = vmatprep.subr.mxu0 0.0
      %372 = vmatpush2.msra.mxu0 0.0
      %373 = vmatprep.subr.mxu0 0.0
      %374 = vmatpush2.msra.mxu0 0.0
      %375 = vmatprep.subr.mxu0 0.0
      %376 = vmatpush2.msra.mxu0 0.0
      %377 = vmatprep.subr.mxu0 0.0
      %378 = vmatpush2.msra.mxu0 0.0
      %379 = vmatprep.subr.mxu0 0.0
      %380 = vmatpush2.msra.mxu0 0.0
      %381 = vmatprep.subr.mxu0 0.0
      %382 = vmatpush2.msra.mxu0 0.0
      %383 = vmatprep.subr.mxu0 0.0
      %384 = vmatpush2.msra.mxu0 0.0
      %385 = vmatprep.subr.mxu0 0.0
      %386 = vmatpush2.msra.mxu0 0.0
      %387 = vmatprep.subr.mxu0 0.0
      %388 = vmatpush2.msra.mxu0 0.0
      %389 = vmatprep.subr.mxu0 0.0
      %390 = vmatpush2.msra.mxu0 0.0
      %391 = vmatprep.subr.mxu0 0.0
      %392 = vmatpush2.msra.mxu0 0.0
      %393 = vmatprep.subr.mxu0 0.0
      %394 = vmatpush2.msra.mxu0 0.0
      %395 = vmatprep.mubr.f32.mxu0 0.0
      %396 = vmatmul.mubr.f32.gmra.mxu0 %v320
      %v397 = vpop.f32.mrf.mxu0
      %v398 = vadd.f32 %v301, %v397
      %v399 = vpop.f32.mrf.mxu0
      %400 = vmatprep.mubr.f32.mxu0 0.0
      %401 = vmatmul.mubr.f32.gmra.mxu0 %v323
      %v402 = vpop.f32.mrf.mxu0
      %v403 = vadd.f32 %v306, %v402
      %v404 = vpop.f32.mrf.mxu0
      %405 = vmatprep.mubr.f32.mxu0 0.0
      %406 = vmatmul.mubr.f32.gmra.mxu0 %v326
      %v407 = vpop.f32.mrf.mxu0
      %v408 = vadd.f32 %v311, %v407
      %v409 = vpop.f32.mrf.mxu0
      %410 = vmatprep.mubr.f32.mxu0 0.0
      %411 = vmatmul.mubr.f32.gmra.mxu0 %v329
      %v412 = vpop.f32.mrf.mxu0
      %v413 = vadd.f32 %v316, %v412
      %v414 = vpop.f32.mrf.mxu0
      %415 = vdwg.mxu0
      %v416 = vld [vmem:[%s239] sm:$0xff]
      %v417 = vld [vmem:[%s239 + $0x8] sm:$0xff]
      %v418 = vld [vmem:[%s239 + $0x10] sm:$0xff]
      %v419 = vld [vmem:[%s239 + $0x18] sm:$0xff]
      %v420 = vadd.f32 %v398, %v416
      %v421 = vadd.f32 %v403, %v417
      %v422 = vadd.f32 %v408, %v418
      %v423 = vadd.f32 %v413, %v419
      %v424 = vmax.f32 %v420, 0.0
      %v425 = vmax.f32 %v421, 0.0
      %v426 = vmax.f32 %v422, 0.0
      %v427 = vmax.f32 %v423, 0.0
      %428 = vst.msk [vmem:[%s244] sm:$0xff] %vm247, %v424
      %429 = vst.msk [vmem:[%s244 + $0x8] sm:$0xff] %vm247, %v425
      %430 = vst.msk [vmem:[%s244 + $0x10] sm:$0xff] %vm247, %v426
      %431 = vst.msk [vmem:[%s244 + $0x18] sm:$0xff] %vm247, %v427
      %p432 = scmp.lt.s32.totalorder %s16, 1
      %s433 = scalar_select %p432, %s16, 1
      %s434 = smul.addr %s433, 4
      %s435 = smul.addr %s434, 8
      %s436 = scalar_lea.vmem %s5, %s435
      // Predicated region
      $region41: #{hourglass2d.13} parent=39 // pred_check
        %p437 = pneg %p149
      $region42: #{hourglass2d.13} parent=39 // pred_check_branch
        %439 = sbr.rel (%p437) target = $region44
      $region43: #{hourglass2d.13} parent=39 // pred_region
        _
      $region44: #{hourglass2d.13} parent=39 // pred_fallthru
        _
    $region40: #{hourglass2d.13} parent=5 // pred_fallthru
      _
    %p440 = scmp.le.s32.totalorder 2, %s11
    // Predicated region
    $region45: #{hourglass2d.13} parent=5 // pred_check
      %p441 = pneg %p440
    $region46: #{hourglass2d.13} parent=5 // pred_check_branch
      %443 = sbr.rel (%p441) target = $region48
    $region47: #{hourglass2d.13} parent=5 // pred_region
      %s444 = ssub.s32 %s11, 2
      // Predicated region
      $region49: #{hourglass2d.13} parent=47 // pred_check
        %p445 = pneg %p155
      $region50: #{hourglass2d.13} parent=47 // pred_check_branch
        %447 = sbr.rel (%p445) target = $region52
      $region51: #{hourglass2d.13} parent=47 // pred_region
        %p448 = scmp.lt.s32.totalorder %s17, 1
        %s449 = scalar_select %p448, %s17, 1
        %s450 = smul.addr %s449, 4
        %s451 = smul.addr %s450, 8
        %s452 = scalar_lea.vmem %s5, %s451
      $region52: #{hourglass2d.13} parent=47 // pred_fallthru
        _
    $region48: #{hourglass2d.13} parent=5 // pred_fallthru
      _
  $region6: #{hourglass2d.13} parent=0 // loop_footer
    %s15 = sadd.s32 1, %s11
  $region7: #{hourglass2d.13} parent=0 // loop_footer_branch
    %10 = sbr.rel target = $region3
  $region8: #{hourglass2d.13} parent=0 // loop_exit
    _

// kernel: hourglass2d.10
$region0: #{hourglass2d.10}
  #allocation0 [shape = 'u32[]', space=smem, size = 0x4, offset = 0x4, fixed_abs, tag = 'smem constant byte address 0x4 - core index']
  #allocation1 [shape = 'u32[144,128]{1,0:T(1,128)}', space=vmem, size = 0x12000, scoped, tag = 'internal scratch']
  %s0 = inlined_call_operand.vmem [shape: f32[2,8,64], index: 0, kind: input, shape index: {}]
  %s1 = inlined_call_operand.vmem [shape: f32[16,8], index: 1, kind: input, shape index: {}]
  %s2 = inlined_call_operand.vmem [shape: f32[16,1], index: 2, kind: input, shape index: {}]
  %s3 = inlined_call_operand.vmem [shape: f32[16,9], index: 3, kind: input, shape index: {}]
  %s4 = inlined_call_operand.vmem [shape: f32[16,1], index: 4, kind: input, shape index: {}]
  %s5 = inlined_call_operand.vmem [shape: f32[16,16], index: 5, kind: input, shape index: {}]
  %s6 = inlined_call_operand.vmem [shape: f32[16,1], index: 6, kind: input, shape index: {}]
  %s7 = inlined_call_operand.vmem [shape: f32[2,16], index: 7, kind: input, shape index: {}]
  %s8 = inlined_call_operand.vmem [shape: f32[2,16,16], index: 8, kind: output, shape index: {}]
  %s9 = sld [smem:[#allocation0]]
  $region65: #{hourglass2d.10} parent=0
    _
  %s11 = ssub.s32 1, %s9
  %s12 = scalar_select 0, %s11, %s9
  loop: start=0, step=1, limit=4
  $region2: #{hourglass2d.10} parent=0 // loop_pre_header
    _
  $region3: #{hourglass2d.10} parent=0 // loop_header
    %s14 = sphi 0, %s18
    %p15 = scmp.ge.s32.totalorder %s14, 4
    %s24 = sphi 0, %s26
    %s27 = sphi 0, %s24
    %s28 = sphi 0, %s27
    %s44 = sphi 0, %s28
    %s48 = sphi 0, %s48
    %s50 = sphi 0, %s48
    %s51 = sphi 0, %s50
    %s65 = sphi 0, %s51
    %s69 = sphi 0, %s69
    %s71 = sphi 0, %s69
    %s72 = sphi 0, %s71
    %s86 = sphi 0, %s72
    %s90 = sphi 0, %s90
    %s92 = sphi 0, %s90
    %s93 = sphi 0, %s92
    %s107 = sphi 0, %s93
    %s111 = sphi 0, %s111
    %s113 = sphi 0, %s111
    %s114 = sphi 0, %s113
    %s128 = sphi 0, %s114
    %s132 = sphi 0, %s132
    %s134 = sphi 0, %s132
    %s135 = sphi 0, %s134
    %s149 = sphi 0, %s135
    %s153 = sphi 0, %s153
    %s155 = sphi 0, %s153
    %s156 = sphi 0, %s155
    %s170 = sphi 0, %s156
    %s174 = sphi 0, %s174
    %s176 = sphi 0, %s174
    %s177 = sphi 0, %s176
    %s191 = sphi 0, %s177
    %s197 = sphi 0, %s199
    %s200 = sphi 0, %s197
    %s201 = sphi 0, %s200
    %s217 = sphi 0, %s201
  $region4: #{hourglass2d.10} parent=0 // loop_header_branch
    %17 = sbr.rel (%p15) target = $region8
  $region5: #{hourglass2d.10} parent=0 // loop_body
    %s19 = ssub.s32 %s14, 1
    %s20 = ssub.s32 %s14, 2
    %s21 = sadd.s32 %s14, 1
    %s22 = ssub.s32 %s14, %s21
    %p23 = scmp.eq.s32.totalorder %s22, 0
    %s25 = sadd.s32 %s24, 1
    %s26 = scalar_select %p23, %s24, %s25
    %p29 = pneg %p23
    %p30 = scmp.eq.s32.totalorder %s14, 1
    %p31 = por %p29, %p30
    %p32 = scmp.ne.s32.totalorder %s24, %s27
    %p33 = scmp.eq.s32.totalorder %s14, 0
    %p34 = por %p32, %p33
    %p35 = scmp.ne.s32.totalorder %s24, %s27
    %p36 = scmp.eq.s32.totalorder %s19, 1
    %p37 = por %p35, %p36
    %p38 = scmp.ne.s32.totalorder %s27, %s28
    %p39 = scmp.eq.s32.totalorder %s19, 0
    %p40 = por %p38, %p39
    %p41 = scmp.ne.s32.totalorder %s27, %s28
    %p42 = scmp.eq.s32.totalorder %s20, 1
    %p43 = por %p41, %p42
    %p45 = scmp.ne.s32.totalorder %s28, %s44
    %p46 = scmp.eq.s32.totalorder %s20, 0
    %p47 = por %p45, %p46
    %s49 = sadd.s32 %s48, 1
    %p52 = scmp.eq.s32.totalorder %s14, 1
    %p53 = scmp.ne.s32.totalorder %s48, %s50
    %p54 = scmp.eq.s32.totalorder %s14, 0
    %p55 = por %p53, %p54
    %p56 = scmp.ne.s32.totalorder %s48, %s50
    %p57 = scmp.eq.s32.totalorder %s19, 1
    %p58 = por %p56, %p57
    %p59 = scmp.ne.s32.totalorder %s50, %s51
    %p60 = scmp.eq.s32.totalorder %s19, 0
    %p61 = por %p59, %p60
    %p62 = scmp.ne.s32.totalorder %s50, %s51
    %p63 = scmp.eq.s32.totalorder %s20, 1
    %p64 = por %p62, %p63
    %p66 = scmp.ne.s32.totalorder %s51, %s65
    %p67 = scmp.eq.s32.totalorder %s20, 0
    %p68 = por %p66, %p67
    %s70 = sadd.s32 %s69, 1
    %p73 = scmp.eq.s32.totalorder %s14, 1
    %p74 = scmp.ne.s32.totalorder %s69, %s71
    %p75 = scmp.eq.s32.totalorder %s14, 0
    %p76 = por %p74, %p75
    %p77 = scmp.ne.s32.totalorder %s69, %s71
    %p78 = scmp.eq.s32.totalorder %s19, 1
    %p79 = por %p77, %p78
    %p80 = scmp.ne.s32.totalorder %s71, %s72
    %p81 = scmp.eq.s32.totalorder %s19, 0
    %p82 = por %p80, %p81
    %p83 = scmp.ne.s32.totalorder %s71, %s72
    %p84 = scmp.eq.s32.totalorder %s20, 1
    %p85 = por %p83, %p84
    %p87 = scmp.ne.s32.totalorder %s72, %s86
    %p88 = scmp.eq.s32.totalorder %s20, 0
    %p89 = por %p87, %p88
    %s91 = sadd.s32 %s90, 1
    %p94 = scmp.eq.s32.totalorder %s14, 1
    %p95 = scmp.ne.s32.totalorder %s90, %s92
    %p96 = scmp.eq.s32.totalorder %s14, 0
    %p97 = por %p95, %p96
    %p98 = scmp.ne.s32.totalorder %s90, %s92
    %p99 = scmp.eq.s32.totalorder %s19, 1
    %p100 = por %p98, %p99
    %p101 = scmp.ne.s32.totalorder %s92, %s93
    %p102 = scmp.eq.s32.totalorder %s19, 0
    %p103 = por %p101, %p102
    %p104 = scmp.ne.s32.totalorder %s92, %s93
    %p105 = scmp.eq.s32.totalorder %s20, 1
    %p106 = por %p104, %p105
    %p108 = scmp.ne.s32.totalorder %s93, %s107
    %p109 = scmp.eq.s32.totalorder %s20, 0
    %p110 = por %p108, %p109
    %s112 = sadd.s32 %s111, 1
    %p115 = scmp.eq.s32.totalorder %s14, 1
    %p116 = scmp.ne.s32.totalorder %s111, %s113
    %p117 = scmp.eq.s32.totalorder %s14, 0
    %p118 = por %p116, %p117
    %p119 = scmp.ne.s32.totalorder %s111, %s113
    %p120 = scmp.eq.s32.totalorder %s19, 1
    %p121 = por %p119, %p120
    %p122 = scmp.ne.s32.totalorder %s113, %s114
    %p123 = scmp.eq.s32.totalorder %s19, 0
    %p124 = por %p122, %p123
    %p125 = scmp.ne.s32.totalorder %s113, %s114
    %p126 = scmp.eq.s32.totalorder %s20, 1
    %p127 = por %p125, %p126
    %p129 = scmp.ne.s32.totalorder %s114, %s128
    %p130 = scmp.eq.s32.totalorder %s20, 0
    %p131 = por %p129, %p130
    %s133 = sadd.s32 %s132, 1
    %p136 = scmp.eq.s32.totalorder %s14, 1
    %p137 = scmp.ne.s32.totalorder %s132, %s134
    %p138 = scmp.eq.s32.totalorder %s14, 0
    %p139 = por %p137, %p138
    %p140 = scmp.ne.s32.totalorder %s132, %s134
    %p141 = scmp.eq.s32.totalorder %s19, 1
    %p142 = por %p140, %p141
    %p143 = scmp.ne.s32.totalorder %s134, %s135
    %p144 = scmp.eq.s32.totalorder %s19, 0
    %p145 = por %p143, %p144
    %p146 = scmp.ne.s32.totalorder %s134, %s135
    %p147 = scmp.eq.s32.totalorder %s20, 1
    %p148 = por %p146, %p147
    %p150 = scmp.ne.s32.totalorder %s135, %s149
    %p151 = scmp.eq.s32.totalorder %s20, 0
    %p152 = por %p150, %p151
    %s154 = sadd.s32 %s153, 1
    %p157 = scmp.eq.s32.totalorder %s14, 1
    %p158 = scmp.ne.s32.totalorder %s153, %s155
    %p159 = scmp.eq.s32.totalorder %s14, 0
    %p160 = por %p158, %p159
    %p161 = scmp.ne.s32.totalorder %s153, %s155
    %p162 = scmp.eq.s32.totalorder %s19, 1
    %p163 = por %p161, %p162
    %p164 = scmp.ne.s32.totalorder %s155, %s156
    %p165 = scmp.eq.s32.totalorder %s19, 0
    %p166 = por %p164, %p165
    %p167 = scmp.ne.s32.totalorder %s155, %s156
    %p168 = scmp.eq.s32.totalorder %s20, 1
    %p169 = por %p167, %p168
    %p171 = scmp.ne.s32.totalorder %s156, %s170
    %p172 = scmp.eq.s32.totalorder %s20, 0
    %p173 = por %p171, %p172
    %s175 = sadd.s32 %s174, 1
    %p178 = scmp.eq.s32.totalorder %s14, 1
    %p179 = scmp.ne.s32.totalorder %s174, %s176
    %p180 = scmp.eq.s32.totalorder %s14, 0
    %p181 = por %p179, %p180
    %p182 = scmp.ne.s32.totalorder %s174, %s176
    %p183 = scmp.eq.s32.totalorder %s19, 1
    %p184 = por %p182, %p183
    %p185 = scmp.ne.s32.totalorder %s176, %s177
    %p186 = scmp.eq.s32.totalorder %s19, 0
    %p187 = por %p185, %p186
    %p188 = scmp.ne.s32.totalorder %s176, %s177
    %p189 = scmp.eq.s32.totalorder %s20, 1
    %p190 = por %p188, %p189
    %p192 = scmp.ne.s32.totalorder %s177, %s191
    %p193 = scmp.eq.s32.totalorder %s20, 0
    %p194 = por %p192, %p193
    %s195 = ssub.s32 %s14, %s21
    %p196 = scmp.eq.s32.totalorder %s195, 0
    %s198 = sadd.s32 %s197, 1
    %s199 = scalar_select %p196, %s197, %s198
    %p202 = pneg %p196
    %p203 = scmp.eq.s32.totalorder %s14, 1
    %p204 = por %p202, %p203
    %p205 = scmp.ne.s32.totalorder %s197, %s200
    %p206 = scmp.eq.s32.totalorder %s14, 0
    %p207 = por %p205, %p206
    %p208 = scmp.ne.s32.totalorder %s197, %s200
    %p209 = scmp.eq.s32.totalorder %s19, 1
    %p210 = por %p208, %p209
    %p211 = scmp.ne.s32.totalorder %s200, %s201
    %p212 = scmp.eq.s32.totalorder %s19, 0
    %p213 = por %p211, %p212
    %p214 = scmp.ne.s32.totalorder %s200, %s201
    %p215 = scmp.eq.s32.totalorder %s20, 1
    %p216 = por %p214, %p215
    %p218 = scmp.ne.s32.totalorder %s201, %s217
    %p219 = scmp.eq.s32.totalorder %s20, 0
    %p220 = por %p218, %p219
    %p221 = scmp.le.s32.totalorder 1, %s14
    %p222 = scmp.lt.s32.totalorder %s14, 3
    %p223 = pnand %p221, %p222
    %p224 = pneg %p223
    // Predicated region
    $region9: #{hourglass2d.10} parent=5 // pred_check
      _
    $region10: #{hourglass2d.10} parent=5 // pred_check_branch
      %226 = sbr.rel (%p223) target = $region12
    $region11: #{hourglass2d.10} parent=5 // pred_region
      %s227 = ssub.s32 %s14, 1
      // Predicated region
      $region13: #{hourglass2d.10} parent=11 // pred_check
        %p228 = pneg %p61
      $region14: #{hourglass2d.10} parent=11 // pred_check_branch
        %230 = sbr.rel (%p228) target = $region16
      $region15: #{hourglass2d.10} parent=11 // pred_region
        _
      $region16: #{hourglass2d.10} parent=11 // pred_fallthru
        _
      // Predicated region
      $region17: #{hourglass2d.10} parent=11 // pred_check
        %p231 = pneg %p82
      $region18: #{hourglass2d.10} parent=11 // pred_check_branch
        %233 = sbr.rel (%p231) target = $region20
      $region19: #{hourglass2d.10} parent=11 // pred_region
        _
      $region20: #{hourglass2d.10} parent=11 // pred_fallthru
        _
      // Predicated region
      $region21: #{hourglass2d.10} parent=11 // pred_check
        %p234 = pneg %p103
      $region22: #{hourglass2d.10} parent=11 // pred_check_branch
        %236 = sbr.rel (%p234) target = $region24
      $region23: #{hourglass2d.10} parent=11 // pred_region
        _
      $region24: #{hourglass2d.10} parent=11 // pred_fallthru
        _
      // Predicated region
      $region25: #{hourglass2d.10} parent=11 // pred_check
        %p237 = pneg %p124
      $region26: #{hourglass2d.10} parent=11 // pred_check_branch
        %239 = sbr.rel (%p237) target = $region28
      $region27: #{hourglass2d.10} parent=11 // pred_region
        _
      $region28: #{hourglass2d.10} parent=11 // pred_fallthru
        _
      // Predicated region
      $region29: #{hourglass2d.10} parent=11 // pred_check
        %p240 = pneg %p145
      $region30: #{hourglass2d.10} parent=11 // pred_check_branch
        %242 = sbr.rel (%p240) target = $region32
      $region31: #{hourglass2d.10} parent=11 // pred_region
        _
      $region32: #{hourglass2d.10} parent=11 // pred_fallthru
        _
      // Predicated region
      $region33: #{hourglass2d.10} parent=11 // pred_check
        %p243 = pneg %p166
      $region34: #{hourglass2d.10} parent=11 // pred_check_branch
        %245 = sbr.rel (%p243) target = $region36
      $region35: #{hourglass2d.10} parent=11 // pred_region
        _
      $region36: #{hourglass2d.10} parent=11 // pred_fallthru
        _
      // Predicated region
      $region37: #{hourglass2d.10} parent=11 // pred_check
        %p246 = pneg %p187
      $region38: #{hourglass2d.10} parent=11 // pred_check_branch
        %248 = sbr.rel (%p246) target = $region40
      $region39: #{hourglass2d.10} parent=11 // pred_region
        _
      $region40: #{hourglass2d.10} parent=11 // pred_fallthru
        _
    $region12: #{hourglass2d.10} parent=5 // pred_fallthru
      _
    %p249 = scmp.lt.s32.totalorder %s14, 2
    // Predicated region
    $region41: #{hourglass2d.10} parent=5 // pred_check
      %p250 = pneg %p249
    $region42: #{hourglass2d.10} parent=5 // pred_check_branch
      %252 = sbr.rel (%p250) target = $region44
    $region43: #{hourglass2d.10} parent=5 // pred_region
      // Predicated region
      $region45: #{hourglass2d.10} parent=43 // pred_check
        %p253 = pneg %p34
      $region46: #{hourglass2d.10} parent=43 // pred_check_branch
        %255 = sbr.rel (%p253) target = $region48
      $region47: #{hourglass2d.10} parent=43 // pred_region
        %p256 = scmp.lt.s32.totalorder %s14, 1
        %s257 = scalar_select %p256, %s14, 1
        %s258 = smul.addr %s257, 8
        %s259 = scalar_lea.vmem %s0, %s258
      $region48: #{hourglass2d.10} parent=43 // pred_fallthru
        _
    $region44: #{hourglass2d.10} parent=5 // pred_fallthru
      _
    %p260 = scmp.le.s32.totalorder 1, %s14
    %p261 = scmp.lt.s32.totalorder %s14, 3
    %p262 = pnand %p260, %p261
    %p263 = pneg %p262
    // Predicated region
    $region49: #{hourglass2d.10} parent=5 // pred_check
      _
    $region50: #{hourglass2d.10} parent=5 // pred_check_branch
      %265 = sbr.rel (%p262) target = $region52
    $region51: #{hourglass2d.10} parent=5 // pred_region
      %s266 = ssub.s32 %s14, 1
      %p267 = scmp.lt.s32.totalorder %s19, 1
      %s268 = scalar_select %p267, %s19, 1
      %s269 = smul.addr %s268, 8
      %s270 = scalar_lea.vmem %s0, %s269
      %p271 = pneg %p40
      %p272 = pneg %p37
      %p273 = pneg %p61
      %p274 = pneg %p58
      %p275 = pneg %p82
      %p276 = pneg %p79
      %p277 = pneg %p103
      %p278 = pneg %p100
      %p279 = pneg %p124
      %p280 = pneg %p121
      %p281 = pneg %p145
      %p282 = pneg %p142
      %p283 = pneg %p166
      %p284 = pneg %p163
      %p285 = pneg %p187
      %p286 = pneg %p184
      %p287 = pneg %p213
      %p288 = pneg %p210
      %p289 = scmp.lt.s32.totalorder %s19, 1
      %s290 = scalar_select %p289, %s19, 1
      %s291 = smul.addr %s290, 2
      %s292 = smul.addr %s291, 8
      %s293 = scalar_lea.vmem %s8, %s292
      %p294 = scmp.lt.s32.totalorder %s19, 1
      %s295 = scalar_select %p294, %s19, 1
      %s296 = smul.addr %s295, 8
      %s297 = scalar_lea.vmem %s0, %s296
      %p298 = scmp.lt.s32.totalorder %s19, 1
      %s299 = scalar_select %p298, %s19, 1
      %s300 = smul.addr %s299, 2
      %s301 = smul.addr %s300, 8
      %s302 = scalar_lea.vmem %s8, %s301
      %v303 = vld [vmem:[%s297] sm:$0xff]
      %v304 = vld [vmem:[%s1] sm:$0xff]
      %v305 = vld [vmem:[%s1 + $0x8] sm:$0xff]
      %v306 = vld [vmem:[%s2] sm:$0xff]
      %v307 = vld [vmem:[%s2 + $0x8] sm:$0xff]
      %309 = vset.pattern.permute.xlu0 0
      %310 = vperm.xlu0 %309, %v306
      %v311 = vpop.permute.xlu0 %310
      %314 = vset.pattern.permute.xlu0 0
      %315 = vperm.xlu0 %314, %v307
      %v316 = vpop.permute.xlu0 %315
      %vm318 = vcmask 64512
      %v320 = vsel %vm318, %v304, 0
      %v323 = vsel %vm318, %v305, 0
      %325 = vmatprep.subr.mxu0 0.0
      %326 = vmatpush1.msra.mxu0 0.0
      %327 = vmatprep.subr.mxu0 0.0
      %328 = vmatpush1.msra.mxu0 0.0
      %329 = vmatprep.subr.mxu0 0.0
      %330 = vmatpush1.msra.mxu0 0.0
      %331 = vmatprep.subr.mxu0 0.0
      %332 = vmatpush1.msra.mxu0 0.0
      %333 = vmatprep.subr.mxu0 0.0
      %334 = vmatpush1.msra.mxu0 0.0
      %335 = vmatprep.subr.mxu0 0.0
      %336 = vmatpush1.msra.mxu0 0.0
      %337 = vmatprep.subr.mxu0 0.0
      %338 = vmatpush1.msra.mxu0 0.0
      %339 = vmatprep.subr.mxu0 0.0
      %340 = vmatpush1.msra.mxu0 0.0
      %341 = vmatprep.subr.mxu0 0.0
      %342 = vmatpush1.msra.mxu0 0.0
      %343 = vmatprep.subr.mxu0 0.0
      %344 = vmatpush1.msra.mxu0 0.0
      %345 = vmatprep.subr.mxu0 0.0
      %346 = vmatpush1.msra.mxu0 0.0
      %347 = vmatprep.subr.mxu0 0.0
      %348 = vmatpush1.msra.mxu0 0.0
      %349 = vmatprep.subr.mxu0 0.0
      %350 = vmatpush1.msra.mxu0 0.0
      %351 = vmatprep.subr.mxu0 0.0
      %352 = vmatpush1.msra.mxu0 0.0
      %353 = vmatprep.subr.mxu0 0.0
      %354 = vmatpush1.msra.mxu0 0.0
      %355 = vmatprep.subr.mxu0 0.0
      %356 = vmatpush1.msra.mxu0 %v303
      %357 = vmatprep.subr.mxu0 0.0
      %358 = vmatpush2.msra.mxu0 0.0
      %359 = vmatprep.subr.mxu0 0.0
      %360 = vmatpush2.msra.mxu0 0.0
      %361 = vmatprep.subr.mxu0 0.0
      %362 = vmatpush2.msra.mxu0 0.0
      %363 = vmatprep.subr.mxu0 0.0
      %364 = vmatpush2.msra.mxu0 0.0
      %365 = vmatprep.subr.mxu0 0.0
      %366 = vmatpush2.msra.mxu0 0.0
      %367 = vmatprep.subr.mxu0 0.0
      %368 = vmatpush2.msra.mxu0 0.0
      %369 = vmatprep.subr.mxu0 0.0
      %370 = vmatpush2.msra.mxu0 0.0
      %371 = vmatprep.subr.mxu0 0.0
      %372 = vmatpush2.msra.mxu0 0.0
      %373 = vmatprep.subr.mxu0 0.0
      %374 = vmatpush2.msra.mxu0 0.0
      %375 = vmatprep.subr.mxu0 0.0
      %376 = vmatpush2.msra.mxu0 0.0
      %377 = vmatprep.subr.mxu0 0.0
      %378 = vmatpush2.msra.mxu0 0.0
      %379 = vmatprep.subr.mxu0 0.0
      %380 = vmatpush2.msra.mxu0 0.0
      %381 = vmatprep.subr.mxu0 0.0
      %382 = vmatpush2.msra.mxu0 0.0
      %383 = vmatprep.subr.mxu0 0.0
      %384 = vmatpush2.msra.mxu0 0.0
      %385 = vmatprep.subr.mxu0 0.0
      %386 = vmatpush2.msra.mxu0 0.0
      %387 = vmatprep.subr.mxu0 0.0
      %388 = vmatpush2.msra.mxu0 0.0
      %389 = vmatprep.mubr.f32.mxu0 0.0
      %390 = vmatmul.mubr.f32.gmra.mxu0 %v320
      %v391 = vpop.f32.mrf.mxu0
      %v392 = vadd.f32 %v311, %v391
      %v393 = vpop.f32.mrf.mxu0
      %394 = vmatprep.mubr.f32.mxu0 0.0
      %395 = vmatmul.mubr.f32.gmra.mxu0 %v323
      %v396 = vpop.f32.mrf.mxu0
      %v397 = vadd.f32 %v316, %v396
      %v398 = vpop.f32.mrf.mxu0
      %399 = vdwg.mxu0
      %v400 = vmax.f32 %v392, 0.0
      %v401 = vmax.f32 %v397, 0.0
      %v402 = vmin.f32 %v400, 6.0
      %v403 = vmin.f32 %v401, 6.0
      %v404 = vld [vmem:[%s3] sm:$0xff]
      %v405 = vld [vmem:[%s3 + $0x8] sm:$0xff]
      %v406 = vld [vmem:[%s7] sm:$0x1]
      %v407 = vld [vmem:[%s7 + $0x1] sm:$0x1]
      %v408 = vlaneseq
      %v409 = vshrl.u32 %v408, 7
      %v410 = vsub.s32 0, %v409
      %v411 = vrot.slane %v407, %v410
      %413 = vrot.lane.b32.xlu0 %v411, 43
      %v414 = vpop.permute.xlu0 %413
      %v416 = vmul.f32 %v402, %v414
      %v417 = vmul.f32 %v403, %v414
      %v418 = vlaneseq
      %v419 = vshrl.u32 %v418, 7
      %v420 = vsub.s32 0, %v419
      %v421 = vrot.slane %v406, %v420
      %423 = vrot.lane.b32.xlu0 %v421, 43
      %v424 = vpop.permute.xlu0 %423
      %v426 = vmul.f32 %v416, %v424
      %v427 = vmul.f32 %v417, %v424
      %429 = vset.pattern.permute.xlu0 0
      %430 = vperm.xlu0 %429, %v404
      %v431 = vpop.permute.xlu0 %430
      %434 = vset.pattern.permute.xlu0 0
      %435 = vperm.xlu0 %434, %v405
      %v436 = vpop.permute.xlu0 %435
      %v438 = vmul.f32 %v426, %v431
      %v439 = vmul.f32 %v427, %v436
      %v440 = vadd.f32 %v438, 0.0
      %v441 = vadd.f32 %v439, 0.0
      %442 = vrot.lane.b32.xlu0 %v411, 28
      %v443 = vpop.permute.xlu0 %442
      %v445 = vmul.f32 %v402, %v443
      %v446 = vmul.f32 %v403, %v443
      %447 = vset.pattern.permute.xlu0 1
      %448 = vperm.xlu0 %447, %v404
      %v449 = vpop.permute.xlu0 %448
      %451 = vset.pattern.permute.xlu0 1
      %452 = vperm.xlu0 %451, %v405
      %v453 = vpop.permute.xlu0 %452
      %v455 = vmul.f32 %v445, %v449
      %v456 = vmul.f32 %v446, %v453
      %459 = vrot.lane.b32.xlu0 %v455, 15
      %v460 = vpop.permute.xlu0 %459
      %461 = vrot.lane.b32.xlu0 %v456, 15
      %v462 = vpop.permute.xlu0 %461
      %v465 = vadd.f32 %v440, %v460
      %v466 = vadd.f32 %v441, %v462
      %467 = vrot.lane.b32.xlu0 %v411, 44
      %v468 = vpop.permute.xlu0 %467
      %v470 = vmul.f32 %v402, %v468
      %v471 = vmul.f32 %v403, %v468
      %472 = vset.pattern.permute.xlu0 2
      %473 = vperm.xlu0 %472, %v404
      %v474 = vpop.permute.xlu0 %473
      %476 = vset.pattern.permute.xlu0 2
      %477 = vperm.xlu0 %476, %v405
      %v478 = vpop.permute.xlu0 %477
      %v480 = vmul.f32 %v470, %v474
      %v481 = vmul.f32 %v471, %v478
      %484 = vrot.lane.b32.xlu0 %v480, 127
      %v485 = vpop.permute.xlu0 %484
      %486 = vrot.lane.b32.xlu0 %v481, 127
      %v487 = vpop.permute.xlu0 %486
      %v490 = vadd.f32 %v465, %v485
      %v491 = vadd.f32 %v466, %v487
      %492 = vrot.lane.b32.xlu0 %v421, 15
      %v493 = vpop.permute.xlu0 %492
      %v495 = vmul.f32 %v402, %v493
      %v496 = vmul.f32 %v403, %v493
      %497 = vset.pattern.permute.xlu0 3
      %498 = vperm.xlu0 %497, %v404
      %v499 = vpop.permute.xlu0 %498
      %501 = vset.pattern.permute.xlu0 3
      %502 = vperm.xlu0 %501, %v405
      %v503 = vpop.permute.xlu0 %502
      %v505 = vmul.f32 %v495, %v499
      %v506 = vmul.f32 %v496, %v503
      %509 = vrot.lane.b32.xlu0 %v505, 28
      %v510 = vpop.permute.xlu0 %509
      %511 = vrot.lane.b32.xlu0 %v506, 28
      %v512 = vpop.permute.xlu0 %511
      %v515 = vadd.f32 %v490, %v510
      %v516 = vadd.f32 %v491, %v512
      %517 = vset.pattern.permute.xlu0 4
      %518 = vperm.xlu0 %517, %v404
      %v519 = vpop.permute.xlu0 %518
      %521 = vset.pattern.permute.xlu0 4
      %522 = vperm.xlu0 %521, %v405
      %v523 = vpop.permute.xlu0 %522
      %v525 = vmul.f32 %v402, %v519
      %v526 = vmul.f32 %v403, %v523
      %529 = vrot.lane.b32.xlu0 %v525, 43
      %v530 = vpop.permute.xlu0 %529
      %531 = vrot.lane.b32.xlu0 %v526, 43
      %v532 = vpop.permute.xlu0 %531
      %v535 = vadd.f32 %v515, %v530
      %v536 = vadd.f32 %v516, %v532
      %537 = vset.pattern.permute.xlu0 5
      %538 = vperm.xlu0 %537, %v404
      %v539 = vpop.permute.xlu0 %538
      %541 = vset.pattern.permute.xlu0 5
      %542 = vperm.xlu0 %541, %v405
      %v543 = vpop.permute.xlu0 %542
      %v545 = vmul.f32 %v402, %v539
      %v546 = vmul.f32 %v403, %v543
      %549 = vrot.lane.b32.xlu0 %v545, 27
      %v550 = vpop.permute.xlu0 %549
      %551 = vrot.lane.b32.xlu0 %v546, 27
      %v552 = vpop.permute.xlu0 %551
      %v555 = vadd.f32 %v535, %v550
      %v556 = vadd.f32 %v536, %v552
      %557 = vrot.lane.b32.xlu0 %v421, 47
      %v558 = vpop.permute.xlu0 %557
      %v560 = vmul.f32 %v402, %v558
      %v561 = vmul.f32 %v403, %v558
      %562 = vset.pattern.permute.xlu0 6
      %563 = vperm.xlu0 %562, %v404
      %v564 = vpop.permute.xlu0 %563
      %566 = vset.pattern.permute.xlu0 6
      %567 = vperm.xlu0 %566, %v405
      %v568 = vpop.permute.xlu0 %567
      %v570 = vmul.f32 %v560, %v564
      %v571 = vmul.f32 %v561, %v568
      %574 = vrot.lane.b32.xlu0 %v570, 124
      %v575 = vpop.permute.xlu0 %574
      %576 = vrot.lane.b32.xlu0 %v571, 124
      %v577 = vpop.permute.xlu0 %576
      %v580 = vadd.f32 %v555, %v575
      %v581 = vadd.f32 %v556, %v577
      %582 = vset.pattern.permute.xlu0 7
      %583 = vperm.xlu0 %582, %v404
      %v584 = vpop.permute.xlu0 %583
      %586 = vset.pattern.permute.xlu0 7
      %587 = vperm.xlu0 %586, %v405
      %v588 = vpop.permute.xlu0 %587
      %v590 = vmul.f32 %v402, %v584
      %v591 = vmul.f32 %v403, %v588
      %594 = vrot.lane.b32.xlu0 %v590, 11
      %v595 = vpop.permute.xlu0 %594
      %596 = vrot.lane.b32.xlu0 %v591, 11
      %v597 = vpop.permute.xlu0 %596
      %v600 = vadd.f32 %v580, %v595
      %v601 = vadd.f32 %v581, %v597
      %602 = vset.pattern.permute.xlu0 8
      %603 = vperm.xlu0 %602, %v404
      %v604 = vpop.permute.xlu0 %603
      %606 = vset.pattern.permute.xlu0 8
      %607 = vperm.xlu0 %606, %v405
      %v608 = vpop.permute.xlu0 %607
      %v610 = vmul.f32 %v402, %v604
      %v611 = vmul.f32 %v403, %v608
      %614 = vrot.lane.b32.xlu0 %v610, 123
      %v615 = vpop.permute.xlu0 %614
      %616 = vrot.lane.b32.xlu0 %v611, 123
      %v617 = vpop.permute.xlu0 %616
      %v620 = vadd.f32 %v600, %v615
      %v621 = vadd.f32 %v601, %v617
      %v622 = vld [vmem:[%s4] sm:$0xff]
      %v623 = vld [vmem:[%s4 + $0x8] sm:$0xff]
      %625 = vset.pattern.permute.xlu0 0
      %626 = vperm.xlu0 %625, %v622
      %v627 = vpop.permute.xlu0 %626
      %630 = vset.pattern.permute.xlu0 0
      %631 = vperm.xlu0 %630, %v623
      %v632 = vpop.permute.xlu0 %631
      %v634 = vadd.f32 %v620, %v627
      %v635 = vadd.f32 %v621, %v632
      %v636 = vmax.f32 %v634, 0.0
      %v637 = vmax.f32 %v635, 0.0
      %v638 = vmin.f32 %v636, 6.0
      %v639 = vmin.f32 %v637, 6.0
      %v640 = vld [vmem:[%s5] sm:$0xff]
      %v641 = vld [vmem:[%s5 + $0x8] sm:$0xff]
      %v642 = vld [vmem:[%s6] sm:$0xff]
      %v643 = vld [vmem:[%s6 + $0x8] sm:$0xff]
      %645 = vset.pattern.permute.xlu0 0
      %646 = vperm.xlu0 %645, %v642
      %v647 = vpop.permute.xlu0 %646
      %650 = vset.pattern.permute.xlu0 0
      %651 = vperm.xlu0 %650, %v643
      %v652 = vpop.permute.xlu0 %651
      %656 = vrot.lane.b32.xlu0 %v638, 85
      %v657 = vpop.permute.xlu0 %656
      %658 = vrot.lane.b32.xlu0 %v639, 85
      %v659 = vpop.permute.xlu0 %658
      %vm662 = vcmask 130048
      %v664 = vsel %vm662, %v640, 0
      %v667 = vsel %vm662, %v641, 0
      %669 = vmatprep.subr.mxu0 0.0
      %670 = vmatpush1.msra.mxu0 0.0
      %671 = vmatprep.subr.mxu0 0.0
      %672 = vmatpush1.msra.mxu0 0.0
      %673 = vmatprep.subr.mxu0 0.0
      %674 = vmatpush1.msra.mxu0 0.0
      %675 = vmatprep.subr.mxu0 0.0
      %676 = vmatpush1.msra.mxu0 0.0
      %677 = vmatprep.subr.mxu0 0.0
      %678 = vmatpush1.msra.mxu0 0.0
      %679 = vmatprep.subr.mxu0 0.0
      %680 = vmatpush1.msra.mxu0 0.0
      %681 = vmatprep.subr.mxu0 0.0
      %682 = vmatpush1.msra.mxu0 0.0
      %683 = vmatprep.subr.mxu0 0.0
      %684 = vmatpush1.msra.mxu0 0.0
      %685 = vmatprep.subr.mxu0 0.0
      %686 = vmatpush1.msra.mxu0 0.0
      %687 = vmatprep.subr.mxu0 0.0
      %688 = vmatpush1.msra.mxu0 0.0
      %689 = vmatprep.subr.mxu0 0.0
      %690 = vmatpush1.msra.mxu0 0.0
      %691 = vmatprep.subr.mxu0 0.0
      %692 = vmatpush1.msra.mxu0 0.0
      %693 = vmatprep.subr.mxu0 0.0
      %694 = vmatpush1.msra.mxu0 0.0
      %695 = vmatprep.subr.mxu0 0.0
      %696 = vmatpush1.msra.mxu0 0.0
      %697 = vmatprep.subr.mxu0 0.0
      %698 = vmatpush1.msra.mxu0 %v659
      %699 = vmatprep.subr.mxu0 0.0
      %700 = vmatpush1.msra.mxu0 %v657
      %701 = vmatprep.subr.mxu0 0.0
      %702 = vmatpush2.msra.mxu0 0.0
      %703 = vmatprep.subr.mxu0 0.0
      %704 = vmatpush2.msra.mxu0 0.0
      %705 = vmatprep.subr.mxu0 0.0
      %706 = vmatpush2.msra.mxu0 0.0
      %707 = vmatprep.subr.mxu0 0.0
      %708 = vmatpush2.msra.mxu0 0.0
      %709 = vmatprep.subr.mxu0 0.0
      %710 = vmatpush2.msra.mxu0 0.0
      %711 = vmatprep.subr.mxu0 0.0
      %712 = vmatpush2.msra.mxu0 0.0
      %713 = vmatprep.subr.mxu0 0.0
      %714 = vmatpush2.msra.mxu0 0.0
      %715 = vmatprep.subr.mxu0 0.0
      %716 = vmatpush2.msra.mxu0 0.0
      %717 = vmatprep.subr.mxu0 0.0
      %718 = vmatpush2.msra.mxu0 0.0
      %719 = vmatprep.subr.mxu0 0.0
      %720 = vmatpush2.msra.mxu0 0.0
      %721 = vmatprep.subr.mxu0 0.0
      %722 = vmatpush2.msra.mxu0 0.0
      %723 = vmatprep.subr.mxu0 0.0
      %724 = vmatpush2.msra.mxu0 0.0
      %725 = vmatprep.subr.mxu0 0.0
      %726 = vmatpush2.msra.mxu0 0.0
      %727 = vmatprep.subr.mxu0 0.0
      %728 = vmatpush2.msra.mxu0 0.0
      %729 = vmatprep.subr.mxu0 0.0
      %730 = vmatpush2.msra.mxu0 0.0
      %731 = vmatprep.subr.mxu0 0.0
      %732 = vmatpush2.msra.mxu0 0.0
      %733 = vmatprep.mubr.f32.mxu0 0.0
      %734 = vmatmul.mubr.f32.gmra.mxu0 %v664
      %v735 = vpop.f32.mrf.mxu0
      %v736 = vadd.f32 %v647, %v735
      %v737 = vpop.f32.mrf.mxu0
      %738 = vmatprep.mubr.f32.mxu0 0.0
      %739 = vmatmul.mubr.f32.gmra.mxu0 %v667
      %v740 = vpop.f32.mrf.mxu0
      %v741 = vadd.f32 %v652, %v740
      %v742 = vpop.f32.mrf.mxu0
      %743 = vdwg.mxu0
      %744 = vst.msk [vmem:[%s302] sm:$0xff] %vm662, %v736
      %745 = vst.msk [vmem:[%s302 + $0x8] sm:$0xff] %vm662, %v741
      %p746 = scmp.lt.s32.totalorder %s19, 1
      %s747 = scalar_select %p746, %s19, 1
      %s748 = smul.addr %s747, 2
      %s749 = smul.addr %s748, 8
      %s750 = scalar_lea.vmem %s8, %s749
      // Predicated region
      $region53: #{hourglass2d.10} parent=51 // pred_check
        %p751 = pneg %p210
      $region54: #{hourglass2d.10} parent=51 // pred_check_branch
        %753 = sbr.rel (%p751) target = $region56
      $region55: #{hourglass2d.10} parent=51 // pred_region
        _
      $region56: #{hourglass2d.10} parent=51 // pred_fallthru
        _
    $region52: #{hourglass2d.10} parent=5 // pred_fallthru
      _
    %p754 = scmp.le.s32.totalorder 2, %s14
    // Predicated region
    $region57: #{hourglass2d.10} parent=5 // pred_check
      %p755 = pneg %p754
    $region58: #{hourglass2d.10} parent=5 // pred_check_branch
      %757 = sbr.rel (%p755) target = $region60
    $region59: #{hourglass2d.10} parent=5 // pred_region
      %s758 = ssub.s32 %s14, 2
      // Predicated region
      $region61: #{hourglass2d.10} parent=59 // pred_check
        %p759 = pneg %p216
      $region62: #{hourglass2d.10} parent=59 // pred_check_branch
        %761 = sbr.rel (%p759) target = $region64
      $region63: #{hourglass2d.10} parent=59 // pred_region
        %p762 = scmp.lt.s32.totalorder %s20, 1
        %s763 = scalar_select %p762, %s20, 1
        %s764 = smul.addr %s763, 2
        %s765 = smul.addr %s764, 8
        %s766 = scalar_lea.vmem %s8, %s765
      $region64: #{hourglass2d.10} parent=59 // pred_fallthru
        _
    $region60: #{hourglass2d.10} parent=5 // pred_fallthru
      _
  $region6: #{hourglass2d.10} parent=0 // loop_footer
    %s18 = sadd.s32 1, %s14
  $region7: #{hourglass2d.10} parent=0 // loop_footer_branch
    %13 = sbr.rel target = $region3
  $region8: #{hourglass2d.10} parent=0 // loop_exit
    _

// kernel: hourglass2d.11
$region0: #{hourglass2d.11}
  #allocation0 [shape = 'u32[]', space=smem, size = 0x4, offset = 0x4, fixed_abs, tag = 'smem constant byte address 0x4 - core index']
  #allocation1 [shape = 'u32[144,128]{1,0:T(1,128)}', space=vmem, size = 0x12000, scoped, tag = 'internal scratch']
  %s0 = inlined_call_operand.vmem [shape: f32[2,16,16], index: 0, kind: input, shape index: {}]
  %s1 = inlined_call_operand.vmem [shape: f32[32,16], index: 1, kind: input, shape index: {}]
  %s2 = inlined_call_operand.vmem [shape: f32[32,1], index: 2, kind: input, shape index: {}]
  %s3 = inlined_call_operand.vmem [shape: f32[32,9], index: 3, kind: input, shape index: {}]
  %s4 = inlined_call_operand.vmem [shape: f32[32,1], index: 4, kind: input, shape index: {}]
  %s5 = inlined_call_operand.vmem [shape: f32[16,32], index: 5, kind: input, shape index: {}]
  %s6 = inlined_call_operand.vmem [shape: f32[16,1], index: 6, kind: input, shape index: {}]
  %s7 = inlined_call_operand.vmem [shape: f32[2,16], index: 7, kind: input, shape index: {}]
  %s8 = inlined_call_operand.vmem [shape: f32[2,16,16], index: 8, kind: output, shape index: {}]
  %s9 = sld [smem:[#allocation0]]
  $region65: #{hourglass2d.11} parent=0
    _
  %s11 = ssub.s32 1, %s9
  %s12 = scalar_select 0, %s11, %s9
  loop: start=0, step=1, limit=4
  $region2: #{hourglass2d.11} parent=0 // loop_pre_header
    _
  $region3: #{hourglass2d.11} parent=0 // loop_header
    %s14 = sphi 0, %s18
    %p15 = scmp.ge.s32.totalorder %s14, 4
    %s24 = sphi 0, %s26
    %s27 = sphi 0, %s24
    %s28 = sphi 0, %s27
    %s44 = sphi 0, %s28
    %s48 = sphi 0, %s48
    %s50 = sphi 0, %s48
    %s51 = sphi 0, %s50
    %s65 = sphi 0, %s51
    %s69 = sphi 0, %s69
    %s71 = sphi 0, %s69
    %s72 = sphi 0, %s71
    %s86 = sphi 0, %s72
    %s90 = sphi 0, %s90
    %s92 = sphi 0, %s90
    %s93 = sphi 0, %s92
    %s107 = sphi 0, %s93
    %s111 = sphi 0, %s111
    %s113 = sphi 0, %s111
    %s114 = sphi 0, %s113
    %s128 = sphi 0, %s114
    %s132 = sphi 0, %s132
    %s134 = sphi 0, %s132
    %s135 = sphi 0, %s134
    %s149 = sphi 0, %s135
    %s153 = sphi 0, %s153
    %s155 = sphi 0, %s153
    %s156 = sphi 0, %s155
    %s170 = sphi 0, %s156
    %s174 = sphi 0, %s174
    %s176 = sphi 0, %s174
    %s177 = sphi 0, %s176
    %s191 = sphi 0, %s177
    %s197 = sphi 0, %s199
    %s200 = sphi 0, %s197
    %s201 = sphi 0, %s200
    %s217 = sphi 0, %s201
  $region4: #{hourglass2d.11} parent=0 // loop_header_branch
    %17 = sbr.rel (%p15) target = $region8
  $region5: #{hourglass2d.11} parent=0 // loop_body
    %s19 = ssub.s32 %s14, 1
    %s20 = ssub.s32 %s14, 2
    %s21 = sadd.s32 %s14, 1
    %s22 = ssub.s32 %s14, %s21
    %p23 = scmp.eq.s32.totalorder %s22, 0
    %s25 = sadd.s32 %s24, 1
    %s26 = scalar_select %p23, %s24, %s25
    %p29 = pneg %p23
    %p30 = scmp.eq.s32.totalorder %s14, 1
    %p31 = por %p29, %p30
    %p32 = scmp.ne.s32.totalorder %s24, %s27
    %p33 = scmp.eq.s32.totalorder %s14, 0
    %p34 = por %p32, %p33
    %p35 = scmp.ne.s32.totalorder %s24, %s27
    %p36 = scmp.eq.s32.totalorder %s19, 1
    %p37 = por %p35, %p36
    %p38 = scmp.ne.s32.totalorder %s27, %s28
    %p39 = scmp.eq.s32.totalorder %s19, 0
    %p40 = por %p38, %p39
    %p41 = scmp.ne.s32.totalorder %s27, %s28
    %p42 = scmp.eq.s32.totalorder %s20, 1
    %p43 = por %p41, %p42
    %p45 = scmp.ne.s32.totalorder %s28, %s44
    %p46 = scmp.eq.s32.totalorder %s20, 0
    %p47 = por %p45, %p46
    %s49 = sadd.s32 %s48, 1
    %p52 = scmp.eq.s32.totalorder %s14, 1
    %p53 = scmp.ne.s32.totalorder %s48, %s50
    %p54 = scmp.eq.s32.totalorder %s14, 0
    %p55 = por %p53, %p54
    %p56 = scmp.ne.s32.totalorder %s48, %s50
    %p57 = scmp.eq.s32.totalorder %s19, 1
    %p58 = por %p56, %p57
    %p59 = scmp.ne.s32.totalorder %s50, %s51
    %p60 = scmp.eq.s32.totalorder %s19, 0
    %p61 = por %p59, %p60
    %p62 = scmp.ne.s32.totalorder %s50, %s51
    %p63 = scmp.eq.s32.totalorder %s20, 1
    %p64 = por %p62, %p63
    %p66 = scmp.ne.s32.totalorder %s51, %s65
    %p67 = scmp.eq.s32.totalorder %s20, 0
    %p68 = por %p66, %p67
    %s70 = sadd.s32 %s69, 1
    %p73 = scmp.eq.s32.totalorder %s14, 1
    %p74 = scmp.ne.s32.totalorder %s69, %s71
    %p75 = scmp.eq.s32.totalorder %s14, 0
    %p76 = por %p74, %p75
    %p77 = scmp.ne.s32.totalorder %s69, %s71
    %p78 = scmp.eq.s32.totalorder %s19, 1
    %p79 = por %p77, %p78
    %p80 = scmp.ne.s32.totalorder %s71, %s72
    %p81 = scmp.eq.s32.totalorder %s19, 0
    %p82 = por %p80, %p81
    %p83 = scmp.ne.s32.totalorder %s71, %s72
    %p84 = scmp.eq.s32.totalorder %s20, 1
    %p85 = por %p83, %p84
    %p87 = scmp.ne.s32.totalorder %s72, %s86
    %p88 = scmp.eq.s32.totalorder %s20, 0
    %p89 = por %p87, %p88
    %s91 = sadd.s32 %s90, 1
    %p94 = scmp.eq.s32.totalorder %s14, 1
    %p95 = scmp.ne.s32.totalorder %s90, %s92
    %p96 = scmp.eq.s32.totalorder %s14, 0
    %p97 = por %p95, %p96
    %p98 = scmp.ne.s32.totalorder %s90, %s92
    %p99 = scmp.eq.s32.totalorder %s19, 1
    %p100 = por %p98, %p99
    %p101 = scmp.ne.s32.totalorder %s92, %s93
    %p102 = scmp.eq.s32.totalorder %s19, 0
    %p103 = por %p101, %p102
    %p104 = scmp.ne.s32.totalorder %s92, %s93
    %p105 = scmp.eq.s32.totalorder %s20, 1
    %p106 = por %p104, %p105
    %p108 = scmp.ne.s32.totalorder %s93, %s107
    %p109 = scmp.eq.s32.totalorder %s20, 0
    %p110 = por %p108, %p109
    %s112 = sadd.s32 %s111, 1
    %p115 = scmp.eq.s32.totalorder %s14, 1
    %p116 = scmp.ne.s32.totalorder %s111, %s113
    %p117 = scmp.eq.s32.totalorder %s14, 0
    %p118 = por %p116, %p117
    %p119 = scmp.ne.s32.totalorder %s111, %s113
    %p120 = scmp.eq.s32.totalorder %s19, 1
    %p121 = por %p119, %p120
    %p122 = scmp.ne.s32.totalorder %s113, %s114
    %p123 = scmp.eq.s32.totalorder %s19, 0
    %p124 = por %p122, %p123
    %p125 = scmp.ne.s32.totalorder %s113, %s114
    %p126 = scmp.eq.s32.totalorder %s20, 1
    %p127 = por %p125, %p126
    %p129 = scmp.ne.s32.totalorder %s114, %s128
    %p130 = scmp.eq.s32.totalorder %s20, 0
    %p131 = por %p129, %p130
    %s133 = sadd.s32 %s132, 1
    %p136 = scmp.eq.s32.totalorder %s14, 1
    %p137 = scmp.ne.s32.totalorder %s132, %s134
    %p138 = scmp.eq.s32.totalorder %s14, 0
    %p139 = por %p137, %p138
    %p140 = scmp.ne.s32.totalorder %s132, %s134
    %p141 = scmp.eq.s32.totalorder %s19, 1
    %p142 = por %p140, %p141
    %p143 = scmp.ne.s32.totalorder %s134, %s135
    %p144 = scmp.eq.s32.totalorder %s19, 0
    %p145 = por %p143, %p144
    %p146 = scmp.ne.s32.totalorder %s134, %s135
    %p147 = scmp.eq.s32.totalorder %s20, 1
    %p148 = por %p146, %p147
    %p150 = scmp.ne.s32.totalorder %s135, %s149
    %p151 = scmp.eq.s32.totalorder %s20, 0
    %p152 = por %p150, %p151
    %s154 = sadd.s32 %s153, 1
    %p157 = scmp.eq.s32.totalorder %s14, 1
    %p158 = scmp.ne.s32.totalorder %s153, %s155
    %p159 = scmp.eq.s32.totalorder %s14, 0
    %p160 = por %p158, %p159
    %p161 = scmp.ne.s32.totalorder %s153, %s155
    %p162 = scmp.eq.s32.totalorder %s19, 1
    %p163 = por %p161, %p162
    %p164 = scmp.ne.s32.totalorder %s155, %s156
    %p165 = scmp.eq.s32.totalorder %s19, 0
    %p166 = por %p164, %p165
    %p167 = scmp.ne.s32.totalorder %s155, %s156
    %p168 = scmp.eq.s32.totalorder %s20, 1
    %p169 = por %p167, %p168
    %p171 = scmp.ne.s32.totalorder %s156, %s170
    %p172 = scmp.eq.s32.totalorder %s20, 0
    %p173 = por %p171, %p172
    %s175 = sadd.s32 %s174, 1
    %p178 = scmp.eq.s32.totalorder %s14, 1
    %p179 = scmp.ne.s32.totalorder %s174, %s176
    %p180 = scmp.eq.s32.totalorder %s14, 0
    %p181 = por %p179, %p180
    %p182 = scmp.ne.s32.totalorder %s174, %s176
    %p183 = scmp.eq.s32.totalorder %s19, 1
    %p184 = por %p182, %p183
    %p185 = scmp.ne.s32.totalorder %s176, %s177
    %p186 = scmp.eq.s32.totalorder %s19, 0
    %p187 = por %p185, %p186
    %p188 = scmp.ne.s32.totalorder %s176, %s177
    %p189 = scmp.eq.s32.totalorder %s20, 1
    %p190 = por %p188, %p189
    %p192 = scmp.ne.s32.totalorder %s177, %s191
    %p193 = scmp.eq.s32.totalorder %s20, 0
    %p194 = por %p192, %p193
    %s195 = ssub.s32 %s14, %s21
    %p196 = scmp.eq.s32.totalorder %s195, 0
    %s198 = sadd.s32 %s197, 1
    %s199 = scalar_select %p196, %s197, %s198
    %p202 = pneg %p196
    %p203 = scmp.eq.s32.totalorder %s14, 1
    %p204 = por %p202, %p203
    %p205 = scmp.ne.s32.totalorder %s197, %s200
    %p206 = scmp.eq.s32.totalorder %s14, 0
    %p207 = por %p205, %p206
    %p208 = scmp.ne.s32.totalorder %s197, %s200
    %p209 = scmp.eq.s32.totalorder %s19, 1
    %p210 = por %p208, %p209
    %p211 = scmp.ne.s32.totalorder %s200, %s201
    %p212 = scmp.eq.s32.totalorder %s19, 0
    %p213 = por %p211, %p212
    %p214 = scmp.ne.s32.totalorder %s200, %s201
    %p215 = scmp.eq.s32.totalorder %s20, 1
    %p216 = por %p214, %p215
    %p218 = scmp.ne.s32.totalorder %s201, %s217
    %p219 = scmp.eq.s32.totalorder %s20, 0
    %p220 = por %p218, %p219
    %p221 = scmp.le.s32.totalorder 1, %s14
    %p222 = scmp.lt.s32.totalorder %s14, 3
    %p223 = pnand %p221, %p222
    %p224 = pneg %p223
    // Predicated region
    $region9: #{hourglass2d.11} parent=5 // pred_check
      _
    $region10: #{hourglass2d.11} parent=5 // pred_check_branch
      %226 = sbr.rel (%p223) target = $region12
    $region11: #{hourglass2d.11} parent=5 // pred_region
      %s227 = ssub.s32 %s14, 1
      // Predicated region
      $region13: #{hourglass2d.11} parent=11 // pred_check
        %p228 = pneg %p61
      $region14: #{hourglass2d.11} parent=11 // pred_check_branch
        %230 = sbr.rel (%p228) target = $region16
      $region15: #{hourglass2d.11} parent=11 // pred_region
        _
      $region16: #{hourglass2d.11} parent=11 // pred_fallthru
        _
      // Predicated region
      $region17: #{hourglass2d.11} parent=11 // pred_check
        %p231 = pneg %p82
      $region18: #{hourglass2d.11} parent=11 // pred_check_branch
        %233 = sbr.rel (%p231) target = $region20
      $region19: #{hourglass2d.11} parent=11 // pred_region
        _
      $region20: #{hourglass2d.11} parent=11 // pred_fallthru
        _
      // Predicated region
      $region21: #{hourglass2d.11} parent=11 // pred_check
        %p234 = pneg %p103
      $region22: #{hourglass2d.11} parent=11 // pred_check_branch
        %236 = sbr.rel (%p234) target = $region24
      $region23: #{hourglass2d.11} parent=11 // pred_region
        _
      $region24: #{hourglass2d.11} parent=11 // pred_fallthru
        _
      // Predicated region
      $region25: #{hourglass2d.11} parent=11 // pred_check
        %p237 = pneg %p124
      $region26: #{hourglass2d.11} parent=11 // pred_check_branch
        %239 = sbr.rel (%p237) target = $region28
      $region27: #{hourglass2d.11} parent=11 // pred_region
        _
      $region28: #{hourglass2d.11} parent=11 // pred_fallthru
        _
      // Predicated region
      $region29: #{hourglass2d.11} parent=11 // pred_check
        %p240 = pneg %p145
      $region30: #{hourglass2d.11} parent=11 // pred_check_branch
        %242 = sbr.rel (%p240) target = $region32
      $region31: #{hourglass2d.11} parent=11 // pred_region
        _
      $region32: #{hourglass2d.11} parent=11 // pred_fallthru
        _
      // Predicated region
      $region33: #{hourglass2d.11} parent=11 // pred_check
        %p243 = pneg %p166
      $region34: #{hourglass2d.11} parent=11 // pred_check_branch
        %245 = sbr.rel (%p243) target = $region36
      $region35: #{hourglass2d.11} parent=11 // pred_region
        _
      $region36: #{hourglass2d.11} parent=11 // pred_fallthru
        _
      // Predicated region
      $region37: #{hourglass2d.11} parent=11 // pred_check
        %p246 = pneg %p187
      $region38: #{hourglass2d.11} parent=11 // pred_check_branch
        %248 = sbr.rel (%p246) target = $region40
      $region39: #{hourglass2d.11} parent=11 // pred_region
        _
      $region40: #{hourglass2d.11} parent=11 // pred_fallthru
        _
    $region12: #{hourglass2d.11} parent=5 // pred_fallthru
      _
    %p249 = scmp.lt.s32.totalorder %s14, 2
    // Predicated region
    $region41: #{hourglass2d.11} parent=5 // pred_check
      %p250 = pneg %p249
    $region42: #{hourglass2d.11} parent=5 // pred_check_branch
      %252 = sbr.rel (%p250) target = $region44
    $region43: #{hourglass2d.11} parent=5 // pred_region
      // Predicated region
      $region45: #{hourglass2d.11} parent=43 // pred_check
        %p253 = pneg %p34
      $region46: #{hourglass2d.11} parent=43 // pred_check_branch
        %255 = sbr.rel (%p253) target = $region48
      $region47: #{hourglass2d.11} parent=43 // pred_region
        %p256 = scmp.lt.s32.totalorder %s14, 1
        %s257 = scalar_select %p256, %s14, 1
        %s258 = smul.addr %s257, 2
        %s259 = smul.addr %s258, 8
        %s260 = scalar_lea.vmem %s0, %s259
      $region48: #{hourglass2d.11} parent=43 // pred_fallthru
        _
    $region44: #{hourglass2d.11} parent=5 // pred_fallthru
      _
    %p261 = scmp.le.s32.totalorder 1, %s14
    %p262 = scmp.lt.s32.totalorder %s14, 3
    %p263 = pnand %p261, %p262
    %p264 = pneg %p263
    // Predicated region
    $region49: #{hourglass2d.11} parent=5 // pred_check
      _
    $region50: #{hourglass2d.11} parent=5 // pred_check_branch
      %266 = sbr.rel (%p263) target = $region52
    $region51: #{hourglass2d.11} parent=5 // pred_region
      %s267 = ssub.s32 %s14, 1
      %p268 = scmp.lt.s32.totalorder %s19, 1
      %s269 = scalar_select %p268, %s19, 1
      %s270 = smul.addr %s269, 2
      %s271 = smul.addr %s270, 8
      %s272 = scalar_lea.vmem %s0, %s271
      %p273 = pneg %p40
      %p274 = pneg %p37
      %p275 = pneg %p61
      %p276 = pneg %p58
      %p277 = pneg %p82
      %p278 = pneg %p79
      %p279 = pneg %p103
      %p280 = pneg %p100
      %p281 = pneg %p124
      %p282 = pneg %p121
      %p283 = pneg %p145
      %p284 = pneg %p142
      %p285 = pneg %p166
      %p286 = pneg %p163
      %p287 = pneg %p187
      %p288 = pneg %p184
      %p289 = pneg %p213
      %p290 = pneg %p210
      %p291 = scmp.lt.s32.totalorder %s19, 1
      %s292 = scalar_select %p291, %s19, 1
      %s293 = smul.addr %s292, 2
      %s294 = smul.addr %s293, 8
      %s295 = scalar_lea.vmem %s8, %s294
      %p296 = scmp.lt.s32.totalorder %s19, 1
      %s297 = scalar_select %p296, %s19, 1
      %s298 = smul.addr %s297, 2
      %s299 = smul.addr %s298, 8
      %s300 = scalar_lea.vmem %s0, %s299
      %p301 = scmp.lt.s32.totalorder %s19, 1
      %s302 = scalar_select %p301, %s19, 1
      %s303 = smul.addr %s302, 2
      %s304 = smul.addr %s303, 8
      %s305 = scalar_lea.vmem %s8, %s304
      %v306 = vld [vmem:[%s300] sm:$0xff]
      %v307 = vld [vmem:[%s300 + $0x8] sm:$0xff]
      %v308 = vld [vmem:[%s1] sm:$0xff]
      %v309 = vld [vmem:[%s1 + $0x8] sm:$0xff]
      %v310 = vld [vmem:[%s1 + $0x10] sm:$0xff]
      %v311 = vld [vmem:[%s1 + $0x18] sm:$0xff]
      %v312 = vld [vmem:[%s2] sm:$0xff]
      %v313 = vld [vmem:[%s2 + $0x8] sm:$0xff]
      %v314 = vld [vmem:[%s2 + $0x10] sm:$0xff]
      %v315 = vld [vmem:[%s2 + $0x18] sm:$0xff]
      %317 = vset.pattern.permute.xlu0 0
      %318 = vperm.xlu0 %317, %v312
      %v319 = vpop.permute.xlu0 %318
      %322 = vset.pattern.permute.xlu0 0
      %323 = vperm.xlu0 %322, %v313
      %v324 = vpop.permute.xlu0 %323
      %327 = vset.pattern.permute.xlu0 0
      %328 = vperm.xlu0 %327, %v314
      %v329 = vpop.permute.xlu0 %328
      %332 = vset.pattern.permute.xlu0 0
      %333 = vperm.xlu0 %332, %v315
      %v334 = vpop.permute.xlu0 %333
      %vm336 = vcmask 130048
      %v338 = vsel %vm336, %v308, 0
      %v341 = vsel %vm336, %v309, 0
      %v344 = vsel %vm336, %v310, 0
      %v347 = vsel %vm336, %v311, 0
      %349 = vmatprep.subr.mxu0 0.0
      %350 = vmatpush1.msra.mxu0 0.0
      %351 = vmatprep.subr.mxu0 0.0
      %352 = vmatpush1.msra.mxu0 0.0
      %353 = vmatprep.subr.mxu0 0.0
      %354 = vmatpush1.msra.mxu0 0.0
      %355 = vmatprep.subr.mxu0 0.0
      %356 = vmatpush1.msra.mxu0 0.0
      %357 = vmatprep.subr.mxu0 0.0
      %358 = vmatpush1.msra.mxu0 0.0
      %359 = vmatprep.subr.mxu0 0.0
      %360 = vmatpush1.msra.mxu0 0.0
      %361 = vmatprep.subr.mxu0 0.0
      %362 = vmatpush1.msra.mxu0 0.0
      %363 = vmatprep.subr.mxu0 0.0
      %364 = vmatpush1.msra.mxu0 0.0
      %365 = vmatprep.subr.mxu0 0.0
      %366 = vmatpush1.msra.mxu0 0.0
      %367 = vmatprep.subr.mxu0 0.0
      %368 = vmatpush1.msra.mxu0 0.0
      %369 = vmatprep.subr.mxu0 0.0
      %370 = vmatpush1.msra.mxu0 0.0
      %371 = vmatprep.subr.mxu0 0.0
      %372 = vmatpush1.msra.mxu0 0.0
      %373 = vmatprep.subr.mxu0 0.0
      %374 = vmatpush1.msra.mxu0 0.0
      %375 = vmatprep.subr.mxu0 0.0
      %376 = vmatpush1.msra.mxu0 0.0
      %377 = vmatprep.subr.mxu0 0.0
      %378 = vmatpush1.msra.mxu0 %v307
      %379 = vmatprep.subr.mxu0 0.0
      %380 = vmatpush1.msra.mxu0 %v306
      %381 = vmatprep.subr.mxu0 0.0
      %382 = vmatpush2.msra.mxu0 0.0
      %383 = vmatprep.subr.mxu0 0.0
      %384 = vmatpush2.msra.mxu0 0.0
      %385 = vmatprep.subr.mxu0 0.0
      %386 = vmatpush2.msra.mxu0 0.0
      %387 = vmatprep.subr.mxu0 0.0
      %388 = vmatpush2.msra.mxu0 0.0
      %389 = vmatprep.subr.mxu0 0.0
      %390 = vmatpush2.msra.mxu0 0.0
      %391 = vmatprep.subr.mxu0 0.0
      %392 = vmatpush2.msra.mxu0 0.0
      %393 = vmatprep.subr.mxu0 0.0
      %394 = vmatpush2.msra.mxu0 0.0
      %395 = vmatprep.subr.mxu0 0.0
      %396 = vmatpush2.msra.mxu0 0.0
      %397 = vmatprep.subr.mxu0 0.0
      %398 = vmatpush2.msra.mxu0 0.0
      %399 = vmatprep.subr.mxu0 0.0
      %400 = vmatpush2.msra.mxu0 0.0
      %401 = vmatprep.subr.mxu0 0.0
      %402 = vmatpush2.msra.mxu0 0.0
      %403 = vmatprep.subr.mxu0 0.0
      %404 = vmatpush2.msra.mxu0 0.0
      %405 = vmatprep.subr.mxu0 0.0
      %406 = vmatpush2.msra.mxu0 0.0
      %407 = vmatprep.subr.mxu0 0.0
      %408 = vmatpush2.msra.mxu0 0.0
      %409 = vmatprep.subr.mxu0 0.0
      %410 = vmatpush2.msra.mxu0 0.0
      %411 = vmatprep.subr.mxu0 0.0
      %412 = vmatpush2.msra.mxu0 0.0
      %413 = vmatprep.mubr.f32.mxu0 0.0
      %414 = vmatmul.mubr.f32.gmra.mxu0 %v338
      %v415 = vpop.f32.mrf.mxu0
      %v416 = vadd.f32 %v319, %v415
      %v417 = vpop.f32.mrf.mxu0
      %418 = vmatprep.mubr.f32.mxu0 0.0
      %419 = vmatmul.mubr.f32.gmra.mxu0 %v341
      %v420 = vpop.f32.mrf.mxu0
      %v421 = vadd.f32 %v324, %v420
      %v422 = vpop.f32.mrf.mxu0
      %423 = vmatprep.mubr.f32.mxu0 0.0
      %424 = vmatmul.mubr.f32.gmra.mxu0 %v344
      %v425 = vpop.f32.mrf.mxu0
      %v426 = vadd.f32 %v329, %v425
      %v427 = vpop.f32.mrf.mxu0
      %428 = vmatprep.mubr.f32.mxu0 0.0
      %429 = vmatmul.mubr.f32.gmra.mxu0 %v347
      %v430 = vpop.f32.mrf.mxu0
      %v431 = vadd.f32 %v334, %v430
      %v432 = vpop.f32.mrf.mxu0
      %433 = vdwg.mxu0
      %v434 = vmax.f32 %v416, 0.0
      %v435 = vmax.f32 %v421, 0.0
      %v436 = vmax.f32 %v426, 0.0
      %v437 = vmax.f32 %v431, 0.0
      %v438 = vmin.f32 %v434, 6.0
      %v439 = vmin.f32 %v435, 6.0
      %v440 = vmin.f32 %v436, 6.0
      %v441 = vmin.f32 %v437, 6.0
      %446 = vrot.lane.b32.xlu0 %v438, 5
      %v447 = vpop.permute.xlu0 %446
      %448 = vrot.lane.b32.xlu0 %v439, 5
      %v449 = vpop.permute.xlu0 %448
      %450 = vrot.lane.b32.xlu0 %v440, 5
      %v451 = vpop.permute.xlu0 %450
      %452 = vrot.lane.b32.xlu0 %v441, 5
      %v453 = vpop.permute.xlu0 %452
      %vm458 = vcmask 39936
      %v459 = vsel %vm458, 0.0, %v447
      %v460 = vsel %vm458, 0.0, %v449
      %v461 = vsel %vm458, 0.0, %v451
      %v462 = vsel %vm458, 0.0, %v453
      %vm463 = vcmask 171008
      %v464 = vsel %vm463, %v459, 0.0
      %v465 = vsel %vm463, %v460, 0.0
      %v466 = vsel %vm463, %v461, 0.0
      %v467 = vsel %vm463, %v462, 0.0
      %v468 = vld [vmem:[%s3] sm:$0xff]
      %v469 = vld [vmem:[%s3 + $0x8] sm:$0xff]
      %v470 = vld [vmem:[%s3 + $0x10] sm:$0xff]
      %v471 = vld [vmem:[%s3 + $0x18] sm:$0xff]
      %v472 = vld [vmem:[%s7] sm:$0x1]
      %v473 = vld [vmem:[%s7 + $0x1] sm:$0x1]
      %v474 = vlaneseq
      %v475 = vshrl.u32 %v474, 7
      %v476 = vsub.s32 0, %v475
      %v477 = vrot.slane %v472, %v476
      %v478 = vmul.f32 %v464, %v477
      %v479 = vmul.f32 %v465, %v477
      %v480 = vmul.f32 %v466, %v477
      %v481 = vmul.f32 %v467, %v477
      %483 = vset.pattern.permute.xlu0 0
      %484 = vperm.xlu0 %483, %v468
      %v485 = vpop.permute.xlu0 %484
      %488 = vset.pattern.permute.xlu0 0
      %489 = vperm.xlu0 %488, %v469
      %v490 = vpop.permute.xlu0 %489
      %493 = vset.pattern.permute.xlu0 0
      %494 = vperm.xlu0 %493, %v470
      %v495 = vpop.permute.xlu0 %494
      %498 = vset.pattern.permute.xlu0 0
      %499 = vperm.xlu0 %498, %v471
      %v500 = vpop.permute.xlu0 %499
      %v502 = vmul.f32 %v478, %v485
      %v503 = vmul.f32 %v479, %v490
      %v504 = vmul.f32 %v480, %v495
      %v505 = vmul.f32 %v481, %v500
      %v506 = vadd.f32 %v502, 0.0
      %v507 = vadd.f32 %v503, 0.0
      %v508 = vadd.f32 %v504, 0.0
      %v509 = vadd.f32 %v505, 0.0
      %510 = vset.pattern.permute.xlu0 1
      %511 = vperm.xlu0 %510, %v468
      %v512 = vpop.permute.xlu0 %511
      %514 = vset.pattern.permute.xlu0 1
      %515 = vperm.xlu0 %514, %v469
      %v516 = vpop.permute.xlu0 %515
      %518 = vset.pattern.permute.xlu0 1
      %519 = vperm.xlu0 %518, %v470
      %v520 = vpop.permute.xlu0 %519
      %522 = vset.pattern.permute.xlu0 1
      %523 = vperm.xlu0 %522, %v471
      %v524 = vpop.permute.xlu0 %523
      %v526 = vmul.f32 %v464, %v512
      %v527 = vmul.f32 %v465, %v516
      %v528 = vmul.f32 %v466, %v520
      %v529 = vmul.f32 %v467, %v524
      %534 = vrot.lane.b32.xlu0 %v526, 127
      %v535 = vpop.permute.xlu0 %534
      %536 = vrot.lane.b32.xlu0 %v527, 127
      %v537 = vpop.permute.xlu0 %536
      %538 = vrot.lane.b32.xlu0 %v528, 127
      %v539 = vpop.permute.xlu0 %538
      %540 = vrot.lane.b32.xlu0 %v529, 127
      %v541 = vpop.permute.xlu0 %540
      %v546 = vadd.f32 %v506, %v535
      %v547 = vadd.f32 %v507, %v537
      %v548 = vadd.f32 %v508, %v539
      %v549 = vadd.f32 %v509, %v541
      %v550 = vlaneseq
      %v551 = vshrl.u32 %v550, 7
      %v552 = vsub.s32 0, %v551
      %v553 = vrot.slane %v473, %v552
      %555 = vrot.lane.b32.xlu0 %v553, 2
      %v556 = vpop.permute.xlu0 %555
      %v558 = vmul.f32 %v464, %v556
      %v559 = vmul.f32 %v465, %v556
      %v560 = vmul.f32 %v466, %v556
      %v561 = vmul.f32 %v467, %v556
      %562 = vset.pattern.permute.xlu0 2
      %563 = vperm.xlu0 %562, %v468
      %v564 = vpop.permute.xlu0 %563
      %566 = vset.pattern.permute.xlu0 2
      %567 = vperm.xlu0 %566, %v469
      %v568 = vpop.permute.xlu0 %567
      %570 = vset.pattern.permute.xlu0 2
      %571 = vperm.xlu0 %570, %v470
      %v572 = vpop.permute.xlu0 %571
      %574 = vset.pattern.permute.xlu0 2
      %575 = vperm.xlu0 %574, %v471
      %v576 = vpop.permute.xlu0 %575
      %v578 = vmul.f32 %v558, %v564
      %v579 = vmul.f32 %v559, %v568
      %v580 = vmul.f32 %v560, %v572
      %v581 = vmul.f32 %v561, %v576
      %586 = vrot.lane.b32.xlu0 %v578, 126
      %v587 = vpop.permute.xlu0 %586
      %588 = vrot.lane.b32.xlu0 %v579, 126
      %v589 = vpop.permute.xlu0 %588
      %590 = vrot.lane.b32.xlu0 %v580, 126
      %v591 = vpop.permute.xlu0 %590
      %592 = vrot.lane.b32.xlu0 %v581, 126
      %v593 = vpop.permute.xlu0 %592
      %v598 = vadd.f32 %v546, %v587
      %v599 = vadd.f32 %v547, %v589
      %v600 = vadd.f32 %v548, %v591
      %v601 = vadd.f32 %v549, %v593
      %603 = vrot.lane.b32.xlu0 %v477, 4
      %v604 = vpop.permute.xlu0 %603
      %v606 = vmul.f32 %v464, %v604
      %v607 = vmul.f32 %v465, %v604
      %v608 = vmul.f32 %v466, %v604
      %v609 = vmul.f32 %v467, %v604
      %610 = vset.pattern.permute.xlu0 3
      %611 = vperm.xlu0 %610, %v468
      %v612 = vpop.permute.xlu0 %611
      %614 = vset.pattern.permute.xlu0 3
      %615 = vperm.xlu0 %614, %v469
      %v616 = vpop.permute.xlu0 %615
      %618 = vset.pattern.permute.xlu0 3
      %619 = vperm.xlu0 %618, %v470
      %v620 = vpop.permute.xlu0 %619
      %622 = vset.pattern.permute.xlu0 3
      %623 = vperm.xlu0 %622, %v471
      %v624 = vpop.permute.xlu0 %623
      %v626 = vmul.f32 %v606, %v612
      %v627 = vmul.f32 %v607, %v616
      %v628 = vmul.f32 %v608, %v620
      %v629 = vmul.f32 %v609, %v624
      %634 = vrot.lane.b32.xlu0 %v626, 124
      %v635 = vpop.permute.xlu0 %634
      %636 = vrot.lane.b32.xlu0 %v627, 124
      %v637 = vpop.permute.xlu0 %636
      %638 = vrot.lane.b32.xlu0 %v628, 124
      %v639 = vpop.permute.xlu0 %638
      %640 = vrot.lane.b32.xlu0 %v629, 124
      %v641 = vpop.permute.xlu0 %640
      %v646 = vadd.f32 %v598, %v635
      %v647 = vadd.f32 %v599, %v637
      %v648 = vadd.f32 %v600, %v639
      %v649 = vadd.f32 %v601, %v641
      %650 = vset.pattern.permute.xlu0 4
      %651 = vperm.xlu0 %650, %v468
      %v652 = vpop.permute.xlu0 %651
      %654 = vset.pattern.permute.xlu0 4
      %655 = vperm.xlu0 %654, %v469
      %v656 = vpop.permute.xlu0 %655
      %658 = vset.pattern.permute.xlu0 4
      %659 = vperm.xlu0 %658, %v470
      %v660 = vpop.permute.xlu0 %659
      %662 = vset.pattern.permute.xlu0 4
      %663 = vperm.xlu0 %662, %v471
      %v664 = vpop.permute.xlu0 %663
      %v666 = vmul.f32 %v464, %v652
      %v667 = vmul.f32 %v465, %v656
      %v668 = vmul.f32 %v466, %v660
      %v669 = vmul.f32 %v467, %v664
      %674 = vrot.lane.b32.xlu0 %v666, 123
      %v675 = vpop.permute.xlu0 %674
      %676 = vrot.lane.b32.xlu0 %v667, 123
      %v677 = vpop.permute.xlu0 %676
      %678 = vrot.lane.b32.xlu0 %v668, 123
      %v679 = vpop.permute.xlu0 %678
      %680 = vrot.lane.b32.xlu0 %v669, 123
      %v681 = vpop.permute.xlu0 %680
      %v686 = vadd.f32 %v646, %v675
      %v687 = vadd.f32 %v647, %v677
      %v688 = vadd.f32 %v648, %v679
      %v689 = vadd.f32 %v649, %v681
      %690 = vrot.lane.b32.xlu0 %v553, 6
      %v691 = vpop.permute.xlu0 %690
      %v693 = vmul.f32 %v464, %v691
      %v694 = vmul.f32 %v465, %v691
      %v695 = vmul.f32 %v466, %v691
      %v696 = vmul.f32 %v467, %v691
      %697 = vset.pattern.permute.xlu0 5
      %698 = vperm.xlu0 %697, %v468
      %v699 = vpop.permute.xlu0 %698
      %701 = vset.pattern.permute.xlu0 5
      %702 = vperm.xlu0 %701, %v469
      %v703 = vpop.permute.xlu0 %702
      %705 = vset.pattern.permute.xlu0 5
      %706 = vperm.xlu0 %705, %v470
      %v707 = vpop.permute.xlu0 %706
      %709 = vset.pattern.permute.xlu0 5
      %710 = vperm.xlu0 %709, %v471
      %v711 = vpop.permute.xlu0 %710
      %v713 = vmul.f32 %v693, %v699
      %v714 = vmul.f32 %v694, %v703
      %v715 = vmul.f32 %v695, %v707
      %v716 = vmul.f32 %v696, %v711
      %721 = vrot.lane.b32.xlu0 %v713, 122
      %v722 = vpop.permute.xlu0 %721
      %723 = vrot.lane.b32.xlu0 %v714, 122
      %v724 = vpop.permute.xlu0 %723
      %725 = vrot.lane.b32.xlu0 %v715, 122
      %v726 = vpop.permute.xlu0 %725
      %727 = vrot.lane.b32.xlu0 %v716, 122
      %v728 = vpop.permute.xlu0 %727
      %v733 = vadd.f32 %v686, %v722
      %v734 = vadd.f32 %v687, %v724
      %v735 = vadd.f32 %v688, %v726
      %v736 = vadd.f32 %v689, %v728
      %737 = vrot.lane.b32.xlu0 %v477, 8
      %v738 = vpop.permute.xlu0 %737
      %v740 = vmul.f32 %v464, %v738
      %v741 = vmul.f32 %v465, %v738
      %v742 = vmul.f32 %v466, %v738
      %v743 = vmul.f32 %v467, %v738
      %744 = vset.pattern.permute.xlu0 6
      %745 = vperm.xlu0 %744, %v468
      %v746 = vpop.permute.xlu0 %745
      %748 = vset.pattern.permute.xlu0 6
      %749 = vperm.xlu0 %748, %v469
      %v750 = vpop.permute.xlu0 %749
      %752 = vset.pattern.permute.xlu0 6
      %753 = vperm.xlu0 %752, %v470
      %v754 = vpop.permute.xlu0 %753
      %756 = vset.pattern.permute.xlu0 6
      %757 = vperm.xlu0 %756, %v471
      %v758 = vpop.permute.xlu0 %757
      %v760 = vmul.f32 %v740, %v746
      %v761 = vmul.f32 %v741, %v750
      %v762 = vmul.f32 %v742, %v754
      %v763 = vmul.f32 %v743, %v758
      %768 = vrot.lane.b32.xlu0 %v760, 120
      %v769 = vpop.permute.xlu0 %768
      %770 = vrot.lane.b32.xlu0 %v761, 120
      %v771 = vpop.permute.xlu0 %770
      %772 = vrot.lane.b32.xlu0 %v762, 120
      %v773 = vpop.permute.xlu0 %772
      %774 = vrot.lane.b32.xlu0 %v763, 120
      %v775 = vpop.permute.xlu0 %774
      %v780 = vadd.f32 %v733, %v769
      %v781 = vadd.f32 %v734, %v771
      %v782 = vadd.f32 %v735, %v773
      %v783 = vadd.f32 %v736, %v775
      %784 = vset.pattern.permute.xlu0 7
      %785 = vperm.xlu0 %784, %v468
      %v786 = vpop.permute.xlu0 %785
      %788 = vset.pattern.permute.xlu0 7
      %789 = vperm.xlu0 %788, %v469
      %v790 = vpop.permute.xlu0 %789
      %792 = vset.pattern.permute.xlu0 7
      %793 = vperm.xlu0 %792, %v470
      %v794 = vpop.permute.xlu0 %793
      %796 = vset.pattern.permute.xlu0 7
      %797 = vperm.xlu0 %796, %v471
      %v798 = vpop.permute.xlu0 %797
      %v800 = vmul.f32 %v464, %v786
      %v801 = vmul.f32 %v465, %v790
      %v802 = vmul.f32 %v466, %v794
      %v803 = vmul.f32 %v467, %v798
      %808 = vrot.lane.b32.xlu0 %v800, 119
      %v809 = vpop.permute.xlu0 %808
      %810 = vrot.lane.b32.xlu0 %v801, 119
      %v811 = vpop.permute.xlu0 %810
      %812 = vrot.lane.b32.xlu0 %v802, 119
      %v813 = vpop.permute.xlu0 %812
      %814 = vrot.lane.b32.xlu0 %v803, 119
      %v815 = vpop.permute.xlu0 %814
      %v820 = vadd.f32 %v780, %v809
      %v821 = vadd.f32 %v781, %v811
      %v822 = vadd.f32 %v782, %v813
      %v823 = vadd.f32 %v783, %v815
      %824 = vrot.lane.b32.xlu0 %v553, 10
      %v825 = vpop.permute.xlu0 %824
      %v827 = vmul.f32 %v464, %v825
      %v828 = vmul.f32 %v465, %v825
      %v829 = vmul.f32 %v466, %v825
      %v830 = vmul.f32 %v467, %v825
      %831 = vset.pattern.permute.xlu0 8
      %832 = vperm.xlu0 %831, %v468
      %v833 = vpop.permute.xlu0 %832
      %835 = vset.pattern.permute.xlu0 8
      %836 = vperm.xlu0 %835, %v469
      %v837 = vpop.permute.xlu0 %836
      %839 = vset.pattern.permute.xlu0 8
      %840 = vperm.xlu0 %839, %v470
      %v841 = vpop.permute.xlu0 %840
      %843 = vset.pattern.permute.xlu0 8
      %844 = vperm.xlu0 %843, %v471
      %v845 = vpop.permute.xlu0 %844
      %v847 = vmul.f32 %v827, %v833
      %v848 = vmul.f32 %v828, %v837
      %v849 = vmul.f32 %v829, %v841
      %v850 = vmul.f32 %v830, %v845
      %855 = vrot.lane.b32.xlu0 %v847, 118
      %v856 = vpop.permute.xlu0 %855
      %857 = vrot.lane.b32.xlu0 %v848, 118
      %v858 = vpop.permute.xlu0 %857
      %859 = vrot.lane.b32.xlu0 %v849, 118
      %v860 = vpop.permute.xlu0 %859
      %861 = vrot.lane.b32.xlu0 %v850, 118
      %v862 = vpop.permute.xlu0 %861
      %v867 = vadd.f32 %v820, %v856
      %v868 = vadd.f32 %v821, %v858
      %v869 = vadd.f32 %v822, %v860
      %v870 = vadd.f32 %v823, %v862
      %v871 = vld [vmem:[%s4] sm:$0xff]
      %v872 = vld [vmem:[%s4 + $0x8] sm:$0xff]
      %v873 = vld [vmem:[%s4 + $0x10] sm:$0xff]
      %v874 = vld [vmem:[%s4 + $0x18] sm:$0xff]
      %876 = vset.pattern.permute.xlu0 0
      %877 = vperm.xlu0 %876, %v871
      %v878 = vpop.permute.xlu0 %877
      %881 = vset.pattern.permute.xlu0 0
      %882 = vperm.xlu0 %881, %v872
      %v883 = vpop.permute.xlu0 %882
      %886 = vset.pattern.permute.xlu0 0
      %887 = vperm.xlu0 %886, %v873
      %v888 = vpop.permute.xlu0 %887
      %891 = vset.pattern.permute.xlu0 0
      %892 = vperm.xlu0 %891, %v874
      %v893 = vpop.permute.xlu0 %892
      %v895 = vadd.f32 %v867, %v878
      %v896 = vadd.f32 %v868, %v883
      %v897 = vadd.f32 %v869, %v888
      %v898 = vadd.f32 %v870, %v893
      %v899 = vmax.f32 %v895, 0.0
      %v900 = vmax.f32 %v896, 0.0
      %v901 = vmax.f32 %v897, 0.0
      %v902 = vmax.f32 %v898, 0.0
      %v903 = vmin.f32 %v899, 6.0
      %v904 = vmin.f32 %v900, 6.0
      %v905 = vmin.f32 %v901, 6.0
      %v906 = vmin.f32 %v902, 6.0
      %v907 = vld [vmem:[%s5] sm:$0xff]
      %v908 = vld [vmem:[%s5 + $0x8] sm:$0xff]
      %v909 = vld [vmem:[%s6] sm:$0xff]
      %v910 = vld [vmem:[%s6 + $0x8] sm:$0xff]
      %912 = vset.pattern.permute.xlu0 0
      %913 = vperm.xlu0 %912, %v909
      %v914 = vpop.permute.xlu0 %913
      %917 = vset.pattern.permute.xlu0 0
      %918 = vperm.xlu0 %917, %v910
      %v919 = vpop.permute.xlu0 %918
      %vm921 = vcmask 261120
      %v923 = vsel %vm921, %v907, 0
      %v926 = vsel %vm921, %v908, 0
      %928 = vmatprep.subr.mxu0 0.0
      %929 = vmatpush1.msra.mxu0 0.0
      %930 = vmatprep.subr.mxu0 0.0
      %931 = vmatpush1.msra.mxu0 0.0
      %932 = vmatprep.subr.mxu0 0.0
      %933 = vmatpush1.msra.mxu0 0.0
      %934 = vmatprep.subr.mxu0 0.0
      %935 = vmatpush1.msra.mxu0 0.0
      %936 = vmatprep.subr.mxu0 0.0
      %937 = vmatpush1.msra.mxu0 0.0
      %938 = vmatprep.subr.mxu0 0.0
      %939 = vmatpush1.msra.mxu0 0.0
      %940 = vmatprep.subr.mxu0 0.0
      %941 = vmatpush1.msra.mxu0 0.0
      %942 = vmatprep.subr.mxu0 0.0
      %943 = vmatpush1.msra.mxu0 0.0
      %944 = vmatprep.subr.mxu0 0.0
      %945 = vmatpush1.msra.mxu0 0.0
      %946 = vmatprep.subr.mxu0 0.0
      %947 = vmatpush1.msra.mxu0 0.0
      %948 = vmatprep.subr.mxu0 0.0
      %949 = vmatpush1.msra.mxu0 0.0
      %950 = vmatprep.subr.mxu0 0.0
      %951 = vmatpush1.msra.mxu0 0.0
      %952 = vmatprep.subr.mxu0 0.0
      %953 = vmatpush1.msra.mxu0 %v906
      %954 = vmatprep.subr.mxu0 0.0
      %955 = vmatpush1.msra.mxu0 %v905
      %956 = vmatprep.subr.mxu0 0.0
      %957 = vmatpush1.msra.mxu0 %v904
      %958 = vmatprep.subr.mxu0 0.0
      %959 = vmatpush1.msra.mxu0 %v903
      %960 = vmatprep.subr.mxu0 0.0
      %961 = vmatpush2.msra.mxu0 0.0
      %962 = vmatprep.subr.mxu0 0.0
      %963 = vmatpush2.msra.mxu0 0.0
      %964 = vmatprep.subr.mxu0 0.0
      %965 = vmatpush2.msra.mxu0 0.0
      %966 = vmatprep.subr.mxu0 0.0
      %967 = vmatpush2.msra.mxu0 0.0
      %968 = vmatprep.subr.mxu0 0.0
      %969 = vmatpush2.msra.mxu0 0.0
      %970 = vmatprep.subr.mxu0 0.0
      %971 = vmatpush2.msra.mxu0 0.0
      %972 = vmatprep.subr.mxu0 0.0
      %973 = vmatpush2.msra.mxu0 0.0
      %974 = vmatprep.subr.mxu0 0.0
      %975 = vmatpush2.msra.mxu0 0.0
      %976 = vmatprep.subr.mxu0 0.0
      %977 = vmatpush2.msra.mxu0 0.0
      %978 = vmatprep.subr.mxu0 0.0
      %979 = vmatpush2.msra.mxu0 0.0
      %980 = vmatprep.subr.mxu0 0.0
      %981 = vmatpush2.msra.mxu0 0.0
      %982 = vmatprep.subr.mxu0 0.0
      %983 = vmatpush2.msra.mxu0 0.0
      %984 = vmatprep.subr.mxu0 0.0
      %985 = vmatpush2.msra.mxu0 0.0
      %986 = vmatprep.subr.mxu0 0.0
      %987 = vmatpush2.msra.mxu0 0.0
      %988 = vmatprep.subr.mxu0 0.0
      %989 = vmatpush2.msra.mxu0 0.0
      %990 = vmatprep.subr.mxu0 0.0
      %991 = vmatpush2.msra.mxu0 0.0
      %992 = vmatprep.mubr.f32.mxu0 0.0
      %993 = vmatmul.mubr.f32.gmra.mxu0 %v923
      %v994 = vpop.f32.mrf.mxu0
      %v995 = vadd.f32 %v914, %v994
      %v996 = vpop.f32.mrf.mxu0
      %997 = vmatprep.mubr.f32.mxu0 0.0
      %998 = vmatmul.mubr.f32.gmra.mxu0 %v926
      %v999 = vpop.f32.mrf.mxu0
      %v1000 = vadd.f32 %v919, %v999
      %v1001 = vpop.f32.mrf.mxu0
      %1002 = vdwg.mxu0
      %v1003 = vadd.f32 %v995, %v306
      %v1004 = vadd.f32 %v1000, %v307
      %1005 = vst.msk [vmem:[%s305] sm:$0xff] %vm336, %v1003
      %1006 = vst.msk [vmem:[%s305 + $0x8] sm:$0xff] %vm336, %v1004
      %p1007 = scmp.lt.s32.totalorder %s19, 1
      %s1008 = scalar_select %p1007, %s19, 1
      %s1009 = smul.addr %s1008, 2
      %s1010 = smul.addr %s1009, 8
      %s1011 = scalar_lea.vmem %s8, %s1010
      // Predicated region
      $region53: #{hourglass2d.11} parent=51 // pred_check
        %p1012 = pneg %p210
      $region54: #{hourglass2d.11} parent=51 // pred_check_branch
        %1014 = sbr.rel (%p1012) target = $region56
      $region55: #{hourglass2d.11} parent=51 // pred_region
        _
      $region56: #{hourglass2d.11} parent=51 // pred_fallthru
        _
    $region52: #{hourglass2d.11} parent=5 // pred_fallthru
      _
    %p1015 = scmp.le.s32.totalorder 2, %s14
    // Predicated region
    $region57: #{hourglass2d.11} parent=5 // pred_check
      %p1016 = pneg %p1015
    $region58: #{hourglass2d.11} parent=5 // pred_check_branch
      %1018 = sbr.rel (%p1016) target = $region60
    $region59: #{hourglass2d.11} parent=5 // pred_region
      %s1019 = ssub.s32 %s14, 2
      // Predicated region
      $region61: #{hourglass2d.11} parent=59 // pred_check
        %p1020 = pneg %p216
      $region62: #{hourglass2d.11} parent=59 // pred_check_branch
        %1022 = sbr.rel (%p1020) target = $region64
      $region63: #{hourglass2d.11} parent=59 // pred_region
        %p1023 = scmp.lt.s32.totalorder %s20, 1
        %s1024 = scalar_select %p1023, %s20, 1
        %s1025 = smul.addr %s1024, 2
        %s1026 = smul.addr %s1025, 8
        %s1027 = scalar_lea.vmem %s8, %s1026
      $region64: #{hourglass2d.11} parent=59 // pred_fallthru
        _
    $region60: #{hourglass2d.11} parent=5 // pred_fallthru
      _
  $region6: #{hourglass2d.11} parent=0 // loop_footer
    %s18 = sadd.s32 1, %s14
  $region7: #{hourglass2d.11} parent=0 // loop_footer_branch
    %13 = sbr.rel target = $region3
  $region8: #{hourglass2d.11} parent=0 // loop_exit
    _

// kernel: hourglass2d.15
$region0: #{hourglass2d.15}
  #allocation0 [shape = 'u32[]', space=smem, size = 0x4, offset = 0x4, fixed_abs, tag = 'smem constant byte address 0x4 - core index']
  #allocation1 [shape = 'u32[144,128]{1,0:T(1,128)}', space=vmem, size = 0x12000, scoped, tag = 'internal scratch']
  %s0 = inlined_call_operand.vmem [shape: f32[2,8,64], index: 0, kind: input, shape index: {}]
  %s1 = inlined_call_operand.vmem [shape: f32[16,32], index: 1, kind: input, shape index: {}]
  %s2 = inlined_call_operand.vmem [shape: f32[16,1], index: 2, kind: input, shape index: {}]
  %s3 = inlined_call_operand.vmem [shape: f32[2,16,64], index: 3, kind: input, shape index: {}]
  %s4 = inlined_call_operand.vmem [shape: f32[1,64], index: 4, kind: input, shape index: {}]
  %s5 = inlined_call_operand.vmem [shape: f32[2,16,64], index: 5, kind: output, shape index: {}]
  %s6 = sld [smem:[#allocation0]]
  $region53: #{hourglass2d.15} parent=0
    _
  %s8 = ssub.s32 1, %s6
  %s9 = scalar_select 0, %s8, %s6
  loop: start=0, step=1, limit=4
  $region2: #{hourglass2d.15} parent=0 // loop_pre_header
    _
  $region3: #{hourglass2d.15} parent=0 // loop_header
    %s11 = sphi 0, %s15
    %p12 = scmp.ge.s32.totalorder %s11, 4
    %s21 = sphi 0, %s23
    %s24 = sphi 0, %s21
    %s25 = sphi 0, %s24
    %s41 = sphi 0, %s25
    %s45 = sphi 0, %s45
    %s47 = sphi 0, %s45
    %s48 = sphi 0, %s47
    %s62 = sphi 0, %s48
    %s66 = sphi 0, %s66
    %s68 = sphi 0, %s66
    %s69 = sphi 0, %s68
    %s83 = sphi 0, %s69
    %s89 = sphi 0, %s91
    %s92 = sphi 0, %s89
    %s93 = sphi 0, %s92
    %s109 = sphi 0, %s93
    %s113 = sphi 0, %s113
    %s115 = sphi 0, %s113
    %s116 = sphi 0, %s115
    %s130 = sphi 0, %s116
    %s136 = sphi 0, %s138
    %s139 = sphi 0, %s136
    %s140 = sphi 0, %s139
    %s156 = sphi 0, %s140
  $region4: #{hourglass2d.15} parent=0 // loop_header_branch
    %14 = sbr.rel (%p12) target = $region8
  $region5: #{hourglass2d.15} parent=0 // loop_body
    %s16 = ssub.s32 %s11, 1
    %s17 = ssub.s32 %s11, 2
    %s18 = sadd.s32 %s11, 1
    %s19 = ssub.s32 %s11, %s18
    %p20 = scmp.eq.s32.totalorder %s19, 0
    %s22 = sadd.s32 %s21, 1
    %s23 = scalar_select %p20, %s21, %s22
    %p26 = pneg %p20
    %p27 = scmp.eq.s32.totalorder %s11, 1
    %p28 = por %p26, %p27
    %p29 = scmp.ne.s32.totalorder %s21, %s24
    %p30 = scmp.eq.s32.totalorder %s11, 0
    %p31 = por %p29, %p30
    %p32 = scmp.ne.s32.totalorder %s21, %s24
    %p33 = scmp.eq.s32.totalorder %s16, 1
    %p34 = por %p32, %p33
    %p35 = scmp.ne.s32.totalorder %s24, %s25
    %p36 = scmp.eq.s32.totalorder %s16, 0
    %p37 = por %p35, %p36
    %p38 = scmp.ne.s32.totalorder %s24, %s25
    %p39 = scmp.eq.s32.totalorder %s17, 1
    %p40 = por %p38, %p39
    %p42 = scmp.ne.s32.totalorder %s25, %s41
    %p43 = scmp.eq.s32.totalorder %s17, 0
    %p44 = por %p42, %p43
    %s46 = sadd.s32 %s45, 1
    %p49 = scmp.eq.s32.totalorder %s11, 1
    %p50 = scmp.ne.s32.totalorder %s45, %s47
    %p51 = scmp.eq.s32.totalorder %s11, 0
    %p52 = por %p50, %p51
    %p53 = scmp.ne.s32.totalorder %s45, %s47
    %p54 = scmp.eq.s32.totalorder %s16, 1
    %p55 = por %p53, %p54
    %p56 = scmp.ne.s32.totalorder %s47, %s48
    %p57 = scmp.eq.s32.totalorder %s16, 0
    %p58 = por %p56, %p57
    %p59 = scmp.ne.s32.totalorder %s47, %s48
    %p60 = scmp.eq.s32.totalorder %s17, 1
    %p61 = por %p59, %p60
    %p63 = scmp.ne.s32.totalorder %s48, %s62
    %p64 = scmp.eq.s32.totalorder %s17, 0
    %p65 = por %p63, %p64
    %s67 = sadd.s32 %s66, 1
    %p70 = scmp.eq.s32.totalorder %s11, 1
    %p71 = scmp.ne.s32.totalorder %s66, %s68
    %p72 = scmp.eq.s32.totalorder %s11, 0
    %p73 = por %p71, %p72
    %p74 = scmp.ne.s32.totalorder %s66, %s68
    %p75 = scmp.eq.s32.totalorder %s16, 1
    %p76 = por %p74, %p75
    %p77 = scmp.ne.s32.totalorder %s68, %s69
    %p78 = scmp.eq.s32.totalorder %s16, 0
    %p79 = por %p77, %p78
    %p80 = scmp.ne.s32.totalorder %s68, %s69
    %p81 = scmp.eq.s32.totalorder %s17, 1
    %p82 = por %p80, %p81
    %p84 = scmp.ne.s32.totalorder %s69, %s83
    %p85 = scmp.eq.s32.totalorder %s17, 0
    %p86 = por %p84, %p85
    %s87 = ssub.s32 %s11, %s18
    %p88 = scmp.eq.s32.totalorder %s87, 0
    %s90 = sadd.s32 %s89, 1
    %s91 = scalar_select %p88, %s89, %s90
    %p94 = pneg %p88
    %p95 = scmp.eq.s32.totalorder %s11, 1
    %p96 = por %p94, %p95
    %p97 = scmp.ne.s32.totalorder %s89, %s92
    %p98 = scmp.eq.s32.totalorder %s11, 0
    %p99 = por %p97, %p98
    %p100 = scmp.ne.s32.totalorder %s89, %s92
    %p101 = scmp.eq.s32.totalorder %s16, 1
    %p102 = por %p100, %p101
    %p103 = scmp.ne.s32.totalorder %s92, %s93
    %p104 = scmp.eq.s32.totalorder %s16, 0
    %p105 = por %p103, %p104
    %p106 = scmp.ne.s32.totalorder %s92, %s93
    %p107 = scmp.eq.s32.totalorder %s17, 1
    %p108 = por %p106, %p107
    %p110 = scmp.ne.s32.totalorder %s93, %s109
    %p111 = scmp.eq.s32.totalorder %s17, 0
    %p112 = por %p110, %p111
    %s114 = sadd.s32 %s113, 1
    %p117 = scmp.eq.s32.totalorder %s11, 1
    %p118 = scmp.ne.s32.totalorder %s113, %s115
    %p119 = scmp.eq.s32.totalorder %s11, 0
    %p120 = por %p118, %p119
    %p121 = scmp.ne.s32.totalorder %s113, %s115
    %p122 = scmp.eq.s32.totalorder %s16, 1
    %p123 = por %p121, %p122
    %p124 = scmp.ne.s32.totalorder %s115, %s116
    %p125 = scmp.eq.s32.totalorder %s16, 0
    %p126 = por %p124, %p125
    %p127 = scmp.ne.s32.totalorder %s115, %s116
    %p128 = scmp.eq.s32.totalorder %s17, 1
    %p129 = por %p127, %p128
    %p131 = scmp.ne.s32.totalorder %s116, %s130
    %p132 = scmp.eq.s32.totalorder %s17, 0
    %p133 = por %p131, %p132
    %s134 = ssub.s32 %s11, %s18
    %p135 = scmp.eq.s32.totalorder %s134, 0
    %s137 = sadd.s32 %s136, 1
    %s138 = scalar_select %p135, %s136, %s137
    %p141 = pneg %p135
    %p142 = scmp.eq.s32.totalorder %s11, 1
    %p143 = por %p141, %p142
    %p144 = scmp.ne.s32.totalorder %s136, %s139
    %p145 = scmp.eq.s32.totalorder %s11, 0
    %p146 = por %p144, %p145
    %p147 = scmp.ne.s32.totalorder %s136, %s139
    %p148 = scmp.eq.s32.totalorder %s16, 1
    %p149 = por %p147, %p148
    %p150 = scmp.ne.s32.totalorder %s139, %s140
    %p151 = scmp.eq.s32.totalorder %s16, 0
    %p152 = por %p150, %p151
    %p153 = scmp.ne.s32.totalorder %s139, %s140
    %p154 = scmp.eq.s32.totalorder %s17, 1
    %p155 = por %p153, %p154
    %p157 = scmp.ne.s32.totalorder %s140, %s156
    %p158 = scmp.eq.s32.totalorder %s17, 0
    %p159 = por %p157, %p158
    %p160 = scmp.le.s32.totalorder 1, %s11
    %p161 = scmp.lt.s32.totalorder %s11, 3
    %p162 = pnand %p160, %p161
    %p163 = pneg %p162
    // Predicated region
    $region9: #{hourglass2d.15} parent=5 // pred_check
      _
    $region10: #{hourglass2d.15} parent=5 // pred_check_branch
      %165 = sbr.rel (%p162) target = $region12
    $region11: #{hourglass2d.15} parent=5 // pred_region
      %s166 = ssub.s32 %s11, 1
      // Predicated region
      $region13: #{hourglass2d.15} parent=11 // pred_check
        %p167 = pneg %p58
      $region14: #{hourglass2d.15} parent=11 // pred_check_branch
        %169 = sbr.rel (%p167) target = $region16
      $region15: #{hourglass2d.15} parent=11 // pred_region
        _
      $region16: #{hourglass2d.15} parent=11 // pred_fallthru
        _
      // Predicated region
      $region17: #{hourglass2d.15} parent=11 // pred_check
        %p170 = pneg %p79
      $region18: #{hourglass2d.15} parent=11 // pred_check_branch
        %172 = sbr.rel (%p170) target = $region20
      $region19: #{hourglass2d.15} parent=11 // pred_region
        _
      $region20: #{hourglass2d.15} parent=11 // pred_fallthru
        _
      // Predicated region
      $region21: #{hourglass2d.15} parent=11 // pred_check
        %p173 = pneg %p126
      $region22: #{hourglass2d.15} parent=11 // pred_check_branch
        %175 = sbr.rel (%p173) target = $region24
      $region23: #{hourglass2d.15} parent=11 // pred_region
        _
      $region24: #{hourglass2d.15} parent=11 // pred_fallthru
        _
    $region12: #{hourglass2d.15} parent=5 // pred_fallthru
      _
    %p176 = scmp.lt.s32.totalorder %s11, 2
    // Predicated region
    $region25: #{hourglass2d.15} parent=5 // pred_check
      %p177 = pneg %p176
    $region26: #{hourglass2d.15} parent=5 // pred_check_branch
      %179 = sbr.rel (%p177) target = $region28
    $region27: #{hourglass2d.15} parent=5 // pred_region
      // Predicated region
      $region29: #{hourglass2d.15} parent=27 // pred_check
        %p180 = pneg %p31
      $region30: #{hourglass2d.15} parent=27 // pred_check_branch
        %182 = sbr.rel (%p180) target = $region32
      $region31: #{hourglass2d.15} parent=27 // pred_region
        %p183 = scmp.lt.s32.totalorder %s11, 1
        %s184 = scalar_select %p183, %s11, 1
        %s185 = smul.addr %s184, 8
        %s186 = scalar_lea.vmem %s0, %s185
      $region32: #{hourglass2d.15} parent=27 // pred_fallthru
        _
      // Predicated region
      $region33: #{hourglass2d.15} parent=27 // pred_check
        %p187 = pneg %p99
      $region34: #{hourglass2d.15} parent=27 // pred_check_branch
        %189 = sbr.rel (%p187) target = $region36
      $region35: #{hourglass2d.15} parent=27 // pred_region
        %p190 = scmp.lt.s32.totalorder %s11, 1
        %s191 = scalar_select %p190, %s11, 1
        %s192 = smul.addr %s191, 2
        %s193 = smul.addr %s192, 8
        %s194 = scalar_lea.vmem %s3, %s193
      $region36: #{hourglass2d.15} parent=27 // pred_fallthru
        _
    $region28: #{hourglass2d.15} parent=5 // pred_fallthru
      _
    %p195 = scmp.le.s32.totalorder 1, %s11
    %p196 = scmp.lt.s32.totalorder %s11, 3
    %p197 = pnand %p195, %p196
    %p198 = pneg %p197
    // Predicated region
    $region37: #{hourglass2d.15} parent=5 // pred_check
      _
    $region38: #{hourglass2d.15} parent=5 // pred_check_branch
      %200 = sbr.rel (%p197) target = $region40
    $region39: #{hourglass2d.15} parent=5 // pred_region
      %s201 = ssub.s32 %s11, 1
      %p202 = scmp.lt.s32.totalorder %s16, 1
      %s203 = scalar_select %p202, %s16, 1
      %s204 = smul.addr %s203, 8
      %s205 = scalar_lea.vmem %s0, %s204
      %p206 = pneg %p37
      %p207 = pneg %p34
      %p208 = pneg %p58
      %p209 = pneg %p55
      %p210 = pneg %p79
      %p211 = pneg %p76
      %p212 = scmp.lt.s32.totalorder %s16, 1
      %s213 = scalar_select %p212, %s16, 1
      %s214 = smul.addr %s213, 2
      %s215 = smul.addr %s214, 8
      %s216 = scalar_lea.vmem %s3, %s215
      %p217 = pneg %p105
      %p218 = pneg %p102
      %p219 = pneg %p126
      %p220 = pneg %p123
      %p221 = pneg %p152
      %p222 = pneg %p149
      %p223 = scmp.lt.s32.totalorder %s16, 1
      %s224 = scalar_select %p223, %s16, 1
      %s225 = smul.addr %s224, 2
      %s226 = smul.addr %s225, 8
      %s227 = scalar_lea.vmem %s5, %s226
      %p228 = scmp.lt.s32.totalorder %s16, 1
      %s229 = scalar_select %p228, %s16, 1
      %s230 = smul.addr %s229, 8
      %s231 = scalar_lea.vmem %s0, %s230
      %p232 = scmp.lt.s32.totalorder %s16, 1
      %s233 = scalar_select %p232, %s16, 1
      %s234 = smul.addr %s233, 2
      %s235 = smul.addr %s234, 8
      %s236 = scalar_lea.vmem %s3, %s235
      %p237 = scmp.lt.s32.totalorder %s16, 1
      %s238 = scalar_select %p237, %s16, 1
      %s239 = smul.addr %s238, 2
      %s240 = smul.addr %s239, 8
      %s241 = scalar_lea.vmem %s5, %s240
      %v242 = vld [vmem:[%s231] sm:$0xff]
      %vm243 = vcmask 523264
      %v244 = vsel %vm243, %v242, 0.0
      %v245 = vld [vmem:[%s4] sm:$0x1]
      %v247 = vlaneseq
      %v248 = vshrl.u32 %v247, 7
      %v249 = vsub.s32 0, %v248
      %v250 = vrot.slane %v245, %v249
      %251 = vrot.lane.b32.xlu0 %v250, 1
      %v252 = vpop.permute.xlu0 %251
      %v254 = vmul.f32 %v244, %v252
      %255 = vrot.lane.b32.xlu0 %v250, 9
      %v256 = vpop.permute.xlu0 %255
      %v258 = vmul.f32 %v244, %v256
      %260 = vrot.lane.b32.xlu0 %v254, 127
      %v261 = vpop.permute.xlu0 %260
      %264 = vrot.lane.b32.xlu0 %v244, 120
      %v265 = vpop.permute.xlu0 %264
      %268 = vrot.lane.b32.xlu0 %v258, 119
      %v269 = vpop.permute.xlu0 %268
      %v271 = vld [vmem:[%s1] sm:$0xff]
      %v272 = vld [vmem:[%s1 + $0x8] sm:$0xff]
      %v273 = vld [vmem:[%s2] sm:$0xff]
      %v274 = vld [vmem:[%s2 + $0x8] sm:$0xff]
      %276 = vset.pattern.permute.xlu0 0
      %277 = vperm.xlu0 %276, %v273
      %v278 = vpop.permute.xlu0 %277
      %281 = vset.pattern.permute.xlu0 0
      %282 = vperm.xlu0 %281, %v274
      %v283 = vpop.permute.xlu0 %282
      %vm285 = vcmask 261120
      %v287 = vsel %vm285, %v271, 0
      %v290 = vsel %vm285, %v272, 0
      %292 = vmatprep.subr.mxu0 0.0
      %293 = vmatpush1.msra.mxu0 0.0
      %294 = vmatprep.subr.mxu0 0.0
      %295 = vmatpush1.msra.mxu0 0.0
      %296 = vmatprep.subr.mxu0 0.0
      %297 = vmatpush1.msra.mxu0 0.0
      %298 = vmatprep.subr.mxu0 0.0
      %299 = vmatpush1.msra.mxu0 0.0
      %300 = vmatprep.subr.mxu0 0.0
      %301 = vmatpush1.msra.mxu0 0.0
      %302 = vmatprep.subr.mxu0 0.0
      %303 = vmatpush1.msra.mxu0 0.0
      %304 = vmatprep.subr.mxu0 0.0
      %305 = vmatpush1.msra.mxu0 0.0
      %306 = vmatprep.subr.mxu0 0.0
      %307 = vmatpush1.msra.mxu0 0.0
      %308 = vmatprep.subr.mxu0 0.0
      %309 = vmatpush1.msra.mxu0 0.0
      %310 = vmatprep.subr.mxu0 0.0
      %311 = vmatpush1.msra.mxu0 0.0
      %312 = vmatprep.subr.mxu0 0.0
      %313 = vmatpush1.msra.mxu0 0.0
      %314 = vmatprep.subr.mxu0 0.0
      %315 = vmatpush1.msra.mxu0 0.0
      %316 = vmatprep.subr.mxu0 0.0
      %317 = vmatpush1.msra.mxu0 %v269
      %318 = vmatprep.subr.mxu0 0.0
      %319 = vmatpush1.msra.mxu0 %v265
      %320 = vmatprep.subr.mxu0 0.0
      %321 = vmatpush1.msra.mxu0 %v261
      %322 = vmatprep.subr.mxu0 0.0
      %323 = vmatpush1.msra.mxu0 %v242
      %324 = vmatprep.subr.mxu0 0.0
      %325 = vmatpush2.msra.mxu0 0.0
      %326 = vmatprep.subr.mxu0 0.0
      %327 = vmatpush2.msra.mxu0 0.0
      %328 = vmatprep.subr.mxu0 0.0
      %329 = vmatpush2.msra.mxu0 0.0
      %330 = vmatprep.subr.mxu0 0.0
      %331 = vmatpush2.msra.mxu0 0.0
      %332 = vmatprep.subr.mxu0 0.0
      %333 = vmatpush2.msra.mxu0 0.0
      %334 = vmatprep.subr.mxu0 0.0
      %335 = vmatpush2.msra.mxu0 0.0
      %336 = vmatprep.subr.mxu0 0.0
      %337 = vmatpush2.msra.mxu0 0.0
      %338 = vmatprep.subr.mxu0 0.0
      %339 = vmatpush2.msra.mxu0 0.0
      %340 = vmatprep.subr.mxu0 0.0
      %341 = vmatpush2.msra.mxu0 0.0
      %342 = vmatprep.subr.mxu0 0.0
      %343 = vmatpush2.msra.mxu0 0.0
      %344 = vmatprep.subr.mxu0 0.0
      %345 = vmatpush2.msra.mxu0 0.0
      %346 = vmatprep.subr.mxu0 0.0
      %347 = vmatpush2.msra.mxu0 0.0
      %348 = vmatprep.subr.mxu0 0.0
      %349 = vmatpush2.msra.mxu0 0.0
      %350 = vmatprep.subr.mxu0 0.0
      %351 = vmatpush2.msra.mxu0 0.0
      %352 = vmatprep.subr.mxu0 0.0
      %353 = vmatpush2.msra.mxu0 0.0
      %354 = vmatprep.subr.mxu0 0.0
      %355 = vmatpush2.msra.mxu0 0.0
      %356 = vmatprep.mubr.f32.mxu0 0.0
      %357 = vmatmul.mubr.f32.gmra.mxu0 %v287
      %v358 = vpop.f32.mrf.mxu0
      %v359 = vadd.f32 %v278, %v358
      %v360 = vpop.f32.mrf.mxu0
      %361 = vmatprep.mubr.f32.mxu0 0.0
      %362 = vmatmul.mubr.f32.gmra.mxu0 %v290
      %v363 = vpop.f32.mrf.mxu0
      %v364 = vadd.f32 %v283, %v363
      %v365 = vpop.f32.mrf.mxu0
      %366 = vdwg.mxu0
      %v367 = vld [vmem:[%s236] sm:$0xff]
      %v368 = vld [vmem:[%s236 + $0x8] sm:$0xff]
      %v369 = vadd.f32 %v359, %v367
      %v370 = vadd.f32 %v364, %v368
      %v371 = vmax.f32 %v369, 0.0
      %v372 = vmax.f32 %v370, 0.0
      %373 = vst.msk [vmem:[%s241] sm:$0xff] %vm243, %v371
      %374 = vst.msk [vmem:[%s241 + $0x8] sm:$0xff] %vm243, %v372
      %p375 = scmp.lt.s32.totalorder %s16, 1
      %s376 = scalar_select %p375, %s16, 1
      %s377 = smul.addr %s376, 2
      %s378 = smul.addr %s377, 8
      %s379 = scalar_lea.vmem %s5, %s378
      // Predicated region
      $region41: #{hourglass2d.15} parent=39 // pred_check
        %p380 = pneg %p149
      $region42: #{hourglass2d.15} parent=39 // pred_check_branch
        %382 = sbr.rel (%p380) target = $region44
      $region43: #{hourglass2d.15} parent=39 // pred_region
        _
      $region44: #{hourglass2d.15} parent=39 // pred_fallthru
        _
    $region40: #{hourglass2d.15} parent=5 // pred_fallthru
      _
    %p383 = scmp.le.s32.totalorder 2, %s11
    // Predicated region
    $region45: #{hourglass2d.15} parent=5 // pred_check
      %p384 = pneg %p383
    $region46: #{hourglass2d.15} parent=5 // pred_check_branch
      %386 = sbr.rel (%p384) target = $region48
    $region47: #{hourglass2d.15} parent=5 // pred_region
      %s387 = ssub.s32 %s11, 2
      // Predicated region
      $region49: #{hourglass2d.15} parent=47 // pred_check
        %p388 = pneg %p155
      $region50: #{hourglass2d.15} parent=47 // pred_check_branch
        %390 = sbr.rel (%p388) target = $region52
      $region51: #{hourglass2d.15} parent=47 // pred_region
        %p391 = scmp.lt.s32.totalorder %s17, 1
        %s392 = scalar_select %p391, %s17, 1
        %s393 = smul.addr %s392, 2
        %s394 = smul.addr %s393, 8
        %s395 = scalar_lea.vmem %s5, %s394
      $region52: #{hourglass2d.15} parent=47 // pred_fallthru
        _
    $region48: #{hourglass2d.15} parent=5 // pred_fallthru
      _
  $region6: #{hourglass2d.15} parent=0 // loop_footer
    %s15 = sadd.s32 1, %s11
  $region7: #{hourglass2d.15} parent=0 // loop_footer_branch
    %10 = sbr.rel target = $region3
  $region8: #{hourglass2d.15} parent=0 // loop_exit
    _

</llo_original>
